<compile_context>
chip_gen: v5e
topology: v5e:2x2
jax: 0.10.0
libtpu: 0.0.40
codegen_flags: <defaults>
</compile_context>

<pallas_src>
import functools

import jax
import jax.numpy as jnp
from jax.experimental import pallas as pl
from jax.experimental.pallas import tpu as pltpu


# --------------------------------------------------------------------------
# The fused kernel: B_TILE samples per grid step, everything resident in VMEM.
# --------------------------------------------------------------------------
def _shallow_cnn_kernel(xp_ref, w1_ref, b1_ref, w2_ref, b2_ref,
                        fc1w_ref, fc1b_ref, fc2w_ref, fc2b_ref, out_ref):
    f32, bf16 = jnp.float32, jnp.bfloat16
    k2 = w2_ref.shape[0]          # conv2 taps (9)
    p2 = fc1w_ref.shape[0]        # conv2 output positions (OH2*OW2)
    bt = out_ref.shape[0]         # batch tile
    r2 = p2 * bt                  # conv2 output rows per step, ordered (s2, b)

    # conv1 + BN + ReLU on the expanded im2col rows: one big matmul.
    # The sentinel column (paired with a -1e9 weight row) forces rows that correspond
    # to conv2's zero padding to ReLU to exactly 0.
    x2d = xp_ref[0]                                                   # (9*P2*B, 9*C+1) bf16
    y1 = jnp.maximum(
        jnp.dot(x2d, w1_ref[...], preferred_element_type=f32) + b1_ref[...], 0.0
    ).astype(bf16)                                                    # (9*P2*B, 64)

    # conv2 + BN + ReLU: 9 accumulated (P2*B, 64) @ (64, 128) matmuls.
    acc = jnp.zeros((r2, w2_ref.shape[2]), f32)
    for k in range(k2):                                               # static unroll (9)
        acc = acc + jnp.dot(y1[k * r2:(k + 1) * r2, :], w2_ref[k],
                            preferred_element_type=f32)
    y2 = jnp.maximum(acc + b2_ref[...], 0.0)                          # (P2*B, 128), rows (s2, b)

    # fc1: contract (spatial, channel) as P2 accumulated (B, 128) @ (128, 64) matmuls.
    # y2 is sliced directly (no VMEM staging scratch).
    h1 = jnp.zeros((bt, fc1w_ref.shape[2]), f32) + fc1b_ref[...]
    for s in range(p2):                                               # static unroll (16)
        h1 = h1 + jnp.dot(y2[s * bt:(s + 1) * bt, :].astype(bf16), fc1w_ref[s],
                          preferred_element_type=f32)

    # fc2: logits padded to 128 lanes -> lane-dense, unmasked store.
    out_ref[...] = jnp.dot(h1.astype(bf16), fc2w_ref[...],
                           preferred_element_type=f32) + fc2b_ref[...]


# --------------------------------------------------------------------------
# Wrapper-side (XLA) expanded im2col + the single pallas_call.
# --------------------------------------------------------------------------
def _pick_b_tile(n, p2):
    # Amortize the per-grid-step overhead while keeping the (lane-padded,
    # double-buffered) input block around ~2 MiB (safe for v7x's smaller VMEM).
    rows_per_sample = 9 * p2
    vmem_cap = max(8, (2 * 1024 * 1024) // (rows_per_sample * 128 * 2))
    bt = min(32, vmem_cap, ((n + 7) // 8) * 8)
    return max(8, (bt // 8) * 8)


def _build_expanded_patches(x_nchw, b_tile, n_tiles):
    """XLA-side im2col.  Returns (n_tiles, 9*P2*b_tile, 9*C+1) bf16 where the rows of a
    tile are ordered (conv2 tap k2, conv2 output position s2, sample b).  The extra last
    channel is 1 exactly where conv2 reads its zero padding; a -1e9 conv1 weight row on
    that channel makes conv1+ReLU output exactly 0 there."""
    n, c, h, w = x_nchw.shape
    oh1, ow1 = (h - 1) // 2 + 1, (w - 1) // 2 + 1
    oh2, ow2 = (oh1 - 1) // 2 + 1, (ow1 - 1) // 2 + 1
    n_pad = n_tiles * b_tile
    bf16 = jnp.bfloat16

    x = jnp.transpose(x_nchw, (0, 2, 3, 1)).astype(bf16)              # NHWC, bf16
    if n_pad != n:
        x = jnp.pad(x, ((0, n_pad - n), (0, 0), (0, 0), (0, 0)))

    # conv1 im2col, column order (tap k1, channel c).
    xsp = jnp.pad(x, ((0, 0), (1, 1), (1, 1), (0, 0)))
    p1 = jnp.concatenate(
        [xsp[:, ki:ki + 2 * oh1:2, kj:kj + 2 * ow1:2, :]
         for ki in range(3) for kj in range(3)], axis=-1)             # (n_pad, oh1, ow1, 9c)

    # Pad the conv1-patch grid for conv2; sentinel channel marks the padding ring.
    body = jnp.pad(p1, ((0, 0), (1, 1), (1, 1), (0, 0)))
    ring = jnp.pad(jnp.zeros((n_pad, oh1, ow1, 1), bf16),
                   ((0, 0), (1, 1), (1, 1), (0, 0)), constant_values=1)
    p1p = jnp.concatenate([body, ring], axis=-1)                      # (n_pad, oh1+2, ow1+2, 9c+1)

    # One conv1 patch row per (conv2 tap, conv2 output position).
    pe = jnp.stack(
        [p1p[:, ki:ki + 2 * oh2:2, kj:kj + 2 * ow2:2, :]
         for ki in range(3) for kj in range(3)], axis=0)              # (9, n_pad, oh2, ow2, cin)
    cin = 9 * c + 1
    pe = pe.reshape(9, n_tiles, b_tile, oh2 * ow2, cin)
    pe = jnp.transpose(pe, (1, 0, 3, 2, 4))                           # (tiles, k2, s2, b, cin)
    return pe.reshape(n_tiles, 9 * oh2 * ow2 * b_tile, cin)


def shallow_cnn_forward(x_nchw, prep, *, classes, b_tile=None):
    n, c, h, w = x_nchw.shape
    oh1, ow1 = (h - 1) // 2 + 1, (w - 1) // 2 + 1
    oh2, ow2 = (oh1 - 1) // 2 + 1, (ow1 - 1) // 2 + 1
    p2 = oh2 * ow2
    assert prep["fc1_w"].shape[0] == p2, "prep/geometry mismatch"
    cin = 9 * c + 1
    npad = prep["fc2_w"].shape[1]

    if b_tile is None:
        b_tile = _pick_b_tile(n, p2)
    n_tiles = pl.cdiv(n, b_tile)
    n_pad = n_tiles * b_tile
    rows = 9 * p2 * b_tile

    xp = _build_expanded_patches(x_nchw, b_tile, n_tiles)             # (n_tiles, rows, cin)

    out = pl.pallas_call(
        _shallow_cnn_kernel,
        grid=(n_tiles,),
        in_specs=[
            pl.BlockSpec((1, rows, cin), lambda i: (i, 0, 0)),
            pl.BlockSpec(prep["w1"].shape, lambda i: (0, 0)),
            pl.BlockSpec(prep["b1"].shape, lambda i: (0, 0)),
            pl.BlockSpec(prep["w2"].shape, lambda i: (0, 0, 0)),
            pl.BlockSpec(prep["b2"].shape, lambda i: (0, 0)),
            pl.BlockSpec(prep["fc1_w"].shape, lambda i: (0, 0, 0)),
            pl.BlockSpec(prep["fc1_b"].shape, lambda i: (0, 0)),
            pl.BlockSpec(prep["fc2_w"].shape, lambda i: (0, 0)),
            pl.BlockSpec(prep["fc2_b"].shape, lambda i: (0, 0)),
        ],
        out_specs=pl.BlockSpec((b_tile, npad), lambda i: (i, 0)),
        out_shape=jax.ShapeDtypeStruct((n_pad, npad), jnp.float32),
        compiler_params=pltpu.CompilerParams(dimension_semantics=("parallel",)),
    )(xp, prep["w1"], prep["b1"], prep["w2"], prep["b2"],
      prep["fc1_w"], prep["fc1_b"], prep["fc2_w"], prep["fc2_b"])

    return out[:n, :classes]


# --------------------------------------------------------------------------
# One-time parameter preparation (outside jit): BN folding, weight layouts,
# sentinel row, fc2 lane padding, bf16 casts.
# --------------------------------------------------------------------------
def prepare_params(params, input_shape, classes, eps=1e-5):
    c, h, w = input_shape
    c1 = params["w1"].shape[0]
    c2 = params["w2"].shape[0]
    bf16, f32 = jnp.bfloat16, jnp.float32

    oh1, ow1 = (h - 1) // 2 + 1, (w - 1) // 2 + 1
    oh2, ow2 = (oh1 - 1) // 2 + 1, (ow1 - 1) // 2 + 1
    p2 = oh2 * ow2

    # conv1: fold BN scale into the weight; append the sentinel row that zeroes
    # (via ReLU) the rows corresponding to conv2's zero padding.
    inv1 = params["g1"] / jnp.sqrt(params["v1"] + eps)
    w1 = jnp.transpose(params["w1"], (2, 3, 1, 0)).reshape(9 * c, c1) * inv1[None, :]
    w1 = jnp.concatenate([w1, jnp.full((1, c1), -1e9, f32)], axis=0)   # (9c+1, 64)
    b1 = (params["b1"] - params["m1"] * inv1).reshape(1, c1)

    # conv2: per-tap (Cin, Cout) slices with the BN scale folded in.
    inv2 = params["g2"] / jnp.sqrt(params["v2"] + eps)
    w2 = jnp.transpose(params["w2"], (2, 3, 1, 0)).reshape(9, c1, c2) * inv2[None, None, :]
    b2 = (params["b2"] - params["m2"] * inv2).reshape(1, c2)

    # fc1: PyTorch flattens feat in (channel, oh, ow) order; permute the weight to the
    # kernel's (spatial, channel, hidden) layout -> (OH2*OW2, C2, 64).
    fc1_w = jnp.transpose(params["fc1_w"].reshape(-1, c2, p2), (2, 1, 0))
    fc1_b = params["fc1_b"].reshape(1, -1)

    # fc2: pre-transpose and zero-pad the logit dim to a multiple of 128 lanes.
    nhid = params["fc2_w"].shape[1]
    npad = max(128, ((classes + 127) // 128) * 128)
    fc2_w = jnp.zeros((nhid, npad), f32).at[:, :classes].set(params["fc2_w"].T)
    fc2_b = jnp.zeros((1, npad), f32).at[0, :classes].set(params["fc2_b"])

    return dict(
        w1=w1.astype(bf16), b1=b1.astype(f32),
        w2=w2.astype(bf16), b2=b2.astype(f32),
        fc1_w=fc1_w.astype(bf16), fc1_b=fc1_b.astype(f32),
        fc2_w=fc2_w.astype(bf16), fc2_b=fc2_b.astype(f32),
    )


# --------------------------------------------------------------------------
# Deterministic parameter init (mirrors the module's __init__), PyTorch layout.
# --------------------------------------------------------------------------
def init_params(key, input_shape, classes):
    c, h, w = input_shape
    k = jax.random.split(key, 4)

    def kaiming_fan_out(key, shape):          # (OutC, InC, KH, KW), fan_out, relu
        fan_out = shape[0] * shape[2] * shape[3]
        std = (2.0 / fan_out) ** 0.5
        return std * jax.random.normal(key, shape, jnp.float32)

    w1 = kaiming_fan_out(k[0], (64, c, 3, 3))
    w2 = kaiming_fan_out(k[1], (128, 64, 3, 3))

    oh1, ow1 = (h - 1) // 2 + 1, (w - 1) // 2 + 1
    oh2, ow2 = (oh1 - 1) // 2 + 1, (ow1 - 1) // 2 + 1
    d = 128 * oh2 * ow2

    def linear_init(key, out_f, in_f):        # PyTorch default Linear init
        bound = 1.0 / (in_f ** 0.5)
        kw_, kb_ = jax.random.split(key)
        wgt = jax.random.uniform(kw_, (out_f, in_f), jnp.float32, -bound, bound)
        bias = jax.random.uniform(kb_, (out_f,), jnp.float32, -bound, bound)
        return wgt, bias

    fc1_w, fc1_b = linear_init(k[2], 64, d)
    fc2_w, fc2_b = linear_init(k[3], classes, 64)

    return dict(
        w1=w1, g1=jnp.ones(64, jnp.float32), b1=jnp.zeros(64, jnp.float32),
        m1=jnp.zeros(64, jnp.float32), v1=jnp.ones(64, jnp.float32),
        w2=w2, g2=jnp.ones(128, jnp.float32), b2=jnp.zeros(128, jnp.float32),
        m2=jnp.zeros(128, jnp.float32), v2=jnp.ones(128, jnp.float32),
        fc1_w=fc1_w, fc1_b=fc1_b, fc2_w=fc2_w, fc2_b=fc2_b,
    )


# --------------------------------------------------------------------------
# Pure-JAX (f32, XLA) reference for a numerical sanity check.
# --------------------------------------------------------------------------
def reference_forward(x, params, eps=1e-5):
    def conv_bn_relu(x, wgt, g, b, m, v):
        y = jax.lax.conv_general_dilated(
            x, wgt, window_strides=(2, 2), padding=((1, 1), (1, 1)),
            dimension_numbers=("NCHW", "OIHW", "NCHW"))
        inv = g / jnp.sqrt(v + eps)
        return jnp.maximum(y * inv[None, :, None, None]
                           + (b - m * inv)[None, :, None, None], 0.0)

    hf = conv_bn_relu(x, params["w1"], params["g1"], params["b1"], params["m1"], params["v1"])
    hf = conv_bn_relu(hf, params["w2"], params["g2"], params["b2"], params["m2"], params["v2"])
    feat = hf.reshape(hf.shape[0], -1)
    h1 = feat @ params["fc1_w"].T + params["fc1_b"]
    return h1 @ params["fc2_w"].T + params["fc2_b"]


if __name__ == "__main__":
    # Small shapes consistent with the module: ShallowCNN(input_shape=(4,16,16), classes=16)
    input_shape = (4, 16, 16)
    classes = 16
    batch = 2

    key = jax.random.PRNGKey(0)
    kx, kp = jax.random.split(key)
    x = jax.random.normal(kx, (batch,) + input_shape, jnp.float32)      # NCHW
    params = init_params(kp, input_shape, classes)
    prep = prepare_params(params, input_shape, classes)                 # outside jit

    fwd = jax.jit(functools.partial(shallow_cnn_forward, classes=classes))
    logits = fwd(x, prep)
    jax.block_until_ready(logits)

    assert logits.shape == (batch, classes), logits.shape
    assert logits.dtype == jnp.float32

    ref = reference_forward(x, params)
    jax.block_until_ready(ref)
    max_err = float(jnp.max(jnp.abs(logits - ref)))
    assert max_err < 1e-1, f"max abs err vs f32 reference: {max_err}"   # bf16 operands, f32 accum

    # Second check: multi-tile grid + batch padding path (batch not a multiple of B_TILE).
    batch2 = 37
    x2 = jax.random.normal(jax.random.PRNGKey(1), (batch2,) + input_shape, jnp.float32)
    logits2 = fwd(x2, prep)
    jax.block_until_ready(logits2)
    ref2 = reference_forward(x2, params)
    max_err2 = float(jnp.max(jnp.abs(logits2 - ref2)))
    assert logits2.shape == (batch2, classes)
    assert max_err2 < 1e-1, f"max abs err (multi-tile) vs f32 reference: {max_err2}"

    print("KERNEL_OK")
</pallas_src>

<mosaic_0001>
module attributes {stable_mosaic.version = 11 : i64} {
  func.func @_shallow_cnn_kernel(%arg0: i32, %arg1: memref<1x1152x37xbf16, #tpu.memory_space<vmem>>, %arg2: memref<37x64xbf16, #tpu.memory_space<vmem>>, %arg3: memref<1x64xf32, #tpu.memory_space<vmem>>, %arg4: memref<9x64x128xbf16, #tpu.memory_space<vmem>>, %arg5: memref<1x128xf32, #tpu.memory_space<vmem>>, %arg6: memref<16x128x64xbf16, #tpu.memory_space<vmem>>, %arg7: memref<1x64xf32, #tpu.memory_space<vmem>>, %arg8: memref<64x128xbf16, #tpu.memory_space<vmem>>, %arg9: memref<1x128xf32, #tpu.memory_space<vmem>>, %arg10: memref<8x128xf32, #tpu.memory_space<vmem>>) attributes {dimension_semantics = [#tpu.dimension_semantics<parallel>], iteration_bounds = array<i64: 1>, scalar_prefetch = 0 : i64, scratch_operands = 0 : i64, tpu.core_type = #tpu.core_type<tc>, window_params = [{transform_indices = @transform_0, window_bounds = array<i64: 1, 1152, 37>}, {pipeline_mode = #tpu.pipeline_mode<synchronous>, transform_indices = @transform_1, window_bounds = array<i64: 37, 64>}, {pipeline_mode = #tpu.pipeline_mode<synchronous>, transform_indices = @transform_2, window_bounds = array<i64: 1, 64>}, {pipeline_mode = #tpu.pipeline_mode<synchronous>, transform_indices = @transform_3, window_bounds = array<i64: 9, 64, 128>}, {pipeline_mode = #tpu.pipeline_mode<synchronous>, transform_indices = @transform_4, window_bounds = array<i64: 1, 128>}, {pipeline_mode = #tpu.pipeline_mode<synchronous>, transform_indices = @transform_5, window_bounds = array<i64: 16, 128, 64>}, {pipeline_mode = #tpu.pipeline_mode<synchronous>, transform_indices = @transform_6, window_bounds = array<i64: 1, 64>}, {pipeline_mode = #tpu.pipeline_mode<synchronous>, transform_indices = @transform_7, window_bounds = array<i64: 64, 128>}, {pipeline_mode = #tpu.pipeline_mode<synchronous>, transform_indices = @transform_8, window_bounds = array<i64: 1, 128>}, {transform_indices = @transform_9, window_bounds = array<i64: 8, 128>}]} {
    %c0 = arith.constant 0 : index
    %c0_0 = arith.constant 0 : index
    %c0_1 = arith.constant 0 : index
    %0 = vector.load %arg1[%c0, %c0_0, %c0_1] : memref<1x1152x37xbf16, #tpu.memory_space<vmem>>, vector<1x1152x37xbf16>
    %1 = vector.shape_cast %0 : vector<1x1152x37xbf16> to vector<1152x37xbf16>
    %c0_2 = arith.constant 0 : index
    %c0_3 = arith.constant 0 : index
    %2 = vector.load %arg2[%c0_2, %c0_3] : memref<37x64xbf16, #tpu.memory_space<vmem>>, vector<37x64xbf16>
    %cst = arith.constant dense<0.000000e+00> : vector<1152x64xf32>
    %3 = tpu.matmul %1, %2, %cst {dimension_numbers = #tpu.dot_dimension_numbers<[1], [0], [0], [1], [0, 0, 1, 1], [], []>} : vector<1152x37xbf16>, vector<37x64xbf16>, vector<1152x64xf32> -> vector<1152x64xf32>
    %c0_4 = arith.constant 0 : index
    %c0_5 = arith.constant 0 : index
    %4 = vector.load %arg3[%c0_4, %c0_5] : memref<1x64xf32, #tpu.memory_space<vmem>>, vector<1x64xf32>
    %5 = vector.broadcast %4 : vector<1x64xf32> to vector<1152x64xf32>
    %6 = arith.addf %3, %5 : vector<1152x64xf32>
    %cst_6 = arith.constant 0.000000e+00 : f32
    %7 = vector.broadcast %cst_6 : f32 to vector<1152x64xf32>
    %8 = arith.maximumf %6, %7 : vector<1152x64xf32>
    %9 = arith.truncf %8 : vector<1152x64xf32> to vector<1152x64xbf16>
    %cst_7 = arith.constant 0.000000e+00 : f32
    %10 = vector.broadcast %cst_7 : f32 to vector<128x128xf32>
    %11 = vector.extract_strided_slice %9 {offsets = [0, 0], sizes = [128, 64], strides = [1, 1]} : vector<1152x64xbf16> to vector<128x64xbf16>
    %c0_8 = arith.constant 0 : index
    %c0_9 = arith.constant 0 : index
    %c0_10 = arith.constant 0 : index
    %12 = vector.load %arg4[%c0_8, %c0_9, %c0_10] : memref<9x64x128xbf16, #tpu.memory_space<vmem>>, vector<1x64x128xbf16>
    %13 = vector.shape_cast %12 : vector<1x64x128xbf16> to vector<64x128xbf16>
    %cst_11 = arith.constant dense<0.000000e+00> : vector<128x128xf32>
    %14 = tpu.matmul %11, %13, %cst_11 {dimension_numbers = #tpu.dot_dimension_numbers<[1], [0], [0], [1], [0, 0, 1, 1], [], []>} : vector<128x64xbf16>, vector<64x128xbf16>, vector<128x128xf32> -> vector<128x128xf32>
    %15 = arith.addf %10, %14 : vector<128x128xf32>
    %16 = vector.extract_strided_slice %9 {offsets = [128, 0], sizes = [128, 64], strides = [1, 1]} : vector<1152x64xbf16> to vector<128x64xbf16>
    %c1 = arith.constant 1 : index
    %c0_12 = arith.constant 0 : index
    %c0_13 = arith.constant 0 : index
    %17 = vector.load %arg4[%c1, %c0_12, %c0_13] : memref<9x64x128xbf16, #tpu.memory_space<vmem>>, vector<1x64x128xbf16>
    %18 = vector.shape_cast %17 : vector<1x64x128xbf16> to vector<64x128xbf16>
    %cst_14 = arith.constant dense<0.000000e+00> : vector<128x128xf32>
    %19 = tpu.matmul %16, %18, %cst_14 {dimension_numbers = #tpu.dot_dimension_numbers<[1], [0], [0], [1], [0, 0, 1, 1], [], []>} : vector<128x64xbf16>, vector<64x128xbf16>, vector<128x128xf32> -> vector<128x128xf32>
    %20 = arith.addf %15, %19 : vector<128x128xf32>
    %21 = vector.extract_strided_slice %9 {offsets = [256, 0], sizes = [128, 64], strides = [1, 1]} : vector<1152x64xbf16> to vector<128x64xbf16>
    %c2 = arith.constant 2 : index
    %c0_15 = arith.constant 0 : index
    %c0_16 = arith.constant 0 : index
    %22 = vector.load %arg4[%c2, %c0_15, %c0_16] : memref<9x64x128xbf16, #tpu.memory_space<vmem>>, vector<1x64x128xbf16>
    %23 = vector.shape_cast %22 : vector<1x64x128xbf16> to vector<64x128xbf16>
    %cst_17 = arith.constant dense<0.000000e+00> : vector<128x128xf32>
    %24 = tpu.matmul %21, %23, %cst_17 {dimension_numbers = #tpu.dot_dimension_numbers<[1], [0], [0], [1], [0, 0, 1, 1], [], []>} : vector<128x64xbf16>, vector<64x128xbf16>, vector<128x128xf32> -> vector<128x128xf32>
    %25 = arith.addf %20, %24 : vector<128x128xf32>
    %26 = vector.extract_strided_slice %9 {offsets = [384, 0], sizes = [128, 64], strides = [1, 1]} : vector<1152x64xbf16> to vector<128x64xbf16>
    %c3 = arith.constant 3 : index
    %c0_18 = arith.constant 0 : index
    %c0_19 = arith.constant 0 : index
    %27 = vector.load %arg4[%c3, %c0_18, %c0_19] : memref<9x64x128xbf16, #tpu.memory_space<vmem>>, vector<1x64x128xbf16>
    %28 = vector.shape_cast %27 : vector<1x64x128xbf16> to vector<64x128xbf16>
    %cst_20 = arith.constant dense<0.000000e+00> : vector<128x128xf32>
    %29 = tpu.matmul %26, %28, %cst_20 {dimension_numbers = #tpu.dot_dimension_numbers<[1], [0], [0], [1], [0, 0, 1, 1], [], []>} : vector<128x64xbf16>, vector<64x128xbf16>, vector<128x128xf32> -> vector<128x128xf32>
    %30 = arith.addf %25, %29 : vector<128x128xf32>
    %31 = vector.extract_strided_slice %9 {offsets = [512, 0], sizes = [128, 64], strides = [1, 1]} : vector<1152x64xbf16> to vector<128x64xbf16>
    %c4 = arith.constant 4 : index
    %c0_21 = arith.constant 0 : index
    %c0_22 = arith.constant 0 : index
    %32 = vector.load %arg4[%c4, %c0_21, %c0_22] : memref<9x64x128xbf16, #tpu.memory_space<vmem>>, vector<1x64x128xbf16>
    %33 = vector.shape_cast %32 : vector<1x64x128xbf16> to vector<64x128xbf16>
    %cst_23 = arith.constant dense<0.000000e+00> : vector<128x128xf32>
    %34 = tpu.matmul %31, %33, %cst_23 {dimension_numbers = #tpu.dot_dimension_numbers<[1], [0], [0], [1], [0, 0, 1, 1], [], []>} : vector<128x64xbf16>, vector<64x128xbf16>, vector<128x128xf32> -> vector<128x128xf32>
    %35 = arith.addf %30, %34 : vector<128x128xf32>
    %36 = vector.extract_strided_slice %9 {offsets = [640, 0], sizes = [128, 64], strides = [1, 1]} : vector<1152x64xbf16> to vector<128x64xbf16>
    %c5 = arith.constant 5 : index
    %c0_24 = arith.constant 0 : index
    %c0_25 = arith.constant 0 : index
    %37 = vector.load %arg4[%c5, %c0_24, %c0_25] : memref<9x64x128xbf16, #tpu.memory_space<vmem>>, vector<1x64x128xbf16>
    %38 = vector.shape_cast %37 : vector<1x64x128xbf16> to vector<64x128xbf16>
    %cst_26 = arith.constant dense<0.000000e+00> : vector<128x128xf32>
    %39 = tpu.matmul %36, %38, %cst_26 {dimension_numbers = #tpu.dot_dimension_numbers<[1], [0], [0], [1], [0, 0, 1, 1], [], []>} : vector<128x64xbf16>, vector<64x128xbf16>, vector<128x128xf32> -> vector<128x128xf32>
    %40 = arith.addf %35, %39 : vector<128x128xf32>
    %41 = vector.extract_strided_slice %9 {offsets = [768, 0], sizes = [128, 64], strides = [1, 1]} : vector<1152x64xbf16> to vector<128x64xbf16>
    %c6 = arith.constant 6 : index
    %c0_27 = arith.constant 0 : index
    %c0_28 = arith.constant 0 : index
    %42 = vector.load %arg4[%c6, %c0_27, %c0_28] : memref<9x64x128xbf16, #tpu.memory_space<vmem>>, vector<1x64x128xbf16>
    %43 = vector.shape_cast %42 : vector<1x64x128xbf16> to vector<64x128xbf16>
    %cst_29 = arith.constant dense<0.000000e+00> : vector<128x128xf32>
    %44 = tpu.matmul %41, %43, %cst_29 {dimension_numbers = #tpu.dot_dimension_numbers<[1], [0], [0], [1], [0, 0, 1, 1], [], []>} : vector<128x64xbf16>, vector<64x128xbf16>, vector<128x128xf32> -> vector<128x128xf32>
    %45 = arith.addf %40, %44 : vector<128x128xf32>
    %46 = vector.extract_strided_slice %9 {offsets = [896, 0], sizes = [128, 64], strides = [1, 1]} : vector<1152x64xbf16> to vector<128x64xbf16>
    %c7 = arith.constant 7 : index
    %c0_30 = arith.constant 0 : index
    %c0_31 = arith.constant 0 : index
    %47 = vector.load %arg4[%c7, %c0_30, %c0_31] : memref<9x64x128xbf16, #tpu.memory_space<vmem>>, vector<1x64x128xbf16>
    %48 = vector.shape_cast %47 : vector<1x64x128xbf16> to vector<64x128xbf16>
    %cst_32 = arith.constant dense<0.000000e+00> : vector<128x128xf32>
    %49 = tpu.matmul %46, %48, %cst_32 {dimension_numbers = #tpu.dot_dimension_numbers<[1], [0], [0], [1], [0, 0, 1, 1], [], []>} : vector<128x64xbf16>, vector<64x128xbf16>, vector<128x128xf32> -> vector<128x128xf32>
    %50 = arith.addf %45, %49 : vector<128x128xf32>
    %51 = vector.extract_strided_slice %9 {offsets = [1024, 0], sizes = [128, 64], strides = [1, 1]} : vector<1152x64xbf16> to vector<128x64xbf16>
    %c8 = arith.constant 8 : index
    %c0_33 = arith.constant 0 : index
    %c0_34 = arith.constant 0 : index
    %52 = vector.load %arg4[%c8, %c0_33, %c0_34] : memref<9x64x128xbf16, #tpu.memory_space<vmem>>, vector<1x64x128xbf16>
    %53 = vector.shape_cast %52 : vector<1x64x128xbf16> to vector<64x128xbf16>
    %cst_35 = arith.constant dense<0.000000e+00> : vector<128x128xf32>
    %54 = tpu.matmul %51, %53, %cst_35 {dimension_numbers = #tpu.dot_dimension_numbers<[1], [0], [0], [1], [0, 0, 1, 1], [], []>} : vector<128x64xbf16>, vector<64x128xbf16>, vector<128x128xf32> -> vector<128x128xf32>
    %55 = arith.addf %50, %54 : vector<128x128xf32>
    %c0_36 = arith.constant 0 : index
    %c0_37 = arith.constant 0 : index
    %56 = vector.load %arg5[%c0_36, %c0_37] : memref<1x128xf32, #tpu.memory_space<vmem>>, vector<1x128xf32>
    %57 = vector.broadcast %56 : vector<1x128xf32> to vector<128x128xf32>
    %58 = arith.addf %55, %57 : vector<128x128xf32>
    %cst_38 = arith.constant 0.000000e+00 : f32
    %59 = vector.broadcast %cst_38 : f32 to vector<128x128xf32>
    %60 = arith.maximumf %58, %59 : vector<128x128xf32>
    %cst_39 = arith.constant 0.000000e+00 : f32
    %61 = vector.broadcast %cst_39 : f32 to vector<8x64xf32>
    %c0_40 = arith.constant 0 : index
    %c0_41 = arith.constant 0 : index
    %62 = vector.load %arg7[%c0_40, %c0_41] : memref<1x64xf32, #tpu.memory_space<vmem>>, vector<1x64xf32>
    %63 = vector.broadcast %62 : vector<1x64xf32> to vector<8x64xf32>
    %64 = arith.addf %61, %63 : vector<8x64xf32>
    %65 = vector.extract_strided_slice %60 {offsets = [0, 0], sizes = [8, 128], strides = [1, 1]} : vector<128x128xf32> to vector<8x128xf32>
    %66 = arith.truncf %65 : vector<8x128xf32> to vector<8x128xbf16>
    %c0_42 = arith.constant 0 : index
    %c0_43 = arith.constant 0 : index
    %c0_44 = arith.constant 0 : index
    %67 = vector.load %arg6[%c0_42, %c0_43, %c0_44] : memref<16x128x64xbf16, #tpu.memory_space<vmem>>, vector<1x128x64xbf16>
    %68 = vector.shape_cast %67 : vector<1x128x64xbf16> to vector<128x64xbf16>
    %cst_45 = arith.constant dense<0.000000e+00> : vector<8x64xf32>
    %69 = tpu.matmul %66, %68, %cst_45 {dimension_numbers = #tpu.dot_dimension_numbers<[1], [0], [0], [1], [0, 0, 1, 1], [], []>} : vector<8x128xbf16>, vector<128x64xbf16>, vector<8x64xf32> -> vector<8x64xf32>
    %70 = arith.addf %64, %69 : vector<8x64xf32>
    %71 = vector.extract_strided_slice %60 {offsets = [8, 0], sizes = [8, 128], strides = [1, 1]} : vector<128x128xf32> to vector<8x128xf32>
    %72 = arith.truncf %71 : vector<8x128xf32> to vector<8x128xbf16>
    %c1_46 = arith.constant 1 : index
    %c0_47 = arith.constant 0 : index
    %c0_48 = arith.constant 0 : index
    %73 = vector.load %arg6[%c1_46, %c0_47, %c0_48] : memref<16x128x64xbf16, #tpu.memory_space<vmem>>, vector<1x128x64xbf16>
    %74 = vector.shape_cast %73 : vector<1x128x64xbf16> to vector<128x64xbf16>
    %cst_49 = arith.constant dense<0.000000e+00> : vector<8x64xf32>
    %75 = tpu.matmul %72, %74, %cst_49 {dimension_numbers = #tpu.dot_dimension_numbers<[1], [0], [0], [1], [0, 0, 1, 1], [], []>} : vector<8x128xbf16>, vector<128x64xbf16>, vector<8x64xf32> -> vector<8x64xf32>
    %76 = arith.addf %70, %75 : vector<8x64xf32>
    %77 = vector.extract_strided_slice %60 {offsets = [16, 0], sizes = [8, 128], strides = [1, 1]} : vector<128x128xf32> to vector<8x128xf32>
    %78 = arith.truncf %77 : vector<8x128xf32> to vector<8x128xbf16>
    %c2_50 = arith.constant 2 : index
    %c0_51 = arith.constant 0 : index
    %c0_52 = arith.constant 0 : index
    %79 = vector.load %arg6[%c2_50, %c0_51, %c0_52] : memref<16x128x64xbf16, #tpu.memory_space<vmem>>, vector<1x128x64xbf16>
    %80 = vector.shape_cast %79 : vector<1x128x64xbf16> to vector<128x64xbf16>
    %cst_53 = arith.constant dense<0.000000e+00> : vector<8x64xf32>
    %81 = tpu.matmul %78, %80, %cst_53 {dimension_numbers = #tpu.dot_dimension_numbers<[1], [0], [0], [1], [0, 0, 1, 1], [], []>} : vector<8x128xbf16>, vector<128x64xbf16>, vector<8x64xf32> -> vector<8x64xf32>
    %82 = arith.addf %76, %81 : vector<8x64xf32>
    %83 = vector.extract_strided_slice %60 {offsets = [24, 0], sizes = [8, 128], strides = [1, 1]} : vector<128x128xf32> to vector<8x128xf32>
    %84 = arith.truncf %83 : vector<8x128xf32> to vector<8x128xbf16>
    %c3_54 = arith.constant 3 : index
    %c0_55 = arith.constant 0 : index
    %c0_56 = arith.constant 0 : index
    %85 = vector.load %arg6[%c3_54, %c0_55, %c0_56] : memref<16x128x64xbf16, #tpu.memory_space<vmem>>, vector<1x128x64xbf16>
    %86 = vector.shape_cast %85 : vector<1x128x64xbf16> to vector<128x64xbf16>
    %cst_57 = arith.constant dense<0.000000e+00> : vector<8x64xf32>
    %87 = tpu.matmul %84, %86, %cst_57 {dimension_numbers = #tpu.dot_dimension_numbers<[1], [0], [0], [1], [0, 0, 1, 1], [], []>} : vector<8x128xbf16>, vector<128x64xbf16>, vector<8x64xf32> -> vector<8x64xf32>
    %88 = arith.addf %82, %87 : vector<8x64xf32>
    %89 = vector.extract_strided_slice %60 {offsets = [32, 0], sizes = [8, 128], strides = [1, 1]} : vector<128x128xf32> to vector<8x128xf32>
    %90 = arith.truncf %89 : vector<8x128xf32> to vector<8x128xbf16>
    %c4_58 = arith.constant 4 : index
    %c0_59 = arith.constant 0 : index
    %c0_60 = arith.constant 0 : index
    %91 = vector.load %arg6[%c4_58, %c0_59, %c0_60] : memref<16x128x64xbf16, #tpu.memory_space<vmem>>, vector<1x128x64xbf16>
    %92 = vector.shape_cast %91 : vector<1x128x64xbf16> to vector<128x64xbf16>
    %cst_61 = arith.constant dense<0.000000e+00> : vector<8x64xf32>
    %93 = tpu.matmul %90, %92, %cst_61 {dimension_numbers = #tpu.dot_dimension_numbers<[1], [0], [0], [1], [0, 0, 1, 1], [], []>} : vector<8x128xbf16>, vector<128x64xbf16>, vector<8x64xf32> -> vector<8x64xf32>
    %94 = arith.addf %88, %93 : vector<8x64xf32>
    %95 = vector.extract_strided_slice %60 {offsets = [40, 0], sizes = [8, 128], strides = [1, 1]} : vector<128x128xf32> to vector<8x128xf32>
    %96 = arith.truncf %95 : vector<8x128xf32> to vector<8x128xbf16>
    %c5_62 = arith.constant 5 : index
    %c0_63 = arith.constant 0 : index
    %c0_64 = arith.constant 0 : index
    %97 = vector.load %arg6[%c5_62, %c0_63, %c0_64] : memref<16x128x64xbf16, #tpu.memory_space<vmem>>, vector<1x128x64xbf16>
    %98 = vector.shape_cast %97 : vector<1x128x64xbf16> to vector<128x64xbf16>
    %cst_65 = arith.constant dense<0.000000e+00> : vector<8x64xf32>
    %99 = tpu.matmul %96, %98, %cst_65 {dimension_numbers = #tpu.dot_dimension_numbers<[1], [0], [0], [1], [0, 0, 1, 1], [], []>} : vector<8x128xbf16>, vector<128x64xbf16>, vector<8x64xf32> -> vector<8x64xf32>
    %100 = arith.addf %94, %99 : vector<8x64xf32>
    %101 = vector.extract_strided_slice %60 {offsets = [48, 0], sizes = [8, 128], strides = [1, 1]} : vector<128x128xf32> to vector<8x128xf32>
    %102 = arith.truncf %101 : vector<8x128xf32> to vector<8x128xbf16>
    %c6_66 = arith.constant 6 : index
    %c0_67 = arith.constant 0 : index
    %c0_68 = arith.constant 0 : index
    %103 = vector.load %arg6[%c6_66, %c0_67, %c0_68] : memref<16x128x64xbf16, #tpu.memory_space<vmem>>, vector<1x128x64xbf16>
    %104 = vector.shape_cast %103 : vector<1x128x64xbf16> to vector<128x64xbf16>
    %cst_69 = arith.constant dense<0.000000e+00> : vector<8x64xf32>
    %105 = tpu.matmul %102, %104, %cst_69 {dimension_numbers = #tpu.dot_dimension_numbers<[1], [0], [0], [1], [0, 0, 1, 1], [], []>} : vector<8x128xbf16>, vector<128x64xbf16>, vector<8x64xf32> -> vector<8x64xf32>
    %106 = arith.addf %100, %105 : vector<8x64xf32>
    %107 = vector.extract_strided_slice %60 {offsets = [56, 0], sizes = [8, 128], strides = [1, 1]} : vector<128x128xf32> to vector<8x128xf32>
    %108 = arith.truncf %107 : vector<8x128xf32> to vector<8x128xbf16>
    %c7_70 = arith.constant 7 : index
    %c0_71 = arith.constant 0 : index
    %c0_72 = arith.constant 0 : index
    %109 = vector.load %arg6[%c7_70, %c0_71, %c0_72] : memref<16x128x64xbf16, #tpu.memory_space<vmem>>, vector<1x128x64xbf16>
    %110 = vector.shape_cast %109 : vector<1x128x64xbf16> to vector<128x64xbf16>
    %cst_73 = arith.constant dense<0.000000e+00> : vector<8x64xf32>
    %111 = tpu.matmul %108, %110, %cst_73 {dimension_numbers = #tpu.dot_dimension_numbers<[1], [0], [0], [1], [0, 0, 1, 1], [], []>} : vector<8x128xbf16>, vector<128x64xbf16>, vector<8x64xf32> -> vector<8x64xf32>
    %112 = arith.addf %106, %111 : vector<8x64xf32>
    %113 = vector.extract_strided_slice %60 {offsets = [64, 0], sizes = [8, 128], strides = [1, 1]} : vector<128x128xf32> to vector<8x128xf32>
    %114 = arith.truncf %113 : vector<8x128xf32> to vector<8x128xbf16>
    %c8_74 = arith.constant 8 : index
    %c0_75 = arith.constant 0 : index
    %c0_76 = arith.constant 0 : index
    %115 = vector.load %arg6[%c8_74, %c0_75, %c0_76] : memref<16x128x64xbf16, #tpu.memory_space<vmem>>, vector<1x128x64xbf16>
    %116 = vector.shape_cast %115 : vector<1x128x64xbf16> to vector<128x64xbf16>
    %cst_77 = arith.constant dense<0.000000e+00> : vector<8x64xf32>
    %117 = tpu.matmul %114, %116, %cst_77 {dimension_numbers = #tpu.dot_dimension_numbers<[1], [0], [0], [1], [0, 0, 1, 1], [], []>} : vector<8x128xbf16>, vector<128x64xbf16>, vector<8x64xf32> -> vector<8x64xf32>
    %118 = arith.addf %112, %117 : vector<8x64xf32>
    %119 = vector.extract_strided_slice %60 {offsets = [72, 0], sizes = [8, 128], strides = [1, 1]} : vector<128x128xf32> to vector<8x128xf32>
    %120 = arith.truncf %119 : vector<8x128xf32> to vector<8x128xbf16>
    %c9 = arith.constant 9 : index
    %c0_78 = arith.constant 0 : index
    %c0_79 = arith.constant 0 : index
    %121 = vector.load %arg6[%c9, %c0_78, %c0_79] : memref<16x128x64xbf16, #tpu.memory_space<vmem>>, vector<1x128x64xbf16>
    %122 = vector.shape_cast %121 : vector<1x128x64xbf16> to vector<128x64xbf16>
    %cst_80 = arith.constant dense<0.000000e+00> : vector<8x64xf32>
    %123 = tpu.matmul %120, %122, %cst_80 {dimension_numbers = #tpu.dot_dimension_numbers<[1], [0], [0], [1], [0, 0, 1, 1], [], []>} : vector<8x128xbf16>, vector<128x64xbf16>, vector<8x64xf32> -> vector<8x64xf32>
    %124 = arith.addf %118, %123 : vector<8x64xf32>
    %125 = vector.extract_strided_slice %60 {offsets = [80, 0], sizes = [8, 128], strides = [1, 1]} : vector<128x128xf32> to vector<8x128xf32>
    %126 = arith.truncf %125 : vector<8x128xf32> to vector<8x128xbf16>
    %c10 = arith.constant 10 : index
    %c0_81 = arith.constant 0 : index
    %c0_82 = arith.constant 0 : index
    %127 = vector.load %arg6[%c10, %c0_81, %c0_82] : memref<16x128x64xbf16, #tpu.memory_space<vmem>>, vector<1x128x64xbf16>
    %128 = vector.shape_cast %127 : vector<1x128x64xbf16> to vector<128x64xbf16>
    %cst_83 = arith.constant dense<0.000000e+00> : vector<8x64xf32>
    %129 = tpu.matmul %126, %128, %cst_83 {dimension_numbers = #tpu.dot_dimension_numbers<[1], [0], [0], [1], [0, 0, 1, 1], [], []>} : vector<8x128xbf16>, vector<128x64xbf16>, vector<8x64xf32> -> vector<8x64xf32>
    %130 = arith.addf %124, %129 : vector<8x64xf32>
    %131 = vector.extract_strided_slice %60 {offsets = [88, 0], sizes = [8, 128], strides = [1, 1]} : vector<128x128xf32> to vector<8x128xf32>
    %132 = arith.truncf %131 : vector<8x128xf32> to vector<8x128xbf16>
    %c11 = arith.constant 11 : index
    %c0_84 = arith.constant 0 : index
    %c0_85 = arith.constant 0 : index
    %133 = vector.load %arg6[%c11, %c0_84, %c0_85] : memref<16x128x64xbf16, #tpu.memory_space<vmem>>, vector<1x128x64xbf16>
    %134 = vector.shape_cast %133 : vector<1x128x64xbf16> to vector<128x64xbf16>
    %cst_86 = arith.constant dense<0.000000e+00> : vector<8x64xf32>
    %135 = tpu.matmul %132, %134, %cst_86 {dimension_numbers = #tpu.dot_dimension_numbers<[1], [0], [0], [1], [0, 0, 1, 1], [], []>} : vector<8x128xbf16>, vector<128x64xbf16>, vector<8x64xf32> -> vector<8x64xf32>
    %136 = arith.addf %130, %135 : vector<8x64xf32>
    %137 = vector.extract_strided_slice %60 {offsets = [96, 0], sizes = [8, 128], strides = [1, 1]} : vector<128x128xf32> to vector<8x128xf32>
    %138 = arith.truncf %137 : vector<8x128xf32> to vector<8x128xbf16>
    %c12 = arith.constant 12 : index
    %c0_87 = arith.constant 0 : index
    %c0_88 = arith.constant 0 : index
    %139 = vector.load %arg6[%c12, %c0_87, %c0_88] : memref<16x128x64xbf16, #tpu.memory_space<vmem>>, vector<1x128x64xbf16>
    %140 = vector.shape_cast %139 : vector<1x128x64xbf16> to vector<128x64xbf16>
    %cst_89 = arith.constant dense<0.000000e+00> : vector<8x64xf32>
    %141 = tpu.matmul %138, %140, %cst_89 {dimension_numbers = #tpu.dot_dimension_numbers<[1], [0], [0], [1], [0, 0, 1, 1], [], []>} : vector<8x128xbf16>, vector<128x64xbf16>, vector<8x64xf32> -> vector<8x64xf32>
    %142 = arith.addf %136, %141 : vector<8x64xf32>
    %143 = vector.extract_strided_slice %60 {offsets = [104, 0], sizes = [8, 128], strides = [1, 1]} : vector<128x128xf32> to vector<8x128xf32>
    %144 = arith.truncf %143 : vector<8x128xf32> to vector<8x128xbf16>
    %c13 = arith.constant 13 : index
    %c0_90 = arith.constant 0 : index
    %c0_91 = arith.constant 0 : index
    %145 = vector.load %arg6[%c13, %c0_90, %c0_91] : memref<16x128x64xbf16, #tpu.memory_space<vmem>>, vector<1x128x64xbf16>
    %146 = vector.shape_cast %145 : vector<1x128x64xbf16> to vector<128x64xbf16>
    %cst_92 = arith.constant dense<0.000000e+00> : vector<8x64xf32>
    %147 = tpu.matmul %144, %146, %cst_92 {dimension_numbers = #tpu.dot_dimension_numbers<[1], [0], [0], [1], [0, 0, 1, 1], [], []>} : vector<8x128xbf16>, vector<128x64xbf16>, vector<8x64xf32> -> vector<8x64xf32>
    %148 = arith.addf %142, %147 : vector<8x64xf32>
    %149 = vector.extract_strided_slice %60 {offsets = [112, 0], sizes = [8, 128], strides = [1, 1]} : vector<128x128xf32> to vector<8x128xf32>
    %150 = arith.truncf %149 : vector<8x128xf32> to vector<8x128xbf16>
    %c14 = arith.constant 14 : index
    %c0_93 = arith.constant 0 : index
    %c0_94 = arith.constant 0 : index
    %151 = vector.load %arg6[%c14, %c0_93, %c0_94] : memref<16x128x64xbf16, #tpu.memory_space<vmem>>, vector<1x128x64xbf16>
    %152 = vector.shape_cast %151 : vector<1x128x64xbf16> to vector<128x64xbf16>
    %cst_95 = arith.constant dense<0.000000e+00> : vector<8x64xf32>
    %153 = tpu.matmul %150, %152, %cst_95 {dimension_numbers = #tpu.dot_dimension_numbers<[1], [0], [0], [1], [0, 0, 1, 1], [], []>} : vector<8x128xbf16>, vector<128x64xbf16>, vector<8x64xf32> -> vector<8x64xf32>
    %154 = arith.addf %148, %153 : vector<8x64xf32>
    %155 = vector.extract_strided_slice %60 {offsets = [120, 0], sizes = [8, 128], strides = [1, 1]} : vector<128x128xf32> to vector<8x128xf32>
    %156 = arith.truncf %155 : vector<8x128xf32> to vector<8x128xbf16>
    %c15 = arith.constant 15 : index
    %c0_96 = arith.constant 0 : index
    %c0_97 = arith.constant 0 : index
    %157 = vector.load %arg6[%c15, %c0_96, %c0_97] : memref<16x128x64xbf16, #tpu.memory_space<vmem>>, vector<1x128x64xbf16>
    %158 = vector.shape_cast %157 : vector<1x128x64xbf16> to vector<128x64xbf16>
    %cst_98 = arith.constant dense<0.000000e+00> : vector<8x64xf32>
    %159 = tpu.matmul %156, %158, %cst_98 {dimension_numbers = #tpu.dot_dimension_numbers<[1], [0], [0], [1], [0, 0, 1, 1], [], []>} : vector<8x128xbf16>, vector<128x64xbf16>, vector<8x64xf32> -> vector<8x64xf32>
    %160 = arith.addf %154, %159 : vector<8x64xf32>
    %161 = arith.truncf %160 : vector<8x64xf32> to vector<8x64xbf16>
    %c0_99 = arith.constant 0 : index
    %c0_100 = arith.constant 0 : index
    %162 = vector.load %arg8[%c0_99, %c0_100] : memref<64x128xbf16, #tpu.memory_space<vmem>>, vector<64x128xbf16>
    %cst_101 = arith.constant dense<0.000000e+00> : vector<8x128xf32>
    %163 = tpu.matmul %161, %162, %cst_101 {dimension_numbers = #tpu.dot_dimension_numbers<[1], [0], [0], [1], [0, 0, 1, 1], [], []>} : vector<8x64xbf16>, vector<64x128xbf16>, vector<8x128xf32> -> vector<8x128xf32>
    %c0_102 = arith.constant 0 : index
    %c0_103 = arith.constant 0 : index
    %164 = vector.load %arg9[%c0_102, %c0_103] : memref<1x128xf32, #tpu.memory_space<vmem>>, vector<1x128xf32>
    %165 = vector.broadcast %164 : vector<1x128xf32> to vector<8x128xf32>
    %166 = arith.addf %163, %165 : vector<8x128xf32>
    %c0_104 = arith.constant 0 : index
    %c0_105 = arith.constant 0 : index
    %167 = vector.load %arg10[%c0_104, %c0_105] : memref<8x128xf32, #tpu.memory_space<vmem>>, vector<8x128xf32>
    tpu.vector_store %arg10[%c0_104, %c0_105], %166 {strides = array<i32>} : memref<8x128xf32, #tpu.memory_space<vmem>>, vector<8x128xf32>,
    return
  }
  func.func @transform_0(%arg0: i32) -> (i32, i32, i32) {
    %c0_i32 = arith.constant 0 : i32
    %c0_i32_0 = arith.constant 0 : i32
    %c0_i32_1 = arith.constant 0 : i32
    return %arg0, %c0_i32, %c0_i32_0 : i32, i32, i32
  }
  func.func @transform_1(%arg0: i32) -> (i32, i32) {
    %c0_i32 = arith.constant 0 : i32
    %c0_i32_0 = arith.constant 0 : i32
    %c0_i32_1 = arith.constant 0 : i32
    return %c0_i32, %c0_i32_0 : i32, i32
  }
  func.func @transform_2(%arg0: i32) -> (i32, i32) {
    %c0_i32 = arith.constant 0 : i32
    %c0_i32_0 = arith.constant 0 : i32
    %c0_i32_1 = arith.constant 0 : i32
    return %c0_i32, %c0_i32_0 : i32, i32
  }
  func.func @transform_3(%arg0: i32) -> (i32, i32, i32) {
    %c0_i32 = arith.constant 0 : i32
    %c0_i32_0 = arith.constant 0 : i32
    %c0_i32_1 = arith.constant 0 : i32
    %c0_i32_2 = arith.constant 0 : i32
    return %c0_i32, %c0_i32_0, %c0_i32_1 : i32, i32, i32
  }
  func.func @transform_4(%arg0: i32) -> (i32, i32) {
    %c0_i32 = arith.constant 0 : i32
    %c0_i32_0 = arith.constant 0 : i32
    %c0_i32_1 = arith.constant 0 : i32
    return %c0_i32, %c0_i32_0 : i32, i32
  }
  func.func @transform_5(%arg0: i32) -> (i32, i32, i32) {
    %c0_i32 = arith.constant 0 : i32
    %c0_i32_0 = arith.constant 0 : i32
    %c0_i32_1 = arith.constant 0 : i32
    %c0_i32_2 = arith.constant 0 : i32
    return %c0_i32, %c0_i32_0, %c0_i32_1 : i32, i32, i32
  }
  func.func @transform_6(%arg0: i32) -> (i32, i32) {
    %c0_i32 = arith.constant 0 : i32
    %c0_i32_0 = arith.constant 0 : i32
    %c0_i32_1 = arith.constant 0 : i32
    return %c0_i32, %c0_i32_0 : i32, i32
  }
  func.func @transform_7(%arg0: i32) -> (i32, i32) {
    %c0_i32 = arith.constant 0 : i32
    %c0_i32_0 = arith.constant 0 : i32
    %c0_i32_1 = arith.constant 0 : i32
    return %c0_i32, %c0_i32_0 : i32, i32
  }
  func.func @transform_8(%arg0: i32) -> (i32, i32) {
    %c0_i32 = arith.constant 0 : i32
    %c0_i32_0 = arith.constant 0 : i32
    %c0_i32_1 = arith.constant 0 : i32
    return %c0_i32, %c0_i32_0 : i32, i32
  }
  func.func @transform_9(%arg0: i32) -> (i32, i32) {
    %c0_i32 = arith.constant 0 : i32
    %c0_i32_0 = arith.constant 0 : i32
    return %arg0, %c0_i32 : i32, i32
  }
}

</mosaic_0001>

<llo_original>
// kernel: shallow_cnn_forward.1
$region0: #{shallow_cnn_forward.1}
  #allocation0 [shape = 'u32[]', space=smem, size = 0x4, offset = 0x4, fixed_abs, tag = 'smem constant byte address 0x4 - core index']
  #allocation1 [shape = 'u32[72,128]{1,0:T(1,128)}', space=vmem, size = 0x9000, scoped, tag = 'internal scratch']
  %s0 = inlined_call_operand.vmem [shape: bf16[1,1152,37], index: 0, kind: input, shape index: {}]
  %s1 = inlined_call_operand.vmem [shape: bf16[37,64], index: 1, kind: input, shape index: {}]
  %s2 = inlined_call_operand.vmem [shape: f32[1,64], index: 2, kind: input, shape index: {}]
  %s3 = inlined_call_operand.vmem [shape: bf16[9,64,128], index: 3, kind: input, shape index: {}]
  %s4 = inlined_call_operand.vmem [shape: f32[1,128], index: 4, kind: input, shape index: {}]
  %s5 = inlined_call_operand.vmem [shape: bf16[16,128,64], index: 5, kind: input, shape index: {}]
  %s6 = inlined_call_operand.vmem [shape: f32[1,64], index: 6, kind: input, shape index: {}]
  %s7 = inlined_call_operand.vmem [shape: bf16[64,128], index: 7, kind: input, shape index: {}]
  %s8 = inlined_call_operand.vmem [shape: f32[1,128], index: 8, kind: input, shape index: {}]
  %s9 = inlined_call_operand.vmem [shape: f32[8,128], index: 9, kind: output, shape index: {}]
  %s10 = sld [smem:[#allocation0]]
  $region46: #{shallow_cnn_forward.1} parent=0
    _
  %s12 = ssub.s32 1, %s10
  %s13 = scalar_select 0, %s12, %s10
  // Predicated region
  $region2: #{shallow_cnn_forward.1} parent=0 // pred_check
    _
  $region3: #{shallow_cnn_forward.1} parent=0 // pred_check_branch
    %15 = sbr.rel (0) target = $region5
  $region4: #{shallow_cnn_forward.1} parent=0 // pred_region
    _
  $region5: #{shallow_cnn_forward.1} parent=0 // pred_fallthru
    _
  // Predicated region
  $region6: #{shallow_cnn_forward.1} parent=0 // pred_check
    _
  $region7: #{shallow_cnn_forward.1} parent=0 // pred_check_branch
    %17 = sbr.rel (0) target = $region9
  $region8: #{shallow_cnn_forward.1} parent=0 // pred_region
    _
  $region9: #{shallow_cnn_forward.1} parent=0 // pred_fallthru
    _
  // Predicated region
  $region10: #{shallow_cnn_forward.1} parent=0 // pred_check
    _
  $region11: #{shallow_cnn_forward.1} parent=0 // pred_check_branch
    %19 = sbr.rel (0) target = $region13
  $region12: #{shallow_cnn_forward.1} parent=0 // pred_region
    _
  $region13: #{shallow_cnn_forward.1} parent=0 // pred_fallthru
    _
  // Predicated region
  $region14: #{shallow_cnn_forward.1} parent=0 // pred_check
    _
  $region15: #{shallow_cnn_forward.1} parent=0 // pred_check_branch
    %21 = sbr.rel (0) target = $region17
  $region16: #{shallow_cnn_forward.1} parent=0 // pred_region
    _
  $region17: #{shallow_cnn_forward.1} parent=0 // pred_fallthru
    _
  // Predicated region
  $region18: #{shallow_cnn_forward.1} parent=0 // pred_check
    _
  $region19: #{shallow_cnn_forward.1} parent=0 // pred_check_branch
    %23 = sbr.rel (0) target = $region21
  $region20: #{shallow_cnn_forward.1} parent=0 // pred_region
    _
  $region21: #{shallow_cnn_forward.1} parent=0 // pred_fallthru
    _
  // Predicated region
  $region22: #{shallow_cnn_forward.1} parent=0 // pred_check
    _
  $region23: #{shallow_cnn_forward.1} parent=0 // pred_check_branch
    %25 = sbr.rel (0) target = $region25
  $region24: #{shallow_cnn_forward.1} parent=0 // pred_region
    _
  $region25: #{shallow_cnn_forward.1} parent=0 // pred_fallthru
    _
  // Predicated region
  $region26: #{shallow_cnn_forward.1} parent=0 // pred_check
    _
  $region27: #{shallow_cnn_forward.1} parent=0 // pred_check_branch
    %27 = sbr.rel (0) target = $region29
  $region28: #{shallow_cnn_forward.1} parent=0 // pred_region
    _
  $region29: #{shallow_cnn_forward.1} parent=0 // pred_fallthru
    _
  // Predicated region
  $region30: #{shallow_cnn_forward.1} parent=0 // pred_check
    _
  $region31: #{shallow_cnn_forward.1} parent=0 // pred_check_branch
    %29 = sbr.rel (0) target = $region33
  $region32: #{shallow_cnn_forward.1} parent=0 // pred_region
    _
  $region33: #{shallow_cnn_forward.1} parent=0 // pred_fallthru
    _
  // Predicated region
  $region34: #{shallow_cnn_forward.1} parent=0 // pred_check
    _
  $region35: #{shallow_cnn_forward.1} parent=0 // pred_check_branch
    %31 = sbr.rel (0) target = $region37
  $region36: #{shallow_cnn_forward.1} parent=0 // pred_region
    _
  $region37: #{shallow_cnn_forward.1} parent=0 // pred_fallthru
    _
  %v33 = vld [vmem:[%s0] sm:$0xf]
  %v34 = vld [vmem:[%s0 + $0x4] sm:$0xf]
  %v35 = vld [vmem:[%s0 + $0x8] sm:$0xf]
  %v36 = vld [vmem:[%s0 + $0xc] sm:$0xf]
  %v37 = vld [vmem:[%s0 + $0x10] sm:$0xf]
  %v38 = vld [vmem:[%s0 + $0x14] sm:$0xf]
  %v39 = vld [vmem:[%s0 + $0x18] sm:$0xf]
  %v40 = vld [vmem:[%s0 + $0x1c] sm:$0xf]
  %v41 = vld [vmem:[%s0 + $0x20] sm:$0xf]
  %v42 = vld [vmem:[%s0 + $0x24] sm:$0xf]
  %v43 = vld [vmem:[%s0 + $0x28] sm:$0xf]
  %v44 = vld [vmem:[%s0 + $0x2c] sm:$0xf]
  %v45 = vld [vmem:[%s0 + $0x30] sm:$0xf]
  %v46 = vld [vmem:[%s0 + $0x34] sm:$0xf]
  %v47 = vld [vmem:[%s0 + $0x38] sm:$0xf]
  %v48 = vld [vmem:[%s0 + $0x3c] sm:$0xf]
  %v49 = vld [vmem:[%s0 + $0x40] sm:$0xf]
  %v50 = vld [vmem:[%s0 + $0x44] sm:$0xf]
  %v51 = vld [vmem:[%s0 + $0x48] sm:$0xf]
  %v52 = vld [vmem:[%s0 + $0x4c] sm:$0xf]
  %v53 = vld [vmem:[%s0 + $0x50] sm:$0xf]
  %v54 = vld [vmem:[%s0 + $0x54] sm:$0xf]
  %v55 = vld [vmem:[%s0 + $0x58] sm:$0xf]
  %v56 = vld [vmem:[%s0 + $0x5c] sm:$0xf]
  %v57 = vld [vmem:[%s0 + $0x60] sm:$0xf]
  %v58 = vld [vmem:[%s0 + $0x64] sm:$0xf]
  %v59 = vld [vmem:[%s0 + $0x68] sm:$0xf]
  %v60 = vld [vmem:[%s0 + $0x6c] sm:$0xf]
  %v61 = vld [vmem:[%s0 + $0x70] sm:$0xf]
  %v62 = vld [vmem:[%s0 + $0x74] sm:$0xf]
  %v63 = vld [vmem:[%s0 + $0x78] sm:$0xf]
  %v64 = vld [vmem:[%s0 + $0x7c] sm:$0xf]
  %v65 = vld [vmem:[%s0 + $0x80] sm:$0xf]
  %v66 = vld [vmem:[%s0 + $0x84] sm:$0xf]
  %v67 = vld [vmem:[%s0 + $0x88] sm:$0xf]
  %v68 = vld [vmem:[%s0 + $0x8c] sm:$0xf]
  %v69 = vld [vmem:[%s0 + $0x90] sm:$0xf]
  %v70 = vld [vmem:[%s0 + $0x94] sm:$0xf]
  %v71 = vld [vmem:[%s0 + $0x98] sm:$0xf]
  %v72 = vld [vmem:[%s0 + $0x9c] sm:$0xf]
  %v73 = vld [vmem:[%s0 + $0xa0] sm:$0xf]
  %v74 = vld [vmem:[%s0 + $0xa4] sm:$0xf]
  %v75 = vld [vmem:[%s0 + $0xa8] sm:$0xf]
  %v76 = vld [vmem:[%s0 + $0xac] sm:$0xf]
  %v77 = vld [vmem:[%s0 + $0xb0] sm:$0xf]
  %v78 = vld [vmem:[%s0 + $0xb4] sm:$0xf]
  %v79 = vld [vmem:[%s0 + $0xb8] sm:$0xf]
  %v80 = vld [vmem:[%s0 + $0xbc] sm:$0xf]
  %v81 = vld [vmem:[%s0 + $0xc0] sm:$0xf]
  %v82 = vld [vmem:[%s0 + $0xc4] sm:$0xf]
  %v83 = vld [vmem:[%s0 + $0xc8] sm:$0xf]
  %v84 = vld [vmem:[%s0 + $0xcc] sm:$0xf]
  %v85 = vld [vmem:[%s0 + $0xd0] sm:$0xf]
  %v86 = vld [vmem:[%s0 + $0xd4] sm:$0xf]
  %v87 = vld [vmem:[%s0 + $0xd8] sm:$0xf]
  %v88 = vld [vmem:[%s0 + $0xdc] sm:$0xf]
  %v89 = vld [vmem:[%s0 + $0xe0] sm:$0xf]
  %v90 = vld [vmem:[%s0 + $0xe4] sm:$0xf]
  %v91 = vld [vmem:[%s0 + $0xe8] sm:$0xf]
  %v92 = vld [vmem:[%s0 + $0xec] sm:$0xf]
  %v93 = vld [vmem:[%s0 + $0xf0] sm:$0xf]
  %v94 = vld [vmem:[%s0 + $0xf4] sm:$0xf]
  %v95 = vld [vmem:[%s0 + $0xf8] sm:$0xf]
  %v96 = vld [vmem:[%s0 + $0xfc] sm:$0xf]
  %v97 = vld [vmem:[%s0 + $0x100] sm:$0xf]
  %v98 = vld [vmem:[%s0 + $0x104] sm:$0xf]
  %v99 = vld [vmem:[%s0 + $0x108] sm:$0xf]
  %v100 = vld [vmem:[%s0 + $0x10c] sm:$0xf]
  %v101 = vld [vmem:[%s0 + $0x110] sm:$0xf]
  %v102 = vld [vmem:[%s0 + $0x114] sm:$0xf]
  %v103 = vld [vmem:[%s0 + $0x118] sm:$0xf]
  %v104 = vld [vmem:[%s0 + $0x11c] sm:$0xf]
  %v105 = vld [vmem:[%s0 + $0x120] sm:$0xf]
  %v106 = vld [vmem:[%s0 + $0x124] sm:$0xf]
  %v107 = vld [vmem:[%s0 + $0x128] sm:$0xf]
  %v108 = vld [vmem:[%s0 + $0x12c] sm:$0xf]
  %v109 = vld [vmem:[%s0 + $0x130] sm:$0xf]
  %v110 = vld [vmem:[%s0 + $0x134] sm:$0xf]
  %v111 = vld [vmem:[%s0 + $0x138] sm:$0xf]
  %v112 = vld [vmem:[%s0 + $0x13c] sm:$0xf]
  %v113 = vld [vmem:[%s0 + $0x140] sm:$0xf]
  %v114 = vld [vmem:[%s0 + $0x144] sm:$0xf]
  %v115 = vld [vmem:[%s0 + $0x148] sm:$0xf]
  %v116 = vld [vmem:[%s0 + $0x14c] sm:$0xf]
  %v117 = vld [vmem:[%s0 + $0x150] sm:$0xf]
  %v118 = vld [vmem:[%s0 + $0x154] sm:$0xf]
  %v119 = vld [vmem:[%s0 + $0x158] sm:$0xf]
  %v120 = vld [vmem:[%s0 + $0x15c] sm:$0xf]
  %v121 = vld [vmem:[%s0 + $0x160] sm:$0xf]
  %v122 = vld [vmem:[%s0 + $0x164] sm:$0xf]
  %v123 = vld [vmem:[%s0 + $0x168] sm:$0xf]
  %v124 = vld [vmem:[%s0 + $0x16c] sm:$0xf]
  %v125 = vld [vmem:[%s0 + $0x170] sm:$0xf]
  %v126 = vld [vmem:[%s0 + $0x174] sm:$0xf]
  %v127 = vld [vmem:[%s0 + $0x178] sm:$0xf]
  %v128 = vld [vmem:[%s0 + $0x17c] sm:$0xf]
  %v129 = vld [vmem:[%s0 + $0x180] sm:$0xf]
  %v130 = vld [vmem:[%s0 + $0x184] sm:$0xf]
  %v131 = vld [vmem:[%s0 + $0x188] sm:$0xf]
  %v132 = vld [vmem:[%s0 + $0x18c] sm:$0xf]
  %v133 = vld [vmem:[%s0 + $0x190] sm:$0xf]
  %v134 = vld [vmem:[%s0 + $0x194] sm:$0xf]
  %v135 = vld [vmem:[%s0 + $0x198] sm:$0xf]
  %v136 = vld [vmem:[%s0 + $0x19c] sm:$0xf]
  %v137 = vld [vmem:[%s0 + $0x1a0] sm:$0xf]
  %v138 = vld [vmem:[%s0 + $0x1a4] sm:$0xf]
  %v139 = vld [vmem:[%s0 + $0x1a8] sm:$0xf]
  %v140 = vld [vmem:[%s0 + $0x1ac] sm:$0xf]
  %v141 = vld [vmem:[%s0 + $0x1b0] sm:$0xf]
  %v142 = vld [vmem:[%s0 + $0x1b4] sm:$0xf]
  %v143 = vld [vmem:[%s0 + $0x1b8] sm:$0xf]
  %v144 = vld [vmem:[%s0 + $0x1bc] sm:$0xf]
  %v145 = vld [vmem:[%s0 + $0x1c0] sm:$0xf]
  %v146 = vld [vmem:[%s0 + $0x1c4] sm:$0xf]
  %v147 = vld [vmem:[%s0 + $0x1c8] sm:$0xf]
  %v148 = vld [vmem:[%s0 + $0x1cc] sm:$0xf]
  %v149 = vld [vmem:[%s0 + $0x1d0] sm:$0xf]
  %v150 = vld [vmem:[%s0 + $0x1d4] sm:$0xf]
  %v151 = vld [vmem:[%s0 + $0x1d8] sm:$0xf]
  %v152 = vld [vmem:[%s0 + $0x1dc] sm:$0xf]
  %v153 = vld [vmem:[%s0 + $0x1e0] sm:$0xf]
  %v154 = vld [vmem:[%s0 + $0x1e4] sm:$0xf]
  %v155 = vld [vmem:[%s0 + $0x1e8] sm:$0xf]
  %v156 = vld [vmem:[%s0 + $0x1ec] sm:$0xf]
  %v157 = vld [vmem:[%s0 + $0x1f0] sm:$0xf]
  %v158 = vld [vmem:[%s0 + $0x1f4] sm:$0xf]
  %v159 = vld [vmem:[%s0 + $0x1f8] sm:$0xf]
  %v160 = vld [vmem:[%s0 + $0x1fc] sm:$0xf]
  %v161 = vld [vmem:[%s0 + $0x200] sm:$0xf]
  %v162 = vld [vmem:[%s0 + $0x204] sm:$0xf]
  %v163 = vld [vmem:[%s0 + $0x208] sm:$0xf]
  %v164 = vld [vmem:[%s0 + $0x20c] sm:$0xf]
  %v165 = vld [vmem:[%s0 + $0x210] sm:$0xf]
  %v166 = vld [vmem:[%s0 + $0x214] sm:$0xf]
  %v167 = vld [vmem:[%s0 + $0x218] sm:$0xf]
  %v168 = vld [vmem:[%s0 + $0x21c] sm:$0xf]
  %v169 = vld [vmem:[%s0 + $0x220] sm:$0xf]
  %v170 = vld [vmem:[%s0 + $0x224] sm:$0xf]
  %v171 = vld [vmem:[%s0 + $0x228] sm:$0xf]
  %v172 = vld [vmem:[%s0 + $0x22c] sm:$0xf]
  %v173 = vld [vmem:[%s0 + $0x230] sm:$0xf]
  %v174 = vld [vmem:[%s0 + $0x234] sm:$0xf]
  %v175 = vld [vmem:[%s0 + $0x238] sm:$0xf]
  %v176 = vld [vmem:[%s0 + $0x23c] sm:$0xf]
  %v177 = vld [vmem:[%s1] sm:$0xf]
  %v178 = vld [vmem:[%s1 + $0x4] sm:$0xf]
  %v179 = vld [vmem:[%s1 + $0x8] sm:$0xf]
  %v180 = vld [vmem:[%s1 + $0xc] sm:$0xf]
  %v181 = vld [vmem:[%s1 + $0x10] sm:$0x7]
  %v182 = vld [vmem:[%s2] sm:$0x1]
  %v184 = vperm.slane %v182, 0
  %v330 = vunpack.c.l.b16 %v33
  %v331 = vunpack.c.l.b16 %v34
  %v332 = vunpack.c.l.b16 %v35
  %v333 = vunpack.c.l.b16 %v36
  %v334 = vunpack.c.l.b16 %v37
  %v335 = vunpack.c.l.b16 %v38
  %v336 = vunpack.c.l.b16 %v39
  %v337 = vunpack.c.l.b16 %v40
  %v338 = vunpack.c.l.b16 %v41
  %v339 = vunpack.c.l.b16 %v42
  %v340 = vunpack.c.l.b16 %v43
  %v341 = vunpack.c.l.b16 %v44
  %v342 = vunpack.c.l.b16 %v45
  %v343 = vunpack.c.l.b16 %v46
  %v344 = vunpack.c.l.b16 %v47
  %v345 = vunpack.c.l.b16 %v48
  %v346 = vunpack.c.l.b16 %v49
  %v347 = vunpack.c.l.b16 %v50
  %v348 = vunpack.c.l.b16 %v51
  %v349 = vunpack.c.l.b16 %v52
  %v350 = vunpack.c.l.b16 %v53
  %v351 = vunpack.c.l.b16 %v54
  %v352 = vunpack.c.l.b16 %v55
  %v353 = vunpack.c.l.b16 %v56
  %v354 = vunpack.c.l.b16 %v57
  %v355 = vunpack.c.l.b16 %v58
  %v356 = vunpack.c.l.b16 %v59
  %v357 = vunpack.c.l.b16 %v60
  %v358 = vunpack.c.l.b16 %v61
  %v359 = vunpack.c.l.b16 %v62
  %v360 = vunpack.c.l.b16 %v63
  %v361 = vunpack.c.l.b16 %v64
  %v362 = vunpack.c.l.b16 %v65
  %v363 = vunpack.c.l.b16 %v66
  %v364 = vunpack.c.l.b16 %v67
  %v365 = vunpack.c.l.b16 %v68
  %v366 = vunpack.c.l.b16 %v69
  %v367 = vunpack.c.l.b16 %v70
  %v368 = vunpack.c.l.b16 %v71
  %v369 = vunpack.c.l.b16 %v72
  %v370 = vunpack.c.l.b16 %v73
  %v371 = vunpack.c.l.b16 %v74
  %v372 = vunpack.c.l.b16 %v75
  %v373 = vunpack.c.l.b16 %v76
  %v374 = vunpack.c.l.b16 %v77
  %v375 = vunpack.c.l.b16 %v78
  %v376 = vunpack.c.l.b16 %v79
  %v377 = vunpack.c.l.b16 %v80
  %v378 = vunpack.c.l.b16 %v81
  %v379 = vunpack.c.l.b16 %v82
  %v380 = vunpack.c.l.b16 %v83
  %v381 = vunpack.c.l.b16 %v84
  %v382 = vunpack.c.l.b16 %v85
  %v383 = vunpack.c.l.b16 %v86
  %v384 = vunpack.c.l.b16 %v87
  %v385 = vunpack.c.l.b16 %v88
  %v386 = vunpack.c.l.b16 %v89
  %v387 = vunpack.c.l.b16 %v90
  %v388 = vunpack.c.l.b16 %v91
  %v389 = vunpack.c.l.b16 %v92
  %v390 = vunpack.c.l.b16 %v93
  %v391 = vunpack.c.l.b16 %v94
  %v392 = vunpack.c.l.b16 %v95
  %v393 = vunpack.c.l.b16 %v96
  %v394 = vunpack.c.l.b16 %v97
  %v395 = vunpack.c.l.b16 %v98
  %v396 = vunpack.c.l.b16 %v99
  %v397 = vunpack.c.l.b16 %v100
  %v398 = vunpack.c.l.b16 %v101
  %v399 = vunpack.c.l.b16 %v102
  %v400 = vunpack.c.l.b16 %v103
  %v401 = vunpack.c.l.b16 %v104
  %v402 = vunpack.c.l.b16 %v105
  %v403 = vunpack.c.l.b16 %v106
  %v404 = vunpack.c.l.b16 %v107
  %v405 = vunpack.c.l.b16 %v108
  %v406 = vunpack.c.l.b16 %v109
  %v407 = vunpack.c.l.b16 %v110
  %v408 = vunpack.c.l.b16 %v111
  %v409 = vunpack.c.l.b16 %v112
  %v410 = vunpack.c.l.b16 %v113
  %v411 = vunpack.c.l.b16 %v114
  %v412 = vunpack.c.l.b16 %v115
  %v413 = vunpack.c.l.b16 %v116
  %v414 = vunpack.c.l.b16 %v117
  %v415 = vunpack.c.l.b16 %v118
  %v416 = vunpack.c.l.b16 %v119
  %v417 = vunpack.c.l.b16 %v120
  %v418 = vunpack.c.l.b16 %v121
  %v419 = vunpack.c.l.b16 %v122
  %v420 = vunpack.c.l.b16 %v123
  %v421 = vunpack.c.l.b16 %v124
  %v422 = vunpack.c.l.b16 %v125
  %v423 = vunpack.c.l.b16 %v126
  %v424 = vunpack.c.l.b16 %v127
  %v425 = vunpack.c.l.b16 %v128
  %v426 = vunpack.c.l.b16 %v129
  %v427 = vunpack.c.l.b16 %v130
  %v428 = vunpack.c.l.b16 %v131
  %v429 = vunpack.c.l.b16 %v132
  %v430 = vunpack.c.l.b16 %v133
  %v431 = vunpack.c.l.b16 %v134
  %v432 = vunpack.c.l.b16 %v135
  %v433 = vunpack.c.l.b16 %v136
  %v434 = vunpack.c.l.b16 %v137
  %v435 = vunpack.c.l.b16 %v138
  %v436 = vunpack.c.l.b16 %v139
  %v437 = vunpack.c.l.b16 %v140
  %v438 = vunpack.c.l.b16 %v141
  %v439 = vunpack.c.l.b16 %v142
  %v440 = vunpack.c.l.b16 %v143
  %v441 = vunpack.c.l.b16 %v144
  %v442 = vunpack.c.l.b16 %v145
  %v443 = vunpack.c.l.b16 %v146
  %v444 = vunpack.c.l.b16 %v147
  %v445 = vunpack.c.l.b16 %v148
  %v446 = vunpack.c.l.b16 %v149
  %v447 = vunpack.c.l.b16 %v150
  %v448 = vunpack.c.l.b16 %v151
  %v449 = vunpack.c.l.b16 %v152
  %v450 = vunpack.c.l.b16 %v153
  %v451 = vunpack.c.l.b16 %v154
  %v452 = vunpack.c.l.b16 %v155
  %v453 = vunpack.c.l.b16 %v156
  %v454 = vunpack.c.l.b16 %v157
  %v455 = vunpack.c.l.b16 %v158
  %v456 = vunpack.c.l.b16 %v159
  %v457 = vunpack.c.l.b16 %v160
  %v458 = vunpack.c.l.b16 %v161
  %v459 = vunpack.c.l.b16 %v162
  %v460 = vunpack.c.l.b16 %v163
  %v461 = vunpack.c.l.b16 %v164
  %v462 = vunpack.c.l.b16 %v165
  %v463 = vunpack.c.l.b16 %v166
  %v464 = vunpack.c.l.b16 %v167
  %v465 = vunpack.c.l.b16 %v168
  %v466 = vunpack.c.l.b16 %v169
  %v467 = vunpack.c.l.b16 %v170
  %v468 = vunpack.c.l.b16 %v171
  %v469 = vunpack.c.l.b16 %v172
  %v470 = vunpack.c.l.b16 %v173
  %v471 = vunpack.c.l.b16 %v174
  %v472 = vunpack.c.l.b16 %v175
  %v473 = vunpack.c.l.b16 %v176
  %v474 = vpack.c.b16 %v331, %v330
  %v475 = vpack.c.b16 %v333, %v332
  %v476 = vpack.c.b16 %v335, %v334
  %v477 = vpack.c.b16 %v337, %v336
  %v478 = vpack.c.b16 %v339, %v338
  %v479 = vpack.c.b16 %v341, %v340
  %v480 = vpack.c.b16 %v343, %v342
  %v481 = vpack.c.b16 %v345, %v344
  %v482 = vpack.c.b16 %v347, %v346
  %v483 = vpack.c.b16 %v349, %v348
  %v484 = vpack.c.b16 %v351, %v350
  %v485 = vpack.c.b16 %v353, %v352
  %v486 = vpack.c.b16 %v355, %v354
  %v487 = vpack.c.b16 %v357, %v356
  %v488 = vpack.c.b16 %v359, %v358
  %v489 = vpack.c.b16 %v361, %v360
  %v490 = vpack.c.b16 %v363, %v362
  %v491 = vpack.c.b16 %v365, %v364
  %v492 = vpack.c.b16 %v367, %v366
  %v493 = vpack.c.b16 %v369, %v368
  %v494 = vpack.c.b16 %v371, %v370
  %v495 = vpack.c.b16 %v373, %v372
  %v496 = vpack.c.b16 %v375, %v374
  %v497 = vpack.c.b16 %v377, %v376
  %v498 = vpack.c.b16 %v379, %v378
  %v499 = vpack.c.b16 %v381, %v380
  %v500 = vpack.c.b16 %v383, %v382
  %v501 = vpack.c.b16 %v385, %v384
  %v502 = vpack.c.b16 %v387, %v386
  %v503 = vpack.c.b16 %v389, %v388
  %v504 = vpack.c.b16 %v391, %v390
  %v505 = vpack.c.b16 %v393, %v392
  %v506 = vpack.c.b16 %v395, %v394
  %v507 = vpack.c.b16 %v397, %v396
  %v508 = vpack.c.b16 %v399, %v398
  %v509 = vpack.c.b16 %v401, %v400
  %v510 = vpack.c.b16 %v403, %v402
  %v511 = vpack.c.b16 %v405, %v404
  %v512 = vpack.c.b16 %v407, %v406
  %v513 = vpack.c.b16 %v409, %v408
  %v514 = vpack.c.b16 %v411, %v410
  %v515 = vpack.c.b16 %v413, %v412
  %v516 = vpack.c.b16 %v415, %v414
  %v517 = vpack.c.b16 %v417, %v416
  %v518 = vpack.c.b16 %v419, %v418
  %v519 = vpack.c.b16 %v421, %v420
  %v520 = vpack.c.b16 %v423, %v422
  %v521 = vpack.c.b16 %v425, %v424
  %v522 = vpack.c.b16 %v427, %v426
  %v523 = vpack.c.b16 %v429, %v428
  %v524 = vpack.c.b16 %v431, %v430
  %v525 = vpack.c.b16 %v433, %v432
  %v526 = vpack.c.b16 %v435, %v434
  %v527 = vpack.c.b16 %v437, %v436
  %v528 = vpack.c.b16 %v439, %v438
  %v529 = vpack.c.b16 %v441, %v440
  %v530 = vpack.c.b16 %v443, %v442
  %v531 = vpack.c.b16 %v445, %v444
  %v532 = vpack.c.b16 %v447, %v446
  %v533 = vpack.c.b16 %v449, %v448
  %v534 = vpack.c.b16 %v451, %v450
  %v535 = vpack.c.b16 %v453, %v452
  %v536 = vpack.c.b16 %v455, %v454
  %v537 = vpack.c.b16 %v457, %v456
  %v538 = vpack.c.b16 %v459, %v458
  %v539 = vpack.c.b16 %v461, %v460
  %v540 = vpack.c.b16 %v463, %v462
  %v541 = vpack.c.b16 %v465, %v464
  %v542 = vpack.c.b16 %v467, %v466
  %v543 = vpack.c.b16 %v469, %v468
  %v544 = vpack.c.b16 %v471, %v470
  %v545 = vpack.c.b16 %v473, %v472
  %v551 = vunpack.c.l.b16 %v177
  %v552 = vunpack.c.l.b16 %v178
  %v553 = vunpack.c.l.b16 %v179
  %v554 = vunpack.c.l.b16 %v180
  %v555 = vunpack.c.l.b16 %v181
  %v556 = vpack.c.b16 %v552, %v551
  %v557 = vpack.c.b16 %v554, %v553
  %v558 = vpack.c.b16 %v555, %v555
  %vm561 = vcmask 302080
  %v563 = vsel %vm561, %v474, 0
  %v566 = vsel %vm561, %v475, 0
  %v569 = vsel %vm561, %v476, 0
  %v572 = vsel %vm561, %v477, 0
  %v575 = vsel %vm561, %v478, 0
  %v578 = vsel %vm561, %v479, 0
  %v581 = vsel %vm561, %v480, 0
  %v584 = vsel %vm561, %v481, 0
  %v587 = vsel %vm561, %v482, 0
  %v590 = vsel %vm561, %v483, 0
  %v593 = vsel %vm561, %v484, 0
  %v596 = vsel %vm561, %v485, 0
  %v599 = vsel %vm561, %v486, 0
  %v602 = vsel %vm561, %v487, 0
  %v605 = vsel %vm561, %v488, 0
  %v608 = vsel %vm561, %v489, 0
  %v611 = vsel %vm561, %v490, 0
  %v614 = vsel %vm561, %v491, 0
  %v617 = vsel %vm561, %v492, 0
  %v620 = vsel %vm561, %v493, 0
  %v623 = vsel %vm561, %v494, 0
  %v626 = vsel %vm561, %v495, 0
  %v629 = vsel %vm561, %v496, 0
  %v632 = vsel %vm561, %v497, 0
  %v635 = vsel %vm561, %v498, 0
  %v638 = vsel %vm561, %v499, 0
  %v641 = vsel %vm561, %v500, 0
  %v644 = vsel %vm561, %v501, 0
  %v647 = vsel %vm561, %v502, 0
  %v650 = vsel %vm561, %v503, 0
  %v653 = vsel %vm561, %v504, 0
  %v656 = vsel %vm561, %v505, 0
  %v659 = vsel %vm561, %v506, 0
  %v662 = vsel %vm561, %v507, 0
  %v665 = vsel %vm561, %v508, 0
  %v668 = vsel %vm561, %v509, 0
  %v671 = vsel %vm561, %v510, 0
  %v674 = vsel %vm561, %v511, 0
  %v677 = vsel %vm561, %v512, 0
  %v680 = vsel %vm561, %v513, 0
  %v683 = vsel %vm561, %v514, 0
  %v686 = vsel %vm561, %v515, 0
  %v689 = vsel %vm561, %v516, 0
  %v692 = vsel %vm561, %v517, 0
  %v695 = vsel %vm561, %v518, 0
  %v698 = vsel %vm561, %v519, 0
  %v701 = vsel %vm561, %v520, 0
  %v704 = vsel %vm561, %v521, 0
  %v707 = vsel %vm561, %v522, 0
  %v710 = vsel %vm561, %v523, 0
  %v713 = vsel %vm561, %v524, 0
  %v716 = vsel %vm561, %v525, 0
  %v719 = vsel %vm561, %v526, 0
  %v722 = vsel %vm561, %v527, 0
  %v725 = vsel %vm561, %v528, 0
  %v728 = vsel %vm561, %v529, 0
  %v731 = vsel %vm561, %v530, 0
  %v734 = vsel %vm561, %v531, 0
  %v737 = vsel %vm561, %v532, 0
  %v740 = vsel %vm561, %v533, 0
  %v743 = vsel %vm561, %v534, 0
  %v746 = vsel %vm561, %v535, 0
  %v749 = vsel %vm561, %v536, 0
  %v752 = vsel %vm561, %v537, 0
  %v755 = vsel %vm561, %v538, 0
  %v758 = vsel %vm561, %v539, 0
  %v761 = vsel %vm561, %v540, 0
  %v764 = vsel %vm561, %v541, 0
  %v767 = vsel %vm561, %v542, 0
  %v770 = vsel %vm561, %v543, 0
  %v773 = vsel %vm561, %v544, 0
  %v776 = vsel %vm561, %v545, 0
  %vm778 = vcmask 1041408
  %vm779 = vcmask 1042432
  %v780 = vsel %vm778, 4294967295, 65535
  %v781 = vsel %vm779, %v780, 0
  %v783 = vand.u32 %v558, %v781
  %785 = vmatpush.bf16.msra.mxu0 0
  %786 = vmatpush.bf16.msra.mxu0 0
  %787 = vmatpush.bf16.msra.mxu0 0
  %788 = vmatpush.bf16.msra.mxu0 0
  %789 = vmatpush.bf16.msra.mxu0 0
  %790 = vmatpush.bf16.msra.mxu0 %v783
  %791 = vmatpush.bf16.msra.mxu0 %v557
  %792 = vmatpush.bf16.msra.mxu0 %v556
  %793 = vmatmul.bf16.gmra.mxu0 %v563
  %v794 = vpop.f32.mrf.mxu0
  %v795 = vadd.f32 %v184, %v794
  %v796 = vpop.f32.mrf.mxu0
  %v797 = vadd.f32 %v184, %v796
  %798 = vmatmul.bf16.gmra.mxu0 %v566
  %v799 = vpop.f32.mrf.mxu0
  %v800 = vadd.f32 %v184, %v799
  %v801 = vpop.f32.mrf.mxu0
  %v802 = vadd.f32 %v184, %v801
  %803 = vmatmul.bf16.gmra.mxu0 %v569
  %v804 = vpop.f32.mrf.mxu0
  %v805 = vadd.f32 %v184, %v804
  %v806 = vpop.f32.mrf.mxu0
  %v807 = vadd.f32 %v184, %v806
  %808 = vmatmul.bf16.gmra.mxu0 %v572
  %v809 = vpop.f32.mrf.mxu0
  %v810 = vadd.f32 %v184, %v809
  %v811 = vpop.f32.mrf.mxu0
  %v812 = vadd.f32 %v184, %v811
  %813 = vmatmul.bf16.gmra.mxu0 %v575
  %v814 = vpop.f32.mrf.mxu0
  %v815 = vadd.f32 %v184, %v814
  %v816 = vpop.f32.mrf.mxu0
  %v817 = vadd.f32 %v184, %v816
  %818 = vmatmul.bf16.gmra.mxu0 %v578
  %v819 = vpop.f32.mrf.mxu0
  %v820 = vadd.f32 %v184, %v819
  %v821 = vpop.f32.mrf.mxu0
  %v822 = vadd.f32 %v184, %v821
  %823 = vmatmul.bf16.gmra.mxu0 %v581
  %v824 = vpop.f32.mrf.mxu0
  %v825 = vadd.f32 %v184, %v824
  %v826 = vpop.f32.mrf.mxu0
  %v827 = vadd.f32 %v184, %v826
  %828 = vmatmul.bf16.gmra.mxu0 %v584
  %v829 = vpop.f32.mrf.mxu0
  %v830 = vadd.f32 %v184, %v829
  %v831 = vpop.f32.mrf.mxu0
  %v832 = vadd.f32 %v184, %v831
  %833 = vmatmul.bf16.gmra.mxu0 %v587
  %v834 = vpop.f32.mrf.mxu0
  %v835 = vadd.f32 %v184, %v834
  %v836 = vpop.f32.mrf.mxu0
  %v837 = vadd.f32 %v184, %v836
  %838 = vmatmul.bf16.gmra.mxu0 %v590
  %v839 = vpop.f32.mrf.mxu0
  %v840 = vadd.f32 %v184, %v839
  %v841 = vpop.f32.mrf.mxu0
  %v842 = vadd.f32 %v184, %v841
  %843 = vmatmul.bf16.gmra.mxu0 %v593
  %v844 = vpop.f32.mrf.mxu0
  %v845 = vadd.f32 %v184, %v844
  %v846 = vpop.f32.mrf.mxu0
  %v847 = vadd.f32 %v184, %v846
  %848 = vmatmul.bf16.gmra.mxu0 %v596
  %v849 = vpop.f32.mrf.mxu0
  %v850 = vadd.f32 %v184, %v849
  %v851 = vpop.f32.mrf.mxu0
  %v852 = vadd.f32 %v184, %v851
  %853 = vmatmul.bf16.gmra.mxu0 %v599
  %v854 = vpop.f32.mrf.mxu0
  %v855 = vadd.f32 %v184, %v854
  %v856 = vpop.f32.mrf.mxu0
  %v857 = vadd.f32 %v184, %v856
  %858 = vmatmul.bf16.gmra.mxu0 %v602
  %v859 = vpop.f32.mrf.mxu0
  %v860 = vadd.f32 %v184, %v859
  %v861 = vpop.f32.mrf.mxu0
  %v862 = vadd.f32 %v184, %v861
  %863 = vmatmul.bf16.gmra.mxu0 %v605
  %v864 = vpop.f32.mrf.mxu0
  %v865 = vadd.f32 %v184, %v864
  %v866 = vpop.f32.mrf.mxu0
  %v867 = vadd.f32 %v184, %v866
  %868 = vmatmul.bf16.gmra.mxu0 %v608
  %v869 = vpop.f32.mrf.mxu0
  %v870 = vadd.f32 %v184, %v869
  %v871 = vpop.f32.mrf.mxu0
  %v872 = vadd.f32 %v184, %v871
  %873 = vmatmul.bf16.gmra.mxu0 %v611
  %v874 = vpop.f32.mrf.mxu0
  %v875 = vadd.f32 %v184, %v874
  %v876 = vpop.f32.mrf.mxu0
  %v877 = vadd.f32 %v184, %v876
  %878 = vmatmul.bf16.gmra.mxu0 %v614
  %v879 = vpop.f32.mrf.mxu0
  %v880 = vadd.f32 %v184, %v879
  %v881 = vpop.f32.mrf.mxu0
  %v882 = vadd.f32 %v184, %v881
  %883 = vmatmul.bf16.gmra.mxu0 %v617
  %v884 = vpop.f32.mrf.mxu0
  %v885 = vadd.f32 %v184, %v884
  %v886 = vpop.f32.mrf.mxu0
  %v887 = vadd.f32 %v184, %v886
  %888 = vmatmul.bf16.gmra.mxu0 %v620
  %v889 = vpop.f32.mrf.mxu0
  %v890 = vadd.f32 %v184, %v889
  %v891 = vpop.f32.mrf.mxu0
  %v892 = vadd.f32 %v184, %v891
  %893 = vmatmul.bf16.gmra.mxu0 %v623
  %v894 = vpop.f32.mrf.mxu0
  %v895 = vadd.f32 %v184, %v894
  %v896 = vpop.f32.mrf.mxu0
  %v897 = vadd.f32 %v184, %v896
  %898 = vmatmul.bf16.gmra.mxu0 %v626
  %v899 = vpop.f32.mrf.mxu0
  %v900 = vadd.f32 %v184, %v899
  %v901 = vpop.f32.mrf.mxu0
  %v902 = vadd.f32 %v184, %v901
  %903 = vmatmul.bf16.gmra.mxu0 %v629
  %v904 = vpop.f32.mrf.mxu0
  %v905 = vadd.f32 %v184, %v904
  %v906 = vpop.f32.mrf.mxu0
  %v907 = vadd.f32 %v184, %v906
  %908 = vmatmul.bf16.gmra.mxu0 %v632
  %v909 = vpop.f32.mrf.mxu0
  %v910 = vadd.f32 %v184, %v909
  %v911 = vpop.f32.mrf.mxu0
  %v912 = vadd.f32 %v184, %v911
  %913 = vmatmul.bf16.gmra.mxu0 %v635
  %v914 = vpop.f32.mrf.mxu0
  %v915 = vadd.f32 %v184, %v914
  %v916 = vpop.f32.mrf.mxu0
  %v917 = vadd.f32 %v184, %v916
  %918 = vmatmul.bf16.gmra.mxu0 %v638
  %v919 = vpop.f32.mrf.mxu0
  %v920 = vadd.f32 %v184, %v919
  %v921 = vpop.f32.mrf.mxu0
  %v922 = vadd.f32 %v184, %v921
  %923 = vmatmul.bf16.gmra.mxu0 %v641
  %v924 = vpop.f32.mrf.mxu0
  %v925 = vadd.f32 %v184, %v924
  %v926 = vpop.f32.mrf.mxu0
  %v927 = vadd.f32 %v184, %v926
  %928 = vmatmul.bf16.gmra.mxu0 %v644
  %v929 = vpop.f32.mrf.mxu0
  %v930 = vadd.f32 %v184, %v929
  %v931 = vpop.f32.mrf.mxu0
  %v932 = vadd.f32 %v184, %v931
  %933 = vmatmul.bf16.gmra.mxu0 %v647
  %v934 = vpop.f32.mrf.mxu0
  %v935 = vadd.f32 %v184, %v934
  %v936 = vpop.f32.mrf.mxu0
  %v937 = vadd.f32 %v184, %v936
  %938 = vmatmul.bf16.gmra.mxu0 %v650
  %v939 = vpop.f32.mrf.mxu0
  %v940 = vadd.f32 %v184, %v939
  %v941 = vpop.f32.mrf.mxu0
  %v942 = vadd.f32 %v184, %v941
  %943 = vmatmul.bf16.gmra.mxu0 %v653
  %v944 = vpop.f32.mrf.mxu0
  %v945 = vadd.f32 %v184, %v944
  %v946 = vpop.f32.mrf.mxu0
  %v947 = vadd.f32 %v184, %v946
  %948 = vmatmul.bf16.gmra.mxu0 %v656
  %v949 = vpop.f32.mrf.mxu0
  %v950 = vadd.f32 %v184, %v949
  %v951 = vpop.f32.mrf.mxu0
  %v952 = vadd.f32 %v184, %v951
  %953 = vmatmul.bf16.gmra.mxu0 %v659
  %v954 = vpop.f32.mrf.mxu0
  %v955 = vadd.f32 %v184, %v954
  %v956 = vpop.f32.mrf.mxu0
  %v957 = vadd.f32 %v184, %v956
  %958 = vmatmul.bf16.gmra.mxu0 %v662
  %v959 = vpop.f32.mrf.mxu0
  %v960 = vadd.f32 %v184, %v959
  %v961 = vpop.f32.mrf.mxu0
  %v962 = vadd.f32 %v184, %v961
  %963 = vmatmul.bf16.gmra.mxu0 %v665
  %v964 = vpop.f32.mrf.mxu0
  %v965 = vadd.f32 %v184, %v964
  %v966 = vpop.f32.mrf.mxu0
  %v967 = vadd.f32 %v184, %v966
  %968 = vmatmul.bf16.gmra.mxu0 %v668
  %v969 = vpop.f32.mrf.mxu0
  %v970 = vadd.f32 %v184, %v969
  %v971 = vpop.f32.mrf.mxu0
  %v972 = vadd.f32 %v184, %v971
  %973 = vmatmul.bf16.gmra.mxu0 %v671
  %v974 = vpop.f32.mrf.mxu0
  %v975 = vadd.f32 %v184, %v974
  %v976 = vpop.f32.mrf.mxu0
  %v977 = vadd.f32 %v184, %v976
  %978 = vmatmul.bf16.gmra.mxu0 %v674
  %v979 = vpop.f32.mrf.mxu0
  %v980 = vadd.f32 %v184, %v979
  %v981 = vpop.f32.mrf.mxu0
  %v982 = vadd.f32 %v184, %v981
  %983 = vmatmul.bf16.gmra.mxu0 %v677
  %v984 = vpop.f32.mrf.mxu0
  %v985 = vadd.f32 %v184, %v984
  %v986 = vpop.f32.mrf.mxu0
  %v987 = vadd.f32 %v184, %v986
  %988 = vmatmul.bf16.gmra.mxu0 %v680
  %v989 = vpop.f32.mrf.mxu0
  %v990 = vadd.f32 %v184, %v989
  %v991 = vpop.f32.mrf.mxu0
  %v992 = vadd.f32 %v184, %v991
  %993 = vmatmul.bf16.gmra.mxu0 %v683
  %v994 = vpop.f32.mrf.mxu0
  %v995 = vadd.f32 %v184, %v994
  %v996 = vpop.f32.mrf.mxu0
  %v997 = vadd.f32 %v184, %v996
  %998 = vmatmul.bf16.gmra.mxu0 %v686
  %v999 = vpop.f32.mrf.mxu0
  %v1000 = vadd.f32 %v184, %v999
  %v1001 = vpop.f32.mrf.mxu0
  %v1002 = vadd.f32 %v184, %v1001
  %1003 = vmatmul.bf16.gmra.mxu0 %v689
  %v1004 = vpop.f32.mrf.mxu0
  %v1005 = vadd.f32 %v184, %v1004
  %v1006 = vpop.f32.mrf.mxu0
  %v1007 = vadd.f32 %v184, %v1006
  %1008 = vmatmul.bf16.gmra.mxu0 %v692
  %v1009 = vpop.f32.mrf.mxu0
  %v1010 = vadd.f32 %v184, %v1009
  %v1011 = vpop.f32.mrf.mxu0
  %v1012 = vadd.f32 %v184, %v1011
  %1013 = vmatmul.bf16.gmra.mxu0 %v695
  %v1014 = vpop.f32.mrf.mxu0
  %v1015 = vadd.f32 %v184, %v1014
  %v1016 = vpop.f32.mrf.mxu0
  %v1017 = vadd.f32 %v184, %v1016
  %1018 = vmatmul.bf16.gmra.mxu0 %v698
  %v1019 = vpop.f32.mrf.mxu0
  %v1020 = vadd.f32 %v184, %v1019
  %v1021 = vpop.f32.mrf.mxu0
  %v1022 = vadd.f32 %v184, %v1021
  %1023 = vmatmul.bf16.gmra.mxu0 %v701
  %v1024 = vpop.f32.mrf.mxu0
  %v1025 = vadd.f32 %v184, %v1024
  %v1026 = vpop.f32.mrf.mxu0
  %v1027 = vadd.f32 %v184, %v1026
  %1028 = vmatmul.bf16.gmra.mxu0 %v704
  %v1029 = vpop.f32.mrf.mxu0
  %v1030 = vadd.f32 %v184, %v1029
  %v1031 = vpop.f32.mrf.mxu0
  %v1032 = vadd.f32 %v184, %v1031
  %1033 = vmatmul.bf16.gmra.mxu0 %v707
  %v1034 = vpop.f32.mrf.mxu0
  %v1035 = vadd.f32 %v184, %v1034
  %v1036 = vpop.f32.mrf.mxu0
  %v1037 = vadd.f32 %v184, %v1036
  %1038 = vmatmul.bf16.gmra.mxu0 %v710
  %v1039 = vpop.f32.mrf.mxu0
  %v1040 = vadd.f32 %v184, %v1039
  %v1041 = vpop.f32.mrf.mxu0
  %v1042 = vadd.f32 %v184, %v1041
  %1043 = vmatmul.bf16.gmra.mxu0 %v713
  %v1044 = vpop.f32.mrf.mxu0
  %v1045 = vadd.f32 %v184, %v1044
  %v1046 = vpop.f32.mrf.mxu0
  %v1047 = vadd.f32 %v184, %v1046
  %1048 = vmatmul.bf16.gmra.mxu0 %v716
  %v1049 = vpop.f32.mrf.mxu0
  %v1050 = vadd.f32 %v184, %v1049
  %v1051 = vpop.f32.mrf.mxu0
  %v1052 = vadd.f32 %v184, %v1051
  %1053 = vmatmul.bf16.gmra.mxu0 %v719
  %v1054 = vpop.f32.mrf.mxu0
  %v1055 = vadd.f32 %v184, %v1054
  %v1056 = vpop.f32.mrf.mxu0
  %v1057 = vadd.f32 %v184, %v1056
  %1058 = vmatmul.bf16.gmra.mxu0 %v722
  %v1059 = vpop.f32.mrf.mxu0
  %v1060 = vadd.f32 %v184, %v1059
  %v1061 = vpop.f32.mrf.mxu0
  %v1062 = vadd.f32 %v184, %v1061
  %1063 = vmatmul.bf16.gmra.mxu0 %v725
  %v1064 = vpop.f32.mrf.mxu0
  %v1065 = vadd.f32 %v184, %v1064
  %v1066 = vpop.f32.mrf.mxu0
  %v1067 = vadd.f32 %v184, %v1066
  %1068 = vmatmul.bf16.gmra.mxu0 %v728
  %v1069 = vpop.f32.mrf.mxu0
  %v1070 = vadd.f32 %v184, %v1069
  %v1071 = vpop.f32.mrf.mxu0
  %v1072 = vadd.f32 %v184, %v1071
  %1073 = vmatmul.bf16.gmra.mxu0 %v731
  %v1074 = vpop.f32.mrf.mxu0
  %v1075 = vadd.f32 %v184, %v1074
  %v1076 = vpop.f32.mrf.mxu0
  %v1077 = vadd.f32 %v184, %v1076
  %1078 = vmatmul.bf16.gmra.mxu0 %v734
  %v1079 = vpop.f32.mrf.mxu0
  %v1080 = vadd.f32 %v184, %v1079
  %v1081 = vpop.f32.mrf.mxu0
  %v1082 = vadd.f32 %v184, %v1081
  %1083 = vmatmul.bf16.gmra.mxu0 %v737
  %v1084 = vpop.f32.mrf.mxu0
  %v1085 = vadd.f32 %v184, %v1084
  %v1086 = vpop.f32.mrf.mxu0
  %v1087 = vadd.f32 %v184, %v1086
  %1088 = vmatmul.bf16.gmra.mxu0 %v740
  %v1089 = vpop.f32.mrf.mxu0
  %v1090 = vadd.f32 %v184, %v1089
  %v1091 = vpop.f32.mrf.mxu0
  %v1092 = vadd.f32 %v184, %v1091
  %1093 = vmatmul.bf16.gmra.mxu0 %v743
  %v1094 = vpop.f32.mrf.mxu0
  %v1095 = vadd.f32 %v184, %v1094
  %v1096 = vpop.f32.mrf.mxu0
  %v1097 = vadd.f32 %v184, %v1096
  %1098 = vmatmul.bf16.gmra.mxu0 %v746
  %v1099 = vpop.f32.mrf.mxu0
  %v1100 = vadd.f32 %v184, %v1099
  %v1101 = vpop.f32.mrf.mxu0
  %v1102 = vadd.f32 %v184, %v1101
  %1103 = vmatmul.bf16.gmra.mxu0 %v749
  %v1104 = vpop.f32.mrf.mxu0
  %v1105 = vadd.f32 %v184, %v1104
  %v1106 = vpop.f32.mrf.mxu0
  %v1107 = vadd.f32 %v184, %v1106
  %1108 = vmatmul.bf16.gmra.mxu0 %v752
  %v1109 = vpop.f32.mrf.mxu0
  %v1110 = vadd.f32 %v184, %v1109
  %v1111 = vpop.f32.mrf.mxu0
  %v1112 = vadd.f32 %v184, %v1111
  %1113 = vmatmul.bf16.gmra.mxu0 %v755
  %v1114 = vpop.f32.mrf.mxu0
  %v1115 = vadd.f32 %v184, %v1114
  %v1116 = vpop.f32.mrf.mxu0
  %v1117 = vadd.f32 %v184, %v1116
  %1118 = vmatmul.bf16.gmra.mxu0 %v758
  %v1119 = vpop.f32.mrf.mxu0
  %v1120 = vadd.f32 %v184, %v1119
  %v1121 = vpop.f32.mrf.mxu0
  %v1122 = vadd.f32 %v184, %v1121
  %1123 = vmatmul.bf16.gmra.mxu0 %v761
  %v1124 = vpop.f32.mrf.mxu0
  %v1125 = vadd.f32 %v184, %v1124
  %v1126 = vpop.f32.mrf.mxu0
  %v1127 = vadd.f32 %v184, %v1126
  %1128 = vmatmul.bf16.gmra.mxu0 %v764
  %v1129 = vpop.f32.mrf.mxu0
  %v1130 = vadd.f32 %v184, %v1129
  %v1131 = vpop.f32.mrf.mxu0
  %v1132 = vadd.f32 %v184, %v1131
  %1133 = vmatmul.bf16.gmra.mxu0 %v767
  %v1134 = vpop.f32.mrf.mxu0
  %v1135 = vadd.f32 %v184, %v1134
  %v1136 = vpop.f32.mrf.mxu0
  %v1137 = vadd.f32 %v184, %v1136
  %1138 = vmatmul.bf16.gmra.mxu0 %v770
  %v1139 = vpop.f32.mrf.mxu0
  %v1140 = vadd.f32 %v184, %v1139
  %v1141 = vpop.f32.mrf.mxu0
  %v1142 = vadd.f32 %v184, %v1141
  %1143 = vmatmul.bf16.gmra.mxu0 %v773
  %v1144 = vpop.f32.mrf.mxu0
  %v1145 = vadd.f32 %v184, %v1144
  %v1146 = vpop.f32.mrf.mxu0
  %v1147 = vadd.f32 %v184, %v1146
  %1148 = vmatmul.bf16.gmra.mxu0 %v776
  %v1149 = vpop.f32.mrf.mxu0
  %v1150 = vadd.f32 %v184, %v1149
  %v1151 = vpop.f32.mrf.mxu0
  %v1152 = vadd.f32 %v184, %v1151
  %1153 = vdwg.mxu0
  %v1154 = vmax.f32 %v795, 0.0
  %v1155 = vmax.f32 %v797, 0.0
  %v1156 = vmax.f32 %v800, 0.0
  %v1157 = vmax.f32 %v802, 0.0
  %v1158 = vmax.f32 %v805, 0.0
  %v1159 = vmax.f32 %v807, 0.0
  %v1160 = vmax.f32 %v810, 0.0
  %v1161 = vmax.f32 %v812, 0.0
  %v1162 = vmax.f32 %v815, 0.0
  %v1163 = vmax.f32 %v817, 0.0
  %v1164 = vmax.f32 %v820, 0.0
  %v1165 = vmax.f32 %v822, 0.0
  %v1166 = vmax.f32 %v825, 0.0
  %v1167 = vmax.f32 %v827, 0.0
  %v1168 = vmax.f32 %v830, 0.0
  %v1169 = vmax.f32 %v832, 0.0
  %v1170 = vmax.f32 %v835, 0.0
  %v1171 = vmax.f32 %v837, 0.0
  %v1172 = vmax.f32 %v840, 0.0
  %v1173 = vmax.f32 %v842, 0.0
  %v1174 = vmax.f32 %v845, 0.0
  %v1175 = vmax.f32 %v847, 0.0
  %v1176 = vmax.f32 %v850, 0.0
  %v1177 = vmax.f32 %v852, 0.0
  %v1178 = vmax.f32 %v855, 0.0
  %v1179 = vmax.f32 %v857, 0.0
  %v1180 = vmax.f32 %v860, 0.0
  %v1181 = vmax.f32 %v862, 0.0
  %v1182 = vmax.f32 %v865, 0.0
  %v1183 = vmax.f32 %v867, 0.0
  %v1184 = vmax.f32 %v870, 0.0
  %v1185 = vmax.f32 %v872, 0.0
  %v1186 = vmax.f32 %v875, 0.0
  %v1187 = vmax.f32 %v877, 0.0
  %v1188 = vmax.f32 %v880, 0.0
  %v1189 = vmax.f32 %v882, 0.0
  %v1190 = vmax.f32 %v885, 0.0
  %v1191 = vmax.f32 %v887, 0.0
  %v1192 = vmax.f32 %v890, 0.0
  %v1193 = vmax.f32 %v892, 0.0
  %v1194 = vmax.f32 %v895, 0.0
  %v1195 = vmax.f32 %v897, 0.0
  %v1196 = vmax.f32 %v900, 0.0
  %v1197 = vmax.f32 %v902, 0.0
  %v1198 = vmax.f32 %v905, 0.0
  %v1199 = vmax.f32 %v907, 0.0
  %v1200 = vmax.f32 %v910, 0.0
  %v1201 = vmax.f32 %v912, 0.0
  %v1202 = vmax.f32 %v915, 0.0
  %v1203 = vmax.f32 %v917, 0.0
  %v1204 = vmax.f32 %v920, 0.0
  %v1205 = vmax.f32 %v922, 0.0
  %v1206 = vmax.f32 %v925, 0.0
  %v1207 = vmax.f32 %v927, 0.0
  %v1208 = vmax.f32 %v930, 0.0
  %v1209 = vmax.f32 %v932, 0.0
  %v1210 = vmax.f32 %v935, 0.0
  %v1211 = vmax.f32 %v937, 0.0
  %v1212 = vmax.f32 %v940, 0.0
  %v1213 = vmax.f32 %v942, 0.0
  %v1214 = vmax.f32 %v945, 0.0
  %v1215 = vmax.f32 %v947, 0.0
  %v1216 = vmax.f32 %v950, 0.0
  %v1217 = vmax.f32 %v952, 0.0
  %v1218 = vmax.f32 %v955, 0.0
  %v1219 = vmax.f32 %v957, 0.0
  %v1220 = vmax.f32 %v960, 0.0
  %v1221 = vmax.f32 %v962, 0.0
  %v1222 = vmax.f32 %v965, 0.0
  %v1223 = vmax.f32 %v967, 0.0
  %v1224 = vmax.f32 %v970, 0.0
  %v1225 = vmax.f32 %v972, 0.0
  %v1226 = vmax.f32 %v975, 0.0
  %v1227 = vmax.f32 %v977, 0.0
  %v1228 = vmax.f32 %v980, 0.0
  %v1229 = vmax.f32 %v982, 0.0
  %v1230 = vmax.f32 %v985, 0.0
  %v1231 = vmax.f32 %v987, 0.0
  %v1232 = vmax.f32 %v990, 0.0
  %v1233 = vmax.f32 %v992, 0.0
  %v1234 = vmax.f32 %v995, 0.0
  %v1235 = vmax.f32 %v997, 0.0
  %v1236 = vmax.f32 %v1000, 0.0
  %v1237 = vmax.f32 %v1002, 0.0
  %v1238 = vmax.f32 %v1005, 0.0
  %v1239 = vmax.f32 %v1007, 0.0
  %v1240 = vmax.f32 %v1010, 0.0
  %v1241 = vmax.f32 %v1012, 0.0
  %v1242 = vmax.f32 %v1015, 0.0
  %v1243 = vmax.f32 %v1017, 0.0
  %v1244 = vmax.f32 %v1020, 0.0
  %v1245 = vmax.f32 %v1022, 0.0
  %v1246 = vmax.f32 %v1025, 0.0
  %v1247 = vmax.f32 %v1027, 0.0
  %v1248 = vmax.f32 %v1030, 0.0
  %v1249 = vmax.f32 %v1032, 0.0
  %v1250 = vmax.f32 %v1035, 0.0
  %v1251 = vmax.f32 %v1037, 0.0
  %v1252 = vmax.f32 %v1040, 0.0
  %v1253 = vmax.f32 %v1042, 0.0
  %v1254 = vmax.f32 %v1045, 0.0
  %v1255 = vmax.f32 %v1047, 0.0
  %v1256 = vmax.f32 %v1050, 0.0
  %v1257 = vmax.f32 %v1052, 0.0
  %v1258 = vmax.f32 %v1055, 0.0
  %v1259 = vmax.f32 %v1057, 0.0
  %v1260 = vmax.f32 %v1060, 0.0
  %v1261 = vmax.f32 %v1062, 0.0
  %v1262 = vmax.f32 %v1065, 0.0
  %v1263 = vmax.f32 %v1067, 0.0
  %v1264 = vmax.f32 %v1070, 0.0
  %v1265 = vmax.f32 %v1072, 0.0
  %v1266 = vmax.f32 %v1075, 0.0
  %v1267 = vmax.f32 %v1077, 0.0
  %v1268 = vmax.f32 %v1080, 0.0
  %v1269 = vmax.f32 %v1082, 0.0
  %v1270 = vmax.f32 %v1085, 0.0
  %v1271 = vmax.f32 %v1087, 0.0
  %v1272 = vmax.f32 %v1090, 0.0
  %v1273 = vmax.f32 %v1092, 0.0
  %v1274 = vmax.f32 %v1095, 0.0
  %v1275 = vmax.f32 %v1097, 0.0
  %v1276 = vmax.f32 %v1100, 0.0
  %v1277 = vmax.f32 %v1102, 0.0
  %v1278 = vmax.f32 %v1105, 0.0
  %v1279 = vmax.f32 %v1107, 0.0
  %v1280 = vmax.f32 %v1110, 0.0
  %v1281 = vmax.f32 %v1112, 0.0
  %v1282 = vmax.f32 %v1115, 0.0
  %v1283 = vmax.f32 %v1117, 0.0
  %v1284 = vmax.f32 %v1120, 0.0
  %v1285 = vmax.f32 %v1122, 0.0
  %v1286 = vmax.f32 %v1125, 0.0
  %v1287 = vmax.f32 %v1127, 0.0
  %v1288 = vmax.f32 %v1130, 0.0
  %v1289 = vmax.f32 %v1132, 0.0
  %v1290 = vmax.f32 %v1135, 0.0
  %v1291 = vmax.f32 %v1137, 0.0
  %v1292 = vmax.f32 %v1140, 0.0
  %v1293 = vmax.f32 %v1142, 0.0
  %v1294 = vmax.f32 %v1145, 0.0
  %v1295 = vmax.f32 %v1147, 0.0
  %v1296 = vmax.f32 %v1150, 0.0
  %v1297 = vmax.f32 %v1152, 0.0
  %v1298 = vpack.c.bf16 %v1154, %v1154
  %v1299 = vpack.c.bf16 %v1155, %v1155
  %v1300 = vpack.c.bf16 %v1156, %v1156
  %v1301 = vpack.c.bf16 %v1157, %v1157
  %v1302 = vpack.c.bf16 %v1158, %v1158
  %v1303 = vpack.c.bf16 %v1159, %v1159
  %v1304 = vpack.c.bf16 %v1160, %v1160
  %v1305 = vpack.c.bf16 %v1161, %v1161
  %v1306 = vpack.c.bf16 %v1162, %v1162
  %v1307 = vpack.c.bf16 %v1163, %v1163
  %v1308 = vpack.c.bf16 %v1164, %v1164
  %v1309 = vpack.c.bf16 %v1165, %v1165
  %v1310 = vpack.c.bf16 %v1166, %v1166
  %v1311 = vpack.c.bf16 %v1167, %v1167
  %v1312 = vpack.c.bf16 %v1168, %v1168
  %v1313 = vpack.c.bf16 %v1169, %v1169
  %v1314 = vpack.c.bf16 %v1170, %v1170
  %v1315 = vpack.c.bf16 %v1171, %v1171
  %v1316 = vpack.c.bf16 %v1172, %v1172
  %v1317 = vpack.c.bf16 %v1173, %v1173
  %v1318 = vpack.c.bf16 %v1174, %v1174
  %v1319 = vpack.c.bf16 %v1175, %v1175
  %v1320 = vpack.c.bf16 %v1176, %v1176
  %v1321 = vpack.c.bf16 %v1177, %v1177
  %v1322 = vpack.c.bf16 %v1178, %v1178
  %v1323 = vpack.c.bf16 %v1179, %v1179
  %v1324 = vpack.c.bf16 %v1180, %v1180
  %v1325 = vpack.c.bf16 %v1181, %v1181
  %v1326 = vpack.c.bf16 %v1182, %v1182
  %v1327 = vpack.c.bf16 %v1183, %v1183
  %v1328 = vpack.c.bf16 %v1184, %v1184
  %v1329 = vpack.c.bf16 %v1185, %v1185
  %v1330 = vpack.c.bf16 %v1186, %v1186
  %v1331 = vpack.c.bf16 %v1187, %v1187
  %v1332 = vpack.c.bf16 %v1188, %v1188
  %v1333 = vpack.c.bf16 %v1189, %v1189
  %v1334 = vpack.c.bf16 %v1190, %v1190
  %v1335 = vpack.c.bf16 %v1191, %v1191
  %v1336 = vpack.c.bf16 %v1192, %v1192
  %v1337 = vpack.c.bf16 %v1193, %v1193
  %v1338 = vpack.c.bf16 %v1194, %v1194
  %v1339 = vpack.c.bf16 %v1195, %v1195
  %v1340 = vpack.c.bf16 %v1196, %v1196
  %v1341 = vpack.c.bf16 %v1197, %v1197
  %v1342 = vpack.c.bf16 %v1198, %v1198
  %v1343 = vpack.c.bf16 %v1199, %v1199
  %v1344 = vpack.c.bf16 %v1200, %v1200
  %v1345 = vpack.c.bf16 %v1201, %v1201
  %v1346 = vpack.c.bf16 %v1202, %v1202
  %v1347 = vpack.c.bf16 %v1203, %v1203
  %v1348 = vpack.c.bf16 %v1204, %v1204
  %v1349 = vpack.c.bf16 %v1205, %v1205
  %v1350 = vpack.c.bf16 %v1206, %v1206
  %v1351 = vpack.c.bf16 %v1207, %v1207
  %v1352 = vpack.c.bf16 %v1208, %v1208
  %v1353 = vpack.c.bf16 %v1209, %v1209
  %v1354 = vpack.c.bf16 %v1210, %v1210
  %v1355 = vpack.c.bf16 %v1211, %v1211
  %v1356 = vpack.c.bf16 %v1212, %v1212
  %v1357 = vpack.c.bf16 %v1213, %v1213
  %v1358 = vpack.c.bf16 %v1214, %v1214
  %v1359 = vpack.c.bf16 %v1215, %v1215
  %v1360 = vpack.c.bf16 %v1216, %v1216
  %v1361 = vpack.c.bf16 %v1217, %v1217
  %v1362 = vpack.c.bf16 %v1218, %v1218
  %v1363 = vpack.c.bf16 %v1219, %v1219
  %v1364 = vpack.c.bf16 %v1220, %v1220
  %v1365 = vpack.c.bf16 %v1221, %v1221
  %v1366 = vpack.c.bf16 %v1222, %v1222
  %v1367 = vpack.c.bf16 %v1223, %v1223
  %v1368 = vpack.c.bf16 %v1224, %v1224
  %v1369 = vpack.c.bf16 %v1225, %v1225
  %v1370 = vpack.c.bf16 %v1226, %v1226
  %v1371 = vpack.c.bf16 %v1227, %v1227
  %v1372 = vpack.c.bf16 %v1228, %v1228
  %v1373 = vpack.c.bf16 %v1229, %v1229
  %v1374 = vpack.c.bf16 %v1230, %v1230
  %v1375 = vpack.c.bf16 %v1231, %v1231
  %v1376 = vpack.c.bf16 %v1232, %v1232
  %v1377 = vpack.c.bf16 %v1233, %v1233
  %v1378 = vpack.c.bf16 %v1234, %v1234
  %v1379 = vpack.c.bf16 %v1235, %v1235
  %v1380 = vpack.c.bf16 %v1236, %v1236
  %v1381 = vpack.c.bf16 %v1237, %v1237
  %v1382 = vpack.c.bf16 %v1238, %v1238
  %v1383 = vpack.c.bf16 %v1239, %v1239
  %v1384 = vpack.c.bf16 %v1240, %v1240
  %v1385 = vpack.c.bf16 %v1241, %v1241
  %v1386 = vpack.c.bf16 %v1242, %v1242
  %v1387 = vpack.c.bf16 %v1243, %v1243
  %v1388 = vpack.c.bf16 %v1244, %v1244
  %v1389 = vpack.c.bf16 %v1245, %v1245
  %v1390 = vpack.c.bf16 %v1246, %v1246
  %v1391 = vpack.c.bf16 %v1247, %v1247
  %v1392 = vpack.c.bf16 %v1248, %v1248
  %v1393 = vpack.c.bf16 %v1249, %v1249
  %v1394 = vpack.c.bf16 %v1250, %v1250
  %v1395 = vpack.c.bf16 %v1251, %v1251
  %v1396 = vpack.c.bf16 %v1252, %v1252
  %v1397 = vpack.c.bf16 %v1253, %v1253
  %v1398 = vpack.c.bf16 %v1254, %v1254
  %v1399 = vpack.c.bf16 %v1255, %v1255
  %v1400 = vpack.c.bf16 %v1256, %v1256
  %v1401 = vpack.c.bf16 %v1257, %v1257
  %v1402 = vpack.c.bf16 %v1258, %v1258
  %v1403 = vpack.c.bf16 %v1259, %v1259
  %v1404 = vpack.c.bf16 %v1260, %v1260
  %v1405 = vpack.c.bf16 %v1261, %v1261
  %v1406 = vpack.c.bf16 %v1262, %v1262
  %v1407 = vpack.c.bf16 %v1263, %v1263
  %v1408 = vpack.c.bf16 %v1264, %v1264
  %v1409 = vpack.c.bf16 %v1265, %v1265
  %v1410 = vpack.c.bf16 %v1266, %v1266
  %v1411 = vpack.c.bf16 %v1267, %v1267
  %v1412 = vpack.c.bf16 %v1268, %v1268
  %v1413 = vpack.c.bf16 %v1269, %v1269
  %v1414 = vpack.c.bf16 %v1270, %v1270
  %v1415 = vpack.c.bf16 %v1271, %v1271
  %v1416 = vpack.c.bf16 %v1272, %v1272
  %v1417 = vpack.c.bf16 %v1273, %v1273
  %v1418 = vpack.c.bf16 %v1274, %v1274
  %v1419 = vpack.c.bf16 %v1275, %v1275
  %v1420 = vpack.c.bf16 %v1276, %v1276
  %v1421 = vpack.c.bf16 %v1277, %v1277
  %v1422 = vpack.c.bf16 %v1278, %v1278
  %v1423 = vpack.c.bf16 %v1279, %v1279
  %v1424 = vpack.c.bf16 %v1280, %v1280
  %v1425 = vpack.c.bf16 %v1281, %v1281
  %v1426 = vpack.c.bf16 %v1282, %v1282
  %v1427 = vpack.c.bf16 %v1283, %v1283
  %v1428 = vpack.c.bf16 %v1284, %v1284
  %v1429 = vpack.c.bf16 %v1285, %v1285
  %v1430 = vpack.c.bf16 %v1286, %v1286
  %v1431 = vpack.c.bf16 %v1287, %v1287
  %v1432 = vpack.c.bf16 %v1288, %v1288
  %v1433 = vpack.c.bf16 %v1289, %v1289
  %v1434 = vpack.c.bf16 %v1290, %v1290
  %v1435 = vpack.c.bf16 %v1291, %v1291
  %v1436 = vpack.c.bf16 %v1292, %v1292
  %v1437 = vpack.c.bf16 %v1293, %v1293
  %v1438 = vpack.c.bf16 %v1294, %v1294
  %v1439 = vpack.c.bf16 %v1295, %v1295
  %v1440 = vpack.c.bf16 %v1296, %v1296
  %v1441 = vpack.c.bf16 %v1297, %v1297
  %v1442 = vld [vmem:[%s3] sm:$0xf]
  %v1443 = vld [vmem:[%s3 + $0x4] sm:$0xf]
  %v1444 = vld [vmem:[%s3 + $0x8] sm:$0xf]
  %v1445 = vld [vmem:[%s3 + $0xc] sm:$0xf]
  %v1446 = vld [vmem:[%s3 + $0x10] sm:$0xf]
  %v1447 = vld [vmem:[%s3 + $0x14] sm:$0xf]
  %v1448 = vld [vmem:[%s3 + $0x18] sm:$0xf]
  %v1449 = vld [vmem:[%s3 + $0x1c] sm:$0xf]
  %s1450 = scalar_lea.vmem %s3, 32
  %v1451 = vld [vmem:[%s1450] sm:$0xf]
  %v1452 = vld [vmem:[%s1450 + $0x4] sm:$0xf]
  %v1453 = vld [vmem:[%s1450 + $0x8] sm:$0xf]
  %v1454 = vld [vmem:[%s1450 + $0xc] sm:$0xf]
  %v1455 = vld [vmem:[%s1450 + $0x10] sm:$0xf]
  %v1456 = vld [vmem:[%s1450 + $0x14] sm:$0xf]
  %v1457 = vld [vmem:[%s1450 + $0x18] sm:$0xf]
  %v1458 = vld [vmem:[%s1450 + $0x1c] sm:$0xf]
  %v1475 = vunpack.c.l.b16 %v1314
  %v1476 = vunpack.c.l.b16 %v1315
  %v1477 = vunpack.c.l.b16 %v1316
  %v1478 = vunpack.c.l.b16 %v1317
  %v1479 = vunpack.c.l.b16 %v1318
  %v1480 = vunpack.c.l.b16 %v1319
  %v1481 = vunpack.c.l.b16 %v1320
  %v1482 = vunpack.c.l.b16 %v1321
  %v1483 = vunpack.c.l.b16 %v1322
  %v1484 = vunpack.c.l.b16 %v1323
  %v1485 = vunpack.c.l.b16 %v1324
  %v1486 = vunpack.c.l.b16 %v1325
  %v1487 = vunpack.c.l.b16 %v1326
  %v1488 = vunpack.c.l.b16 %v1327
  %v1489 = vunpack.c.l.b16 %v1328
  %v1490 = vunpack.c.l.b16 %v1329
  %v1491 = vpack.c.b16 %v1476, %v1475
  %v1492 = vpack.c.b16 %v1478, %v1477
  %v1493 = vpack.c.b16 %v1480, %v1479
  %v1494 = vpack.c.b16 %v1482, %v1481
  %v1495 = vpack.c.b16 %v1484, %v1483
  %v1496 = vpack.c.b16 %v1486, %v1485
  %v1497 = vpack.c.b16 %v1488, %v1487
  %v1498 = vpack.c.b16 %v1490, %v1489
  %v1507 = vunpack.c.l.b16 %v1451
  %v1508 = vunpack.c.l.b16 %v1452
  %v1509 = vunpack.c.l.b16 %v1453
  %v1510 = vunpack.c.l.b16 %v1454
  %v1511 = vunpack.c.l.b16 %v1455
  %v1512 = vunpack.c.l.b16 %v1456
  %v1513 = vunpack.c.l.b16 %v1457
  %v1514 = vunpack.c.l.b16 %v1458
  %v1515 = vpack.c.b16 %v1508, %v1507
  %v1516 = vpack.c.b16 %v1510, %v1509
  %v1517 = vpack.c.b16 %v1512, %v1511
  %v1518 = vpack.c.b16 %v1514, %v1513
  %vm1523 = vcmask 523264
  %v1525 = vsel %vm1523, %v1491, 0
  %v1528 = vsel %vm1523, %v1492, 0
  %v1531 = vsel %vm1523, %v1493, 0
  %v1534 = vsel %vm1523, %v1494, 0
  %v1537 = vsel %vm1523, %v1495, 0
  %v1540 = vsel %vm1523, %v1496, 0
  %v1543 = vsel %vm1523, %v1497, 0
  %v1546 = vsel %vm1523, %v1498, 0
  %1548 = vmatpush.bf16.msra.mxu0 0
  %1549 = vmatpush.bf16.msra.mxu0 0
  %1550 = vmatpush.bf16.msra.mxu0 0
  %1551 = vmatpush.bf16.msra.mxu0 0
  %1552 = vmatpush.bf16.msra.mxu0 %v1518
  %1553 = vmatpush.bf16.msra.mxu0 %v1517
  %1554 = vmatpush.bf16.msra.mxu0 %v1516
  %1555 = vmatpush.bf16.msra.mxu0 %v1515
  %1556 = vmatmul.bf16.gmra.mxu0 %v1525
  %v1557 = vpop.f32.mrf.mxu0
  %v1558 = vadd.f32 0.0, %v1557
  %v1559 = vpop.f32.mrf.mxu0
  %v1560 = vadd.f32 0.0, %v1559
  %1561 = vmatmul.bf16.gmra.mxu0 %v1528
  %v1562 = vpop.f32.mrf.mxu0
  %v1563 = vadd.f32 0.0, %v1562
  %v1564 = vpop.f32.mrf.mxu0
  %v1565 = vadd.f32 0.0, %v1564
  %1566 = vmatmul.bf16.gmra.mxu0 %v1531
  %v1567 = vpop.f32.mrf.mxu0
  %v1568 = vadd.f32 0.0, %v1567
  %v1569 = vpop.f32.mrf.mxu0
  %v1570 = vadd.f32 0.0, %v1569
  %1571 = vmatmul.bf16.gmra.mxu0 %v1534
  %v1572 = vpop.f32.mrf.mxu0
  %v1573 = vadd.f32 0.0, %v1572
  %v1574 = vpop.f32.mrf.mxu0
  %v1575 = vadd.f32 0.0, %v1574
  %1576 = vmatmul.bf16.gmra.mxu0 %v1537
  %v1577 = vpop.f32.mrf.mxu0
  %v1578 = vadd.f32 0.0, %v1577
  %v1579 = vpop.f32.mrf.mxu0
  %v1580 = vadd.f32 0.0, %v1579
  %1581 = vmatmul.bf16.gmra.mxu0 %v1540
  %v1582 = vpop.f32.mrf.mxu0
  %v1583 = vadd.f32 0.0, %v1582
  %v1584 = vpop.f32.mrf.mxu0
  %v1585 = vadd.f32 0.0, %v1584
  %1586 = vmatmul.bf16.gmra.mxu0 %v1543
  %v1587 = vpop.f32.mrf.mxu0
  %v1588 = vadd.f32 0.0, %v1587
  %v1589 = vpop.f32.mrf.mxu0
  %v1590 = vadd.f32 0.0, %v1589
  %1591 = vmatmul.bf16.gmra.mxu0 %v1546
  %v1592 = vpop.f32.mrf.mxu0
  %v1593 = vadd.f32 0.0, %v1592
  %v1594 = vpop.f32.mrf.mxu0
  %v1595 = vadd.f32 0.0, %v1594
  %1596 = vdwg.mxu0
  %v1613 = vunpack.c.l.b16 %v1298
  %v1614 = vunpack.c.l.b16 %v1299
  %v1615 = vunpack.c.l.b16 %v1300
  %v1616 = vunpack.c.l.b16 %v1301
  %v1617 = vunpack.c.l.b16 %v1302
  %v1618 = vunpack.c.l.b16 %v1303
  %v1619 = vunpack.c.l.b16 %v1304
  %v1620 = vunpack.c.l.b16 %v1305
  %v1621 = vunpack.c.l.b16 %v1306
  %v1622 = vunpack.c.l.b16 %v1307
  %v1623 = vunpack.c.l.b16 %v1308
  %v1624 = vunpack.c.l.b16 %v1309
  %v1625 = vunpack.c.l.b16 %v1310
  %v1626 = vunpack.c.l.b16 %v1311
  %v1627 = vunpack.c.l.b16 %v1312
  %v1628 = vunpack.c.l.b16 %v1313
  %v1629 = vpack.c.b16 %v1614, %v1613
  %v1630 = vpack.c.b16 %v1616, %v1615
  %v1631 = vpack.c.b16 %v1618, %v1617
  %v1632 = vpack.c.b16 %v1620, %v1619
  %v1633 = vpack.c.b16 %v1622, %v1621
  %v1634 = vpack.c.b16 %v1624, %v1623
  %v1635 = vpack.c.b16 %v1626, %v1625
  %v1636 = vpack.c.b16 %v1628, %v1627
  %v1645 = vunpack.c.l.b16 %v1442
  %v1646 = vunpack.c.l.b16 %v1443
  %v1647 = vunpack.c.l.b16 %v1444
  %v1648 = vunpack.c.l.b16 %v1445
  %v1649 = vunpack.c.l.b16 %v1446
  %v1650 = vunpack.c.l.b16 %v1447
  %v1651 = vunpack.c.l.b16 %v1448
  %v1652 = vunpack.c.l.b16 %v1449
  %v1653 = vpack.c.b16 %v1646, %v1645
  %v1654 = vpack.c.b16 %v1648, %v1647
  %v1655 = vpack.c.b16 %v1650, %v1649
  %v1656 = vpack.c.b16 %v1652, %v1651
  %v1662 = vsel %vm1523, %v1629, 0
  %v1665 = vsel %vm1523, %v1630, 0
  %v1668 = vsel %vm1523, %v1631, 0
  %v1671 = vsel %vm1523, %v1632, 0
  %v1674 = vsel %vm1523, %v1633, 0
  %v1677 = vsel %vm1523, %v1634, 0
  %v1680 = vsel %vm1523, %v1635, 0
  %v1683 = vsel %vm1523, %v1636, 0
  %1685 = vmatpush.bf16.msra.mxu0 0
  %1686 = vmatpush.bf16.msra.mxu0 0
  %1687 = vmatpush.bf16.msra.mxu0 0
  %1688 = vmatpush.bf16.msra.mxu0 0
  %1689 = vmatpush.bf16.msra.mxu0 %v1656
  %1690 = vmatpush.bf16.msra.mxu0 %v1655
  %1691 = vmatpush.bf16.msra.mxu0 %v1654
  %1692 = vmatpush.bf16.msra.mxu0 %v1653
  %1693 = vmatmul.bf16.gmra.mxu0 %v1662
  %v1694 = vpop.f32.mrf.mxu0
  %v1695 = vadd.f32 %v1558, %v1694
  %v1696 = vpop.f32.mrf.mxu0
  %v1697 = vadd.f32 %v1560, %v1696
  %1698 = vmatmul.bf16.gmra.mxu0 %v1665
  %v1699 = vpop.f32.mrf.mxu0
  %v1700 = vadd.f32 %v1563, %v1699
  %v1701 = vpop.f32.mrf.mxu0
  %v1702 = vadd.f32 %v1565, %v1701
  %1703 = vmatmul.bf16.gmra.mxu0 %v1668
  %v1704 = vpop.f32.mrf.mxu0
  %v1705 = vadd.f32 %v1568, %v1704
  %v1706 = vpop.f32.mrf.mxu0
  %v1707 = vadd.f32 %v1570, %v1706
  %1708 = vmatmul.bf16.gmra.mxu0 %v1671
  %v1709 = vpop.f32.mrf.mxu0
  %v1710 = vadd.f32 %v1573, %v1709
  %v1711 = vpop.f32.mrf.mxu0
  %v1712 = vadd.f32 %v1575, %v1711
  %1713 = vmatmul.bf16.gmra.mxu0 %v1674
  %v1714 = vpop.f32.mrf.mxu0
  %v1715 = vadd.f32 %v1578, %v1714
  %v1716 = vpop.f32.mrf.mxu0
  %v1717 = vadd.f32 %v1580, %v1716
  %1718 = vmatmul.bf16.gmra.mxu0 %v1677
  %v1719 = vpop.f32.mrf.mxu0
  %v1720 = vadd.f32 %v1583, %v1719
  %v1721 = vpop.f32.mrf.mxu0
  %v1722 = vadd.f32 %v1585, %v1721
  %1723 = vmatmul.bf16.gmra.mxu0 %v1680
  %v1724 = vpop.f32.mrf.mxu0
  %v1725 = vadd.f32 %v1588, %v1724
  %v1726 = vpop.f32.mrf.mxu0
  %v1727 = vadd.f32 %v1590, %v1726
  %1728 = vmatmul.bf16.gmra.mxu0 %v1683
  %v1729 = vpop.f32.mrf.mxu0
  %v1730 = vadd.f32 %v1593, %v1729
  %v1731 = vpop.f32.mrf.mxu0
  %v1732 = vadd.f32 %v1595, %v1731
  %1733 = vdwg.mxu0
  %s1734 = scalar_lea.vmem %s3, 64
  %v1735 = vld [vmem:[%s1734] sm:$0xf]
  %v1736 = vld [vmem:[%s1734 + $0x4] sm:$0xf]
  %v1737 = vld [vmem:[%s1734 + $0x8] sm:$0xf]
  %v1738 = vld [vmem:[%s1734 + $0xc] sm:$0xf]
  %v1739 = vld [vmem:[%s1734 + $0x10] sm:$0xf]
  %v1740 = vld [vmem:[%s1734 + $0x14] sm:$0xf]
  %v1741 = vld [vmem:[%s1734 + $0x18] sm:$0xf]
  %v1742 = vld [vmem:[%s1734 + $0x1c] sm:$0xf]
  %v1759 = vunpack.c.l.b16 %v1330
  %v1760 = vunpack.c.l.b16 %v1331
  %v1761 = vunpack.c.l.b16 %v1332
  %v1762 = vunpack.c.l.b16 %v1333
  %v1763 = vunpack.c.l.b16 %v1334
  %v1764 = vunpack.c.l.b16 %v1335
  %v1765 = vunpack.c.l.b16 %v1336
  %v1766 = vunpack.c.l.b16 %v1337
  %v1767 = vunpack.c.l.b16 %v1338
  %v1768 = vunpack.c.l.b16 %v1339
  %v1769 = vunpack.c.l.b16 %v1340
  %v1770 = vunpack.c.l.b16 %v1341
  %v1771 = vunpack.c.l.b16 %v1342
  %v1772 = vunpack.c.l.b16 %v1343
  %v1773 = vunpack.c.l.b16 %v1344
  %v1774 = vunpack.c.l.b16 %v1345
  %v1775 = vpack.c.b16 %v1760, %v1759
  %v1776 = vpack.c.b16 %v1762, %v1761
  %v1777 = vpack.c.b16 %v1764, %v1763
  %v1778 = vpack.c.b16 %v1766, %v1765
  %v1779 = vpack.c.b16 %v1768, %v1767
  %v1780 = vpack.c.b16 %v1770, %v1769
  %v1781 = vpack.c.b16 %v1772, %v1771
  %v1782 = vpack.c.b16 %v1774, %v1773
  %v1791 = vunpack.c.l.b16 %v1735
  %v1792 = vunpack.c.l.b16 %v1736
  %v1793 = vunpack.c.l.b16 %v1737
  %v1794 = vunpack.c.l.b16 %v1738
  %v1795 = vunpack.c.l.b16 %v1739
  %v1796 = vunpack.c.l.b16 %v1740
  %v1797 = vunpack.c.l.b16 %v1741
  %v1798 = vunpack.c.l.b16 %v1742
  %v1799 = vpack.c.b16 %v1792, %v1791
  %v1800 = vpack.c.b16 %v1794, %v1793
  %v1801 = vpack.c.b16 %v1796, %v1795
  %v1802 = vpack.c.b16 %v1798, %v1797
  %v1808 = vsel %vm1523, %v1775, 0
  %v1811 = vsel %vm1523, %v1776, 0
  %v1814 = vsel %vm1523, %v1777, 0
  %v1817 = vsel %vm1523, %v1778, 0
  %v1820 = vsel %vm1523, %v1779, 0
  %v1823 = vsel %vm1523, %v1780, 0
  %v1826 = vsel %vm1523, %v1781, 0
  %v1829 = vsel %vm1523, %v1782, 0
  %1831 = vmatpush.bf16.msra.mxu0 0
  %1832 = vmatpush.bf16.msra.mxu0 0
  %1833 = vmatpush.bf16.msra.mxu0 0
  %1834 = vmatpush.bf16.msra.mxu0 0
  %1835 = vmatpush.bf16.msra.mxu0 %v1802
  %1836 = vmatpush.bf16.msra.mxu0 %v1801
  %1837 = vmatpush.bf16.msra.mxu0 %v1800
  %1838 = vmatpush.bf16.msra.mxu0 %v1799
  %1839 = vmatmul.bf16.gmra.mxu0 %v1808
  %v1840 = vpop.f32.mrf.mxu0
  %v1841 = vadd.f32 0.0, %v1840
  %v1842 = vpop.f32.mrf.mxu0
  %v1843 = vadd.f32 0.0, %v1842
  %1844 = vmatmul.bf16.gmra.mxu0 %v1811
  %v1845 = vpop.f32.mrf.mxu0
  %v1846 = vadd.f32 0.0, %v1845
  %v1847 = vpop.f32.mrf.mxu0
  %v1848 = vadd.f32 0.0, %v1847
  %1849 = vmatmul.bf16.gmra.mxu0 %v1814
  %v1850 = vpop.f32.mrf.mxu0
  %v1851 = vadd.f32 0.0, %v1850
  %v1852 = vpop.f32.mrf.mxu0
  %v1853 = vadd.f32 0.0, %v1852
  %1854 = vmatmul.bf16.gmra.mxu0 %v1817
  %v1855 = vpop.f32.mrf.mxu0
  %v1856 = vadd.f32 0.0, %v1855
  %v1857 = vpop.f32.mrf.mxu0
  %v1858 = vadd.f32 0.0, %v1857
  %1859 = vmatmul.bf16.gmra.mxu0 %v1820
  %v1860 = vpop.f32.mrf.mxu0
  %v1861 = vadd.f32 0.0, %v1860
  %v1862 = vpop.f32.mrf.mxu0
  %v1863 = vadd.f32 0.0, %v1862
  %1864 = vmatmul.bf16.gmra.mxu0 %v1823
  %v1865 = vpop.f32.mrf.mxu0
  %v1866 = vadd.f32 0.0, %v1865
  %v1867 = vpop.f32.mrf.mxu0
  %v1868 = vadd.f32 0.0, %v1867
  %1869 = vmatmul.bf16.gmra.mxu0 %v1826
  %v1870 = vpop.f32.mrf.mxu0
  %v1871 = vadd.f32 0.0, %v1870
  %v1872 = vpop.f32.mrf.mxu0
  %v1873 = vadd.f32 0.0, %v1872
  %1874 = vmatmul.bf16.gmra.mxu0 %v1829
  %v1875 = vpop.f32.mrf.mxu0
  %v1876 = vadd.f32 0.0, %v1875
  %v1877 = vpop.f32.mrf.mxu0
  %v1878 = vadd.f32 0.0, %v1877
  %1879 = vdwg.mxu0
  %v1880 = vadd.f32 %v1695, %v1841
  %v1881 = vadd.f32 %v1697, %v1843
  %v1882 = vadd.f32 %v1700, %v1846
  %v1883 = vadd.f32 %v1702, %v1848
  %v1884 = vadd.f32 %v1705, %v1851
  %v1885 = vadd.f32 %v1707, %v1853
  %v1886 = vadd.f32 %v1710, %v1856
  %v1887 = vadd.f32 %v1712, %v1858
  %v1888 = vadd.f32 %v1715, %v1861
  %v1889 = vadd.f32 %v1717, %v1863
  %v1890 = vadd.f32 %v1720, %v1866
  %v1891 = vadd.f32 %v1722, %v1868
  %v1892 = vadd.f32 %v1725, %v1871
  %v1893 = vadd.f32 %v1727, %v1873
  %v1894 = vadd.f32 %v1730, %v1876
  %v1895 = vadd.f32 %v1732, %v1878
  %s1896 = scalar_lea.vmem %s3, 96
  %v1897 = vld [vmem:[%s1896] sm:$0xf]
  %v1898 = vld [vmem:[%s1896 + $0x4] sm:$0xf]
  %v1899 = vld [vmem:[%s1896 + $0x8] sm:$0xf]
  %v1900 = vld [vmem:[%s1896 + $0xc] sm:$0xf]
  %v1901 = vld [vmem:[%s1896 + $0x10] sm:$0xf]
  %v1902 = vld [vmem:[%s1896 + $0x14] sm:$0xf]
  %v1903 = vld [vmem:[%s1896 + $0x18] sm:$0xf]
  %v1904 = vld [vmem:[%s1896 + $0x1c] sm:$0xf]
  %v1921 = vunpack.c.l.b16 %v1346
  %v1922 = vunpack.c.l.b16 %v1347
  %v1923 = vunpack.c.l.b16 %v1348
  %v1924 = vunpack.c.l.b16 %v1349
  %v1925 = vunpack.c.l.b16 %v1350
  %v1926 = vunpack.c.l.b16 %v1351
  %v1927 = vunpack.c.l.b16 %v1352
  %v1928 = vunpack.c.l.b16 %v1353
  %v1929 = vunpack.c.l.b16 %v1354
  %v1930 = vunpack.c.l.b16 %v1355
  %v1931 = vunpack.c.l.b16 %v1356
  %v1932 = vunpack.c.l.b16 %v1357
  %v1933 = vunpack.c.l.b16 %v1358
  %v1934 = vunpack.c.l.b16 %v1359
  %v1935 = vunpack.c.l.b16 %v1360
  %v1936 = vunpack.c.l.b16 %v1361
  %v1937 = vpack.c.b16 %v1922, %v1921
  %v1938 = vpack.c.b16 %v1924, %v1923
  %v1939 = vpack.c.b16 %v1926, %v1925
  %v1940 = vpack.c.b16 %v1928, %v1927
  %v1941 = vpack.c.b16 %v1930, %v1929
  %v1942 = vpack.c.b16 %v1932, %v1931
  %v1943 = vpack.c.b16 %v1934, %v1933
  %v1944 = vpack.c.b16 %v1936, %v1935
  %v1953 = vunpack.c.l.b16 %v1897
  %v1954 = vunpack.c.l.b16 %v1898
  %v1955 = vunpack.c.l.b16 %v1899
  %v1956 = vunpack.c.l.b16 %v1900
  %v1957 = vunpack.c.l.b16 %v1901
  %v1958 = vunpack.c.l.b16 %v1902
  %v1959 = vunpack.c.l.b16 %v1903
  %v1960 = vunpack.c.l.b16 %v1904
  %v1961 = vpack.c.b16 %v1954, %v1953
  %v1962 = vpack.c.b16 %v1956, %v1955
  %v1963 = vpack.c.b16 %v1958, %v1957
  %v1964 = vpack.c.b16 %v1960, %v1959
  %v1970 = vsel %vm1523, %v1937, 0
  %v1973 = vsel %vm1523, %v1938, 0
  %v1976 = vsel %vm1523, %v1939, 0
  %v1979 = vsel %vm1523, %v1940, 0
  %v1982 = vsel %vm1523, %v1941, 0
  %v1985 = vsel %vm1523, %v1942, 0
  %v1988 = vsel %vm1523, %v1943, 0
  %v1991 = vsel %vm1523, %v1944, 0
  %1993 = vmatpush.bf16.msra.mxu0 0
  %1994 = vmatpush.bf16.msra.mxu0 0
  %1995 = vmatpush.bf16.msra.mxu0 0
  %1996 = vmatpush.bf16.msra.mxu0 0
  %1997 = vmatpush.bf16.msra.mxu0 %v1964
  %1998 = vmatpush.bf16.msra.mxu0 %v1963
  %1999 = vmatpush.bf16.msra.mxu0 %v1962
  %2000 = vmatpush.bf16.msra.mxu0 %v1961
  %2001 = vmatmul.bf16.gmra.mxu0 %v1970
  %v2002 = vpop.f32.mrf.mxu0
  %v2003 = vadd.f32 0.0, %v2002
  %v2004 = vpop.f32.mrf.mxu0
  %v2005 = vadd.f32 0.0, %v2004
  %2006 = vmatmul.bf16.gmra.mxu0 %v1973
  %v2007 = vpop.f32.mrf.mxu0
  %v2008 = vadd.f32 0.0, %v2007
  %v2009 = vpop.f32.mrf.mxu0
  %v2010 = vadd.f32 0.0, %v2009
  %2011 = vmatmul.bf16.gmra.mxu0 %v1976
  %v2012 = vpop.f32.mrf.mxu0
  %v2013 = vadd.f32 0.0, %v2012
  %v2014 = vpop.f32.mrf.mxu0
  %v2015 = vadd.f32 0.0, %v2014
  %2016 = vmatmul.bf16.gmra.mxu0 %v1979
  %v2017 = vpop.f32.mrf.mxu0
  %v2018 = vadd.f32 0.0, %v2017
  %v2019 = vpop.f32.mrf.mxu0
  %v2020 = vadd.f32 0.0, %v2019
  %2021 = vmatmul.bf16.gmra.mxu0 %v1982
  %v2022 = vpop.f32.mrf.mxu0
  %v2023 = vadd.f32 0.0, %v2022
  %v2024 = vpop.f32.mrf.mxu0
  %v2025 = vadd.f32 0.0, %v2024
  %2026 = vmatmul.bf16.gmra.mxu0 %v1985
  %v2027 = vpop.f32.mrf.mxu0
  %v2028 = vadd.f32 0.0, %v2027
  %v2029 = vpop.f32.mrf.mxu0
  %v2030 = vadd.f32 0.0, %v2029
  %2031 = vmatmul.bf16.gmra.mxu0 %v1988
  %v2032 = vpop.f32.mrf.mxu0
  %v2033 = vadd.f32 0.0, %v2032
  %v2034 = vpop.f32.mrf.mxu0
  %v2035 = vadd.f32 0.0, %v2034
  %2036 = vmatmul.bf16.gmra.mxu0 %v1991
  %v2037 = vpop.f32.mrf.mxu0
  %v2038 = vadd.f32 0.0, %v2037
  %v2039 = vpop.f32.mrf.mxu0
  %v2040 = vadd.f32 0.0, %v2039
  %2041 = vdwg.mxu0
  %v2042 = vadd.f32 %v1880, %v2003
  %v2043 = vadd.f32 %v1881, %v2005
  %v2044 = vadd.f32 %v1882, %v2008
  %v2045 = vadd.f32 %v1883, %v2010
  %v2046 = vadd.f32 %v1884, %v2013
  %v2047 = vadd.f32 %v1885, %v2015
  %v2048 = vadd.f32 %v1886, %v2018
  %v2049 = vadd.f32 %v1887, %v2020
  %v2050 = vadd.f32 %v1888, %v2023
  %v2051 = vadd.f32 %v1889, %v2025
  %v2052 = vadd.f32 %v1890, %v2028
  %v2053 = vadd.f32 %v1891, %v2030
  %v2054 = vadd.f32 %v1892, %v2033
  %v2055 = vadd.f32 %v1893, %v2035
  %v2056 = vadd.f32 %v1894, %v2038
  %v2057 = vadd.f32 %v1895, %v2040
  %s2058 = scalar_lea.vmem %s3, 128
  %v2059 = vld [vmem:[%s2058] sm:$0xf]
  %v2060 = vld [vmem:[%s2058 + $0x4] sm:$0xf]
  %v2061 = vld [vmem:[%s2058 + $0x8] sm:$0xf]
  %v2062 = vld [vmem:[%s2058 + $0xc] sm:$0xf]
  %v2063 = vld [vmem:[%s2058 + $0x10] sm:$0xf]
  %v2064 = vld [vmem:[%s2058 + $0x14] sm:$0xf]
  %v2065 = vld [vmem:[%s2058 + $0x18] sm:$0xf]
  %v2066 = vld [vmem:[%s2058 + $0x1c] sm:$0xf]
  %v2083 = vunpack.c.l.b16 %v1362
  %v2084 = vunpack.c.l.b16 %v1363
  %v2085 = vunpack.c.l.b16 %v1364
  %v2086 = vunpack.c.l.b16 %v1365
  %v2087 = vunpack.c.l.b16 %v1366
  %v2088 = vunpack.c.l.b16 %v1367
  %v2089 = vunpack.c.l.b16 %v1368
  %v2090 = vunpack.c.l.b16 %v1369
  %v2091 = vunpack.c.l.b16 %v1370
  %v2092 = vunpack.c.l.b16 %v1371
  %v2093 = vunpack.c.l.b16 %v1372
  %v2094 = vunpack.c.l.b16 %v1373
  %v2095 = vunpack.c.l.b16 %v1374
  %v2096 = vunpack.c.l.b16 %v1375
  %v2097 = vunpack.c.l.b16 %v1376
  %v2098 = vunpack.c.l.b16 %v1377
  %v2099 = vpack.c.b16 %v2084, %v2083
  %v2100 = vpack.c.b16 %v2086, %v2085
  %v2101 = vpack.c.b16 %v2088, %v2087
  %v2102 = vpack.c.b16 %v2090, %v2089
  %v2103 = vpack.c.b16 %v2092, %v2091
  %v2104 = vpack.c.b16 %v2094, %v2093
  %v2105 = vpack.c.b16 %v2096, %v2095
  %v2106 = vpack.c.b16 %v2098, %v2097
  %v2115 = vunpack.c.l.b16 %v2059
  %v2116 = vunpack.c.l.b16 %v2060
  %v2117 = vunpack.c.l.b16 %v2061
  %v2118 = vunpack.c.l.b16 %v2062
  %v2119 = vunpack.c.l.b16 %v2063
  %v2120 = vunpack.c.l.b16 %v2064
  %v2121 = vunpack.c.l.b16 %v2065
  %v2122 = vunpack.c.l.b16 %v2066
  %v2123 = vpack.c.b16 %v2116, %v2115
  %v2124 = vpack.c.b16 %v2118, %v2117
  %v2125 = vpack.c.b16 %v2120, %v2119
  %v2126 = vpack.c.b16 %v2122, %v2121
  %v2132 = vsel %vm1523, %v2099, 0
  %v2135 = vsel %vm1523, %v2100, 0
  %v2138 = vsel %vm1523, %v2101, 0
  %v2141 = vsel %vm1523, %v2102, 0
  %v2144 = vsel %vm1523, %v2103, 0
  %v2147 = vsel %vm1523, %v2104, 0
  %v2150 = vsel %vm1523, %v2105, 0
  %v2153 = vsel %vm1523, %v2106, 0
  %2155 = vmatpush.bf16.msra.mxu0 0
  %2156 = vmatpush.bf16.msra.mxu0 0
  %2157 = vmatpush.bf16.msra.mxu0 0
  %2158 = vmatpush.bf16.msra.mxu0 0
  %2159 = vmatpush.bf16.msra.mxu0 %v2126
  %2160 = vmatpush.bf16.msra.mxu0 %v2125
  %2161 = vmatpush.bf16.msra.mxu0 %v2124
  %2162 = vmatpush.bf16.msra.mxu0 %v2123
  %2163 = vmatmul.bf16.gmra.mxu0 %v2132
  %v2164 = vpop.f32.mrf.mxu0
  %v2165 = vadd.f32 0.0, %v2164
  %v2166 = vpop.f32.mrf.mxu0
  %v2167 = vadd.f32 0.0, %v2166
  %2168 = vmatmul.bf16.gmra.mxu0 %v2135
  %v2169 = vpop.f32.mrf.mxu0
  %v2170 = vadd.f32 0.0, %v2169
  %v2171 = vpop.f32.mrf.mxu0
  %v2172 = vadd.f32 0.0, %v2171
  %2173 = vmatmul.bf16.gmra.mxu0 %v2138
  %v2174 = vpop.f32.mrf.mxu0
  %v2175 = vadd.f32 0.0, %v2174
  %v2176 = vpop.f32.mrf.mxu0
  %v2177 = vadd.f32 0.0, %v2176
  %2178 = vmatmul.bf16.gmra.mxu0 %v2141
  %v2179 = vpop.f32.mrf.mxu0
  %v2180 = vadd.f32 0.0, %v2179
  %v2181 = vpop.f32.mrf.mxu0
  %v2182 = vadd.f32 0.0, %v2181
  %2183 = vmatmul.bf16.gmra.mxu0 %v2144
  %v2184 = vpop.f32.mrf.mxu0
  %v2185 = vadd.f32 0.0, %v2184
  %v2186 = vpop.f32.mrf.mxu0
  %v2187 = vadd.f32 0.0, %v2186
  %2188 = vmatmul.bf16.gmra.mxu0 %v2147
  %v2189 = vpop.f32.mrf.mxu0
  %v2190 = vadd.f32 0.0, %v2189
  %v2191 = vpop.f32.mrf.mxu0
  %v2192 = vadd.f32 0.0, %v2191
  %2193 = vmatmul.bf16.gmra.mxu0 %v2150
  %v2194 = vpop.f32.mrf.mxu0
  %v2195 = vadd.f32 0.0, %v2194
  %v2196 = vpop.f32.mrf.mxu0
  %v2197 = vadd.f32 0.0, %v2196
  %2198 = vmatmul.bf16.gmra.mxu0 %v2153
  %v2199 = vpop.f32.mrf.mxu0
  %v2200 = vadd.f32 0.0, %v2199
  %v2201 = vpop.f32.mrf.mxu0
  %v2202 = vadd.f32 0.0, %v2201
  %2203 = vdwg.mxu0
  %v2204 = vadd.f32 %v2042, %v2165
  %v2205 = vadd.f32 %v2043, %v2167
  %v2206 = vadd.f32 %v2044, %v2170
  %v2207 = vadd.f32 %v2045, %v2172
  %v2208 = vadd.f32 %v2046, %v2175
  %v2209 = vadd.f32 %v2047, %v2177
  %v2210 = vadd.f32 %v2048, %v2180
  %v2211 = vadd.f32 %v2049, %v2182
  %v2212 = vadd.f32 %v2050, %v2185
  %v2213 = vadd.f32 %v2051, %v2187
  %v2214 = vadd.f32 %v2052, %v2190
  %v2215 = vadd.f32 %v2053, %v2192
  %v2216 = vadd.f32 %v2054, %v2195
  %v2217 = vadd.f32 %v2055, %v2197
  %v2218 = vadd.f32 %v2056, %v2200
  %v2219 = vadd.f32 %v2057, %v2202
  %s2220 = scalar_lea.vmem %s3, 160
  %v2221 = vld [vmem:[%s2220] sm:$0xf]
  %v2222 = vld [vmem:[%s2220 + $0x4] sm:$0xf]
  %v2223 = vld [vmem:[%s2220 + $0x8] sm:$0xf]
  %v2224 = vld [vmem:[%s2220 + $0xc] sm:$0xf]
  %v2225 = vld [vmem:[%s2220 + $0x10] sm:$0xf]
  %v2226 = vld [vmem:[%s2220 + $0x14] sm:$0xf]
  %v2227 = vld [vmem:[%s2220 + $0x18] sm:$0xf]
  %v2228 = vld [vmem:[%s2220 + $0x1c] sm:$0xf]
  %v2245 = vunpack.c.l.b16 %v1378
  %v2246 = vunpack.c.l.b16 %v1379
  %v2247 = vunpack.c.l.b16 %v1380
  %v2248 = vunpack.c.l.b16 %v1381
  %v2249 = vunpack.c.l.b16 %v1382
  %v2250 = vunpack.c.l.b16 %v1383
  %v2251 = vunpack.c.l.b16 %v1384
  %v2252 = vunpack.c.l.b16 %v1385
  %v2253 = vunpack.c.l.b16 %v1386
  %v2254 = vunpack.c.l.b16 %v1387
  %v2255 = vunpack.c.l.b16 %v1388
  %v2256 = vunpack.c.l.b16 %v1389
  %v2257 = vunpack.c.l.b16 %v1390
  %v2258 = vunpack.c.l.b16 %v1391
  %v2259 = vunpack.c.l.b16 %v1392
  %v2260 = vunpack.c.l.b16 %v1393
  %v2261 = vpack.c.b16 %v2246, %v2245
  %v2262 = vpack.c.b16 %v2248, %v2247
  %v2263 = vpack.c.b16 %v2250, %v2249
  %v2264 = vpack.c.b16 %v2252, %v2251
  %v2265 = vpack.c.b16 %v2254, %v2253
  %v2266 = vpack.c.b16 %v2256, %v2255
  %v2267 = vpack.c.b16 %v2258, %v2257
  %v2268 = vpack.c.b16 %v2260, %v2259
  %v2277 = vunpack.c.l.b16 %v2221
  %v2278 = vunpack.c.l.b16 %v2222
  %v2279 = vunpack.c.l.b16 %v2223
  %v2280 = vunpack.c.l.b16 %v2224
  %v2281 = vunpack.c.l.b16 %v2225
  %v2282 = vunpack.c.l.b16 %v2226
  %v2283 = vunpack.c.l.b16 %v2227
  %v2284 = vunpack.c.l.b16 %v2228
  %v2285 = vpack.c.b16 %v2278, %v2277
  %v2286 = vpack.c.b16 %v2280, %v2279
  %v2287 = vpack.c.b16 %v2282, %v2281
  %v2288 = vpack.c.b16 %v2284, %v2283
  %v2294 = vsel %vm1523, %v2261, 0
  %v2297 = vsel %vm1523, %v2262, 0
  %v2300 = vsel %vm1523, %v2263, 0
  %v2303 = vsel %vm1523, %v2264, 0
  %v2306 = vsel %vm1523, %v2265, 0
  %v2309 = vsel %vm1523, %v2266, 0
  %v2312 = vsel %vm1523, %v2267, 0
  %v2315 = vsel %vm1523, %v2268, 0
  %2317 = vmatpush.bf16.msra.mxu0 0
  %2318 = vmatpush.bf16.msra.mxu0 0
  %2319 = vmatpush.bf16.msra.mxu0 0
  %2320 = vmatpush.bf16.msra.mxu0 0
  %2321 = vmatpush.bf16.msra.mxu0 %v2288
  %2322 = vmatpush.bf16.msra.mxu0 %v2287
  %2323 = vmatpush.bf16.msra.mxu0 %v2286
  %2324 = vmatpush.bf16.msra.mxu0 %v2285
  %2325 = vmatmul.bf16.gmra.mxu0 %v2294
  %v2326 = vpop.f32.mrf.mxu0
  %v2327 = vadd.f32 0.0, %v2326
  %v2328 = vpop.f32.mrf.mxu0
  %v2329 = vadd.f32 0.0, %v2328
  %2330 = vmatmul.bf16.gmra.mxu0 %v2297
  %v2331 = vpop.f32.mrf.mxu0
  %v2332 = vadd.f32 0.0, %v2331
  %v2333 = vpop.f32.mrf.mxu0
  %v2334 = vadd.f32 0.0, %v2333
  %2335 = vmatmul.bf16.gmra.mxu0 %v2300
  %v2336 = vpop.f32.mrf.mxu0
  %v2337 = vadd.f32 0.0, %v2336
  %v2338 = vpop.f32.mrf.mxu0
  %v2339 = vadd.f32 0.0, %v2338
  %2340 = vmatmul.bf16.gmra.mxu0 %v2303
  %v2341 = vpop.f32.mrf.mxu0
  %v2342 = vadd.f32 0.0, %v2341
  %v2343 = vpop.f32.mrf.mxu0
  %v2344 = vadd.f32 0.0, %v2343
  %2345 = vmatmul.bf16.gmra.mxu0 %v2306
  %v2346 = vpop.f32.mrf.mxu0
  %v2347 = vadd.f32 0.0, %v2346
  %v2348 = vpop.f32.mrf.mxu0
  %v2349 = vadd.f32 0.0, %v2348
  %2350 = vmatmul.bf16.gmra.mxu0 %v2309
  %v2351 = vpop.f32.mrf.mxu0
  %v2352 = vadd.f32 0.0, %v2351
  %v2353 = vpop.f32.mrf.mxu0
  %v2354 = vadd.f32 0.0, %v2353
  %2355 = vmatmul.bf16.gmra.mxu0 %v2312
  %v2356 = vpop.f32.mrf.mxu0
  %v2357 = vadd.f32 0.0, %v2356
  %v2358 = vpop.f32.mrf.mxu0
  %v2359 = vadd.f32 0.0, %v2358
  %2360 = vmatmul.bf16.gmra.mxu0 %v2315
  %v2361 = vpop.f32.mrf.mxu0
  %v2362 = vadd.f32 0.0, %v2361
  %v2363 = vpop.f32.mrf.mxu0
  %v2364 = vadd.f32 0.0, %v2363
  %2365 = vdwg.mxu0
  %v2366 = vadd.f32 %v2204, %v2327
  %v2367 = vadd.f32 %v2205, %v2329
  %v2368 = vadd.f32 %v2206, %v2332
  %v2369 = vadd.f32 %v2207, %v2334
  %v2370 = vadd.f32 %v2208, %v2337
  %v2371 = vadd.f32 %v2209, %v2339
  %v2372 = vadd.f32 %v2210, %v2342
  %v2373 = vadd.f32 %v2211, %v2344
  %v2374 = vadd.f32 %v2212, %v2347
  %v2375 = vadd.f32 %v2213, %v2349
  %v2376 = vadd.f32 %v2214, %v2352
  %v2377 = vadd.f32 %v2215, %v2354
  %v2378 = vadd.f32 %v2216, %v2357
  %v2379 = vadd.f32 %v2217, %v2359
  %v2380 = vadd.f32 %v2218, %v2362
  %v2381 = vadd.f32 %v2219, %v2364
  %s2382 = scalar_lea.vmem %s3, 192
  %v2383 = vld [vmem:[%s2382] sm:$0xf]
  %v2384 = vld [vmem:[%s2382 + $0x4] sm:$0xf]
  %v2385 = vld [vmem:[%s2382 + $0x8] sm:$0xf]
  %v2386 = vld [vmem:[%s2382 + $0xc] sm:$0xf]
  %v2387 = vld [vmem:[%s2382 + $0x10] sm:$0xf]
  %v2388 = vld [vmem:[%s2382 + $0x14] sm:$0xf]
  %v2389 = vld [vmem:[%s2382 + $0x18] sm:$0xf]
  %v2390 = vld [vmem:[%s2382 + $0x1c] sm:$0xf]
  %v2407 = vunpack.c.l.b16 %v1394
  %v2408 = vunpack.c.l.b16 %v1395
  %v2409 = vunpack.c.l.b16 %v1396
  %v2410 = vunpack.c.l.b16 %v1397
  %v2411 = vunpack.c.l.b16 %v1398
  %v2412 = vunpack.c.l.b16 %v1399
  %v2413 = vunpack.c.l.b16 %v1400
  %v2414 = vunpack.c.l.b16 %v1401
  %v2415 = vunpack.c.l.b16 %v1402
  %v2416 = vunpack.c.l.b16 %v1403
  %v2417 = vunpack.c.l.b16 %v1404
  %v2418 = vunpack.c.l.b16 %v1405
  %v2419 = vunpack.c.l.b16 %v1406
  %v2420 = vunpack.c.l.b16 %v1407
  %v2421 = vunpack.c.l.b16 %v1408
  %v2422 = vunpack.c.l.b16 %v1409
  %v2423 = vpack.c.b16 %v2408, %v2407
  %v2424 = vpack.c.b16 %v2410, %v2409
  %v2425 = vpack.c.b16 %v2412, %v2411
  %v2426 = vpack.c.b16 %v2414, %v2413
  %v2427 = vpack.c.b16 %v2416, %v2415
  %v2428 = vpack.c.b16 %v2418, %v2417
  %v2429 = vpack.c.b16 %v2420, %v2419
  %v2430 = vpack.c.b16 %v2422, %v2421
  %v2439 = vunpack.c.l.b16 %v2383
  %v2440 = vunpack.c.l.b16 %v2384
  %v2441 = vunpack.c.l.b16 %v2385
  %v2442 = vunpack.c.l.b16 %v2386
  %v2443 = vunpack.c.l.b16 %v2387
  %v2444 = vunpack.c.l.b16 %v2388
  %v2445 = vunpack.c.l.b16 %v2389
  %v2446 = vunpack.c.l.b16 %v2390
  %v2447 = vpack.c.b16 %v2440, %v2439
  %v2448 = vpack.c.b16 %v2442, %v2441
  %v2449 = vpack.c.b16 %v2444, %v2443
  %v2450 = vpack.c.b16 %v2446, %v2445
  %v2456 = vsel %vm1523, %v2423, 0
  %v2459 = vsel %vm1523, %v2424, 0
  %v2462 = vsel %vm1523, %v2425, 0
  %v2465 = vsel %vm1523, %v2426, 0
  %v2468 = vsel %vm1523, %v2427, 0
  %v2471 = vsel %vm1523, %v2428, 0
  %v2474 = vsel %vm1523, %v2429, 0
  %v2477 = vsel %vm1523, %v2430, 0
  %2479 = vmatpush.bf16.msra.mxu0 0
  %2480 = vmatpush.bf16.msra.mxu0 0
  %2481 = vmatpush.bf16.msra.mxu0 0
  %2482 = vmatpush.bf16.msra.mxu0 0
  %2483 = vmatpush.bf16.msra.mxu0 %v2450
  %2484 = vmatpush.bf16.msra.mxu0 %v2449
  %2485 = vmatpush.bf16.msra.mxu0 %v2448
  %2486 = vmatpush.bf16.msra.mxu0 %v2447
  %2487 = vmatmul.bf16.gmra.mxu0 %v2456
  %v2488 = vpop.f32.mrf.mxu0
  %v2489 = vadd.f32 0.0, %v2488
  %v2490 = vpop.f32.mrf.mxu0
  %v2491 = vadd.f32 0.0, %v2490
  %2492 = vmatmul.bf16.gmra.mxu0 %v2459
  %v2493 = vpop.f32.mrf.mxu0
  %v2494 = vadd.f32 0.0, %v2493
  %v2495 = vpop.f32.mrf.mxu0
  %v2496 = vadd.f32 0.0, %v2495
  %2497 = vmatmul.bf16.gmra.mxu0 %v2462
  %v2498 = vpop.f32.mrf.mxu0
  %v2499 = vadd.f32 0.0, %v2498
  %v2500 = vpop.f32.mrf.mxu0
  %v2501 = vadd.f32 0.0, %v2500
  %2502 = vmatmul.bf16.gmra.mxu0 %v2465
  %v2503 = vpop.f32.mrf.mxu0
  %v2504 = vadd.f32 0.0, %v2503
  %v2505 = vpop.f32.mrf.mxu0
  %v2506 = vadd.f32 0.0, %v2505
  %2507 = vmatmul.bf16.gmra.mxu0 %v2468
  %v2508 = vpop.f32.mrf.mxu0
  %v2509 = vadd.f32 0.0, %v2508
  %v2510 = vpop.f32.mrf.mxu0
  %v2511 = vadd.f32 0.0, %v2510
  %2512 = vmatmul.bf16.gmra.mxu0 %v2471
  %v2513 = vpop.f32.mrf.mxu0
  %v2514 = vadd.f32 0.0, %v2513
  %v2515 = vpop.f32.mrf.mxu0
  %v2516 = vadd.f32 0.0, %v2515
  %2517 = vmatmul.bf16.gmra.mxu0 %v2474
  %v2518 = vpop.f32.mrf.mxu0
  %v2519 = vadd.f32 0.0, %v2518
  %v2520 = vpop.f32.mrf.mxu0
  %v2521 = vadd.f32 0.0, %v2520
  %2522 = vmatmul.bf16.gmra.mxu0 %v2477
  %v2523 = vpop.f32.mrf.mxu0
  %v2524 = vadd.f32 0.0, %v2523
  %v2525 = vpop.f32.mrf.mxu0
  %v2526 = vadd.f32 0.0, %v2525
  %2527 = vdwg.mxu0
  %v2528 = vadd.f32 %v2366, %v2489
  %v2529 = vadd.f32 %v2367, %v2491
  %v2530 = vadd.f32 %v2368, %v2494
  %v2531 = vadd.f32 %v2369, %v2496
  %v2532 = vadd.f32 %v2370, %v2499
  %v2533 = vadd.f32 %v2371, %v2501
  %v2534 = vadd.f32 %v2372, %v2504
  %v2535 = vadd.f32 %v2373, %v2506
  %v2536 = vadd.f32 %v2374, %v2509
  %v2537 = vadd.f32 %v2375, %v2511
  %v2538 = vadd.f32 %v2376, %v2514
  %v2539 = vadd.f32 %v2377, %v2516
  %v2540 = vadd.f32 %v2378, %v2519
  %v2541 = vadd.f32 %v2379, %v2521
  %v2542 = vadd.f32 %v2380, %v2524
  %v2543 = vadd.f32 %v2381, %v2526
  %s2544 = scalar_lea.vmem %s3, 224
  %v2545 = vld [vmem:[%s2544] sm:$0xf]
  %v2546 = vld [vmem:[%s2544 + $0x4] sm:$0xf]
  %v2547 = vld [vmem:[%s2544 + $0x8] sm:$0xf]
  %v2548 = vld [vmem:[%s2544 + $0xc] sm:$0xf]
  %v2549 = vld [vmem:[%s2544 + $0x10] sm:$0xf]
  %v2550 = vld [vmem:[%s2544 + $0x14] sm:$0xf]
  %v2551 = vld [vmem:[%s2544 + $0x18] sm:$0xf]
  %v2552 = vld [vmem:[%s2544 + $0x1c] sm:$0xf]
  %v2569 = vunpack.c.l.b16 %v1410
  %v2570 = vunpack.c.l.b16 %v1411
  %v2571 = vunpack.c.l.b16 %v1412
  %v2572 = vunpack.c.l.b16 %v1413
  %v2573 = vunpack.c.l.b16 %v1414
  %v2574 = vunpack.c.l.b16 %v1415
  %v2575 = vunpack.c.l.b16 %v1416
  %v2576 = vunpack.c.l.b16 %v1417
  %v2577 = vunpack.c.l.b16 %v1418
  %v2578 = vunpack.c.l.b16 %v1419
  %v2579 = vunpack.c.l.b16 %v1420
  %v2580 = vunpack.c.l.b16 %v1421
  %v2581 = vunpack.c.l.b16 %v1422
  %v2582 = vunpack.c.l.b16 %v1423
  %v2583 = vunpack.c.l.b16 %v1424
  %v2584 = vunpack.c.l.b16 %v1425
  %v2585 = vpack.c.b16 %v2570, %v2569
  %v2586 = vpack.c.b16 %v2572, %v2571
  %v2587 = vpack.c.b16 %v2574, %v2573
  %v2588 = vpack.c.b16 %v2576, %v2575
  %v2589 = vpack.c.b16 %v2578, %v2577
  %v2590 = vpack.c.b16 %v2580, %v2579
  %v2591 = vpack.c.b16 %v2582, %v2581
  %v2592 = vpack.c.b16 %v2584, %v2583
  %v2601 = vunpack.c.l.b16 %v2545
  %v2602 = vunpack.c.l.b16 %v2546
  %v2603 = vunpack.c.l.b16 %v2547
  %v2604 = vunpack.c.l.b16 %v2548
  %v2605 = vunpack.c.l.b16 %v2549
  %v2606 = vunpack.c.l.b16 %v2550
  %v2607 = vunpack.c.l.b16 %v2551
  %v2608 = vunpack.c.l.b16 %v2552
  %v2609 = vpack.c.b16 %v2602, %v2601
  %v2610 = vpack.c.b16 %v2604, %v2603
  %v2611 = vpack.c.b16 %v2606, %v2605
  %v2612 = vpack.c.b16 %v2608, %v2607
  %v2618 = vsel %vm1523, %v2585, 0
  %v2621 = vsel %vm1523, %v2586, 0
  %v2624 = vsel %vm1523, %v2587, 0
  %v2627 = vsel %vm1523, %v2588, 0
  %v2630 = vsel %vm1523, %v2589, 0
  %v2633 = vsel %vm1523, %v2590, 0
  %v2636 = vsel %vm1523, %v2591, 0
  %v2639 = vsel %vm1523, %v2592, 0
  %2641 = vmatpush.bf16.msra.mxu0 0
  %2642 = vmatpush.bf16.msra.mxu0 0
  %2643 = vmatpush.bf16.msra.mxu0 0
  %2644 = vmatpush.bf16.msra.mxu0 0
  %2645 = vmatpush.bf16.msra.mxu0 %v2612
  %2646 = vmatpush.bf16.msra.mxu0 %v2611
  %2647 = vmatpush.bf16.msra.mxu0 %v2610
  %2648 = vmatpush.bf16.msra.mxu0 %v2609
  %2649 = vmatmul.bf16.gmra.mxu0 %v2618
  %v2650 = vpop.f32.mrf.mxu0
  %v2651 = vadd.f32 0.0, %v2650
  %v2652 = vpop.f32.mrf.mxu0
  %v2653 = vadd.f32 0.0, %v2652
  %2654 = vmatmul.bf16.gmra.mxu0 %v2621
  %v2655 = vpop.f32.mrf.mxu0
  %v2656 = vadd.f32 0.0, %v2655
  %v2657 = vpop.f32.mrf.mxu0
  %v2658 = vadd.f32 0.0, %v2657
  %2659 = vmatmul.bf16.gmra.mxu0 %v2624
  %v2660 = vpop.f32.mrf.mxu0
  %v2661 = vadd.f32 0.0, %v2660
  %v2662 = vpop.f32.mrf.mxu0
  %v2663 = vadd.f32 0.0, %v2662
  %2664 = vmatmul.bf16.gmra.mxu0 %v2627
  %v2665 = vpop.f32.mrf.mxu0
  %v2666 = vadd.f32 0.0, %v2665
  %v2667 = vpop.f32.mrf.mxu0
  %v2668 = vadd.f32 0.0, %v2667
  %2669 = vmatmul.bf16.gmra.mxu0 %v2630
  %v2670 = vpop.f32.mrf.mxu0
  %v2671 = vadd.f32 0.0, %v2670
  %v2672 = vpop.f32.mrf.mxu0
  %v2673 = vadd.f32 0.0, %v2672
  %2674 = vmatmul.bf16.gmra.mxu0 %v2633
  %v2675 = vpop.f32.mrf.mxu0
  %v2676 = vadd.f32 0.0, %v2675
  %v2677 = vpop.f32.mrf.mxu0
  %v2678 = vadd.f32 0.0, %v2677
  %2679 = vmatmul.bf16.gmra.mxu0 %v2636
  %v2680 = vpop.f32.mrf.mxu0
  %v2681 = vadd.f32 0.0, %v2680
  %v2682 = vpop.f32.mrf.mxu0
  %v2683 = vadd.f32 0.0, %v2682
  %2684 = vmatmul.bf16.gmra.mxu0 %v2639
  %v2685 = vpop.f32.mrf.mxu0
  %v2686 = vadd.f32 0.0, %v2685
  %v2687 = vpop.f32.mrf.mxu0
  %v2688 = vadd.f32 0.0, %v2687
  %2689 = vdwg.mxu0
  %v2690 = vadd.f32 %v2528, %v2651
  %v2691 = vadd.f32 %v2529, %v2653
  %v2692 = vadd.f32 %v2530, %v2656
  %v2693 = vadd.f32 %v2531, %v2658
  %v2694 = vadd.f32 %v2532, %v2661
  %v2695 = vadd.f32 %v2533, %v2663
  %v2696 = vadd.f32 %v2534, %v2666
  %v2697 = vadd.f32 %v2535, %v2668
  %v2698 = vadd.f32 %v2536, %v2671
  %v2699 = vadd.f32 %v2537, %v2673
  %v2700 = vadd.f32 %v2538, %v2676
  %v2701 = vadd.f32 %v2539, %v2678
  %v2702 = vadd.f32 %v2540, %v2681
  %v2703 = vadd.f32 %v2541, %v2683
  %v2704 = vadd.f32 %v2542, %v2686
  %v2705 = vadd.f32 %v2543, %v2688
  %s2706 = scalar_lea.vmem %s3, 256
  %v2707 = vld [vmem:[%s2706] sm:$0xf]
  %v2708 = vld [vmem:[%s2706 + $0x4] sm:$0xf]
  %v2709 = vld [vmem:[%s2706 + $0x8] sm:$0xf]
  %v2710 = vld [vmem:[%s2706 + $0xc] sm:$0xf]
  %v2711 = vld [vmem:[%s2706 + $0x10] sm:$0xf]
  %v2712 = vld [vmem:[%s2706 + $0x14] sm:$0xf]
  %v2713 = vld [vmem:[%s2706 + $0x18] sm:$0xf]
  %v2714 = vld [vmem:[%s2706 + $0x1c] sm:$0xf]
  %v2731 = vunpack.c.l.b16 %v1426
  %v2732 = vunpack.c.l.b16 %v1427
  %v2733 = vunpack.c.l.b16 %v1428
  %v2734 = vunpack.c.l.b16 %v1429
  %v2735 = vunpack.c.l.b16 %v1430
  %v2736 = vunpack.c.l.b16 %v1431
  %v2737 = vunpack.c.l.b16 %v1432
  %v2738 = vunpack.c.l.b16 %v1433
  %v2739 = vunpack.c.l.b16 %v1434
  %v2740 = vunpack.c.l.b16 %v1435
  %v2741 = vunpack.c.l.b16 %v1436
  %v2742 = vunpack.c.l.b16 %v1437
  %v2743 = vunpack.c.l.b16 %v1438
  %v2744 = vunpack.c.l.b16 %v1439
  %v2745 = vunpack.c.l.b16 %v1440
  %v2746 = vunpack.c.l.b16 %v1441
  %v2747 = vpack.c.b16 %v2732, %v2731
  %v2748 = vpack.c.b16 %v2734, %v2733
  %v2749 = vpack.c.b16 %v2736, %v2735
  %v2750 = vpack.c.b16 %v2738, %v2737
  %v2751 = vpack.c.b16 %v2740, %v2739
  %v2752 = vpack.c.b16 %v2742, %v2741
  %v2753 = vpack.c.b16 %v2744, %v2743
  %v2754 = vpack.c.b16 %v2746, %v2745
  %v2763 = vunpack.c.l.b16 %v2707
  %v2764 = vunpack.c.l.b16 %v2708
  %v2765 = vunpack.c.l.b16 %v2709
  %v2766 = vunpack.c.l.b16 %v2710
  %v2767 = vunpack.c.l.b16 %v2711
  %v2768 = vunpack.c.l.b16 %v2712
  %v2769 = vunpack.c.l.b16 %v2713
  %v2770 = vunpack.c.l.b16 %v2714
  %v2771 = vpack.c.b16 %v2764, %v2763
  %v2772 = vpack.c.b16 %v2766, %v2765
  %v2773 = vpack.c.b16 %v2768, %v2767
  %v2774 = vpack.c.b16 %v2770, %v2769
  %v2780 = vsel %vm1523, %v2747, 0
  %v2783 = vsel %vm1523, %v2748, 0
  %v2786 = vsel %vm1523, %v2749, 0
  %v2789 = vsel %vm1523, %v2750, 0
  %v2792 = vsel %vm1523, %v2751, 0
  %v2795 = vsel %vm1523, %v2752, 0
  %v2798 = vsel %vm1523, %v2753, 0
  %v2801 = vsel %vm1523, %v2754, 0
  %2803 = vmatpush.bf16.msra.mxu0 0
  %2804 = vmatpush.bf16.msra.mxu0 0
  %2805 = vmatpush.bf16.msra.mxu0 0
  %2806 = vmatpush.bf16.msra.mxu0 0
  %2807 = vmatpush.bf16.msra.mxu0 %v2774
  %2808 = vmatpush.bf16.msra.mxu0 %v2773
  %2809 = vmatpush.bf16.msra.mxu0 %v2772
  %2810 = vmatpush.bf16.msra.mxu0 %v2771
  %2811 = vmatmul.bf16.gmra.mxu0 %v2780
  %v2812 = vpop.f32.mrf.mxu0
  %v2813 = vadd.f32 0.0, %v2812
  %v2814 = vpop.f32.mrf.mxu0
  %v2815 = vadd.f32 0.0, %v2814
  %2816 = vmatmul.bf16.gmra.mxu0 %v2783
  %v2817 = vpop.f32.mrf.mxu0
  %v2818 = vadd.f32 0.0, %v2817
  %v2819 = vpop.f32.mrf.mxu0
  %v2820 = vadd.f32 0.0, %v2819
  %2821 = vmatmul.bf16.gmra.mxu0 %v2786
  %v2822 = vpop.f32.mrf.mxu0
  %v2823 = vadd.f32 0.0, %v2822
  %v2824 = vpop.f32.mrf.mxu0
  %v2825 = vadd.f32 0.0, %v2824
  %2826 = vmatmul.bf16.gmra.mxu0 %v2789
  %v2827 = vpop.f32.mrf.mxu0
  %v2828 = vadd.f32 0.0, %v2827
  %v2829 = vpop.f32.mrf.mxu0
  %v2830 = vadd.f32 0.0, %v2829
  %2831 = vmatmul.bf16.gmra.mxu0 %v2792
  %v2832 = vpop.f32.mrf.mxu0
  %v2833 = vadd.f32 0.0, %v2832
  %v2834 = vpop.f32.mrf.mxu0
  %v2835 = vadd.f32 0.0, %v2834
  %2836 = vmatmul.bf16.gmra.mxu0 %v2795
  %v2837 = vpop.f32.mrf.mxu0
  %v2838 = vadd.f32 0.0, %v2837
  %v2839 = vpop.f32.mrf.mxu0
  %v2840 = vadd.f32 0.0, %v2839
  %2841 = vmatmul.bf16.gmra.mxu0 %v2798
  %v2842 = vpop.f32.mrf.mxu0
  %v2843 = vadd.f32 0.0, %v2842
  %v2844 = vpop.f32.mrf.mxu0
  %v2845 = vadd.f32 0.0, %v2844
  %2846 = vmatmul.bf16.gmra.mxu0 %v2801
  %v2847 = vpop.f32.mrf.mxu0
  %v2848 = vadd.f32 0.0, %v2847
  %v2849 = vpop.f32.mrf.mxu0
  %v2850 = vadd.f32 0.0, %v2849
  %2851 = vdwg.mxu0
  %v2852 = vadd.f32 %v2690, %v2813
  %v2853 = vadd.f32 %v2691, %v2815
  %v2854 = vadd.f32 %v2692, %v2818
  %v2855 = vadd.f32 %v2693, %v2820
  %v2856 = vadd.f32 %v2694, %v2823
  %v2857 = vadd.f32 %v2695, %v2825
  %v2858 = vadd.f32 %v2696, %v2828
  %v2859 = vadd.f32 %v2697, %v2830
  %v2860 = vadd.f32 %v2698, %v2833
  %v2861 = vadd.f32 %v2699, %v2835
  %v2862 = vadd.f32 %v2700, %v2838
  %v2863 = vadd.f32 %v2701, %v2840
  %v2864 = vadd.f32 %v2702, %v2843
  %v2865 = vadd.f32 %v2703, %v2845
  %v2866 = vadd.f32 %v2704, %v2848
  %v2867 = vadd.f32 %v2705, %v2850
  %v2868 = vld [vmem:[%s4] sm:$0x1]
  %v2870 = vperm.slane %v2868, 0
  %v2872 = vadd.f32 %v2852, %v2870
  %v2873 = vadd.f32 %v2853, %v2870
  %v2874 = vadd.f32 %v2854, %v2870
  %v2875 = vadd.f32 %v2855, %v2870
  %v2876 = vadd.f32 %v2856, %v2870
  %v2877 = vadd.f32 %v2857, %v2870
  %v2878 = vadd.f32 %v2858, %v2870
  %v2879 = vadd.f32 %v2859, %v2870
  %v2880 = vadd.f32 %v2860, %v2870
  %v2881 = vadd.f32 %v2861, %v2870
  %v2882 = vadd.f32 %v2862, %v2870
  %v2883 = vadd.f32 %v2863, %v2870
  %v2884 = vadd.f32 %v2864, %v2870
  %v2885 = vadd.f32 %v2865, %v2870
  %v2886 = vadd.f32 %v2866, %v2870
  %v2887 = vadd.f32 %v2867, %v2870
  %v2888 = vmax.f32 %v2872, 0.0
  %v2889 = vmax.f32 %v2873, 0.0
  %v2890 = vmax.f32 %v2874, 0.0
  %v2891 = vmax.f32 %v2875, 0.0
  %v2892 = vmax.f32 %v2876, 0.0
  %v2893 = vmax.f32 %v2877, 0.0
  %v2894 = vmax.f32 %v2878, 0.0
  %v2895 = vmax.f32 %v2879, 0.0
  %v2896 = vmax.f32 %v2880, 0.0
  %v2897 = vmax.f32 %v2881, 0.0
  %v2898 = vmax.f32 %v2882, 0.0
  %v2899 = vmax.f32 %v2883, 0.0
  %v2900 = vmax.f32 %v2884, 0.0
  %v2901 = vmax.f32 %v2885, 0.0
  %v2902 = vmax.f32 %v2886, 0.0
  %v2903 = vmax.f32 %v2887, 0.0
  %v2904 = vld [vmem:[%s6] sm:$0x1]
  %v2906 = vperm.slane %v2904, 0
  %v2908 = vadd.f32 %v2906, 0.0
  %v2909 = vpack.c.bf16 %v2888, %v2888
  %v2910 = vld [vmem:[%s5] sm:$0xf]
  %v2911 = vld [vmem:[%s5 + $0x4] sm:$0xf]
  %v2912 = vld [vmem:[%s5 + $0x8] sm:$0xf]
  %v2913 = vld [vmem:[%s5 + $0xc] sm:$0xf]
  %v2914 = vld [vmem:[%s5 + $0x10] sm:$0xf]
  %v2915 = vld [vmem:[%s5 + $0x14] sm:$0xf]
  %v2916 = vld [vmem:[%s5 + $0x18] sm:$0xf]
  %v2917 = vld [vmem:[%s5 + $0x1c] sm:$0xf]
  %v2918 = vld [vmem:[%s5 + $0x20] sm:$0xf]
  %v2919 = vld [vmem:[%s5 + $0x24] sm:$0xf]
  %v2920 = vld [vmem:[%s5 + $0x28] sm:$0xf]
  %v2921 = vld [vmem:[%s5 + $0x2c] sm:$0xf]
  %v2922 = vld [vmem:[%s5 + $0x30] sm:$0xf]
  %v2923 = vld [vmem:[%s5 + $0x34] sm:$0xf]
  %v2924 = vld [vmem:[%s5 + $0x38] sm:$0xf]
  %v2925 = vld [vmem:[%s5 + $0x3c] sm:$0xf]
  %v2942 = vunpack.c.l.b16 %v2910
  %v2943 = vunpack.c.l.b16 %v2911
  %v2944 = vunpack.c.l.b16 %v2912
  %v2945 = vunpack.c.l.b16 %v2913
  %v2946 = vunpack.c.l.b16 %v2914
  %v2947 = vunpack.c.l.b16 %v2915
  %v2948 = vunpack.c.l.b16 %v2916
  %v2949 = vunpack.c.l.b16 %v2917
  %v2950 = vunpack.c.l.b16 %v2918
  %v2951 = vunpack.c.l.b16 %v2919
  %v2952 = vunpack.c.l.b16 %v2920
  %v2953 = vunpack.c.l.b16 %v2921
  %v2954 = vunpack.c.l.b16 %v2922
  %v2955 = vunpack.c.l.b16 %v2923
  %v2956 = vunpack.c.l.b16 %v2924
  %v2957 = vunpack.c.l.b16 %v2925
  %v2958 = vpack.c.b16 %v2943, %v2942
  %v2959 = vpack.c.b16 %v2945, %v2944
  %v2960 = vpack.c.b16 %v2947, %v2946
  %v2961 = vpack.c.b16 %v2949, %v2948
  %v2962 = vpack.c.b16 %v2951, %v2950
  %v2963 = vpack.c.b16 %v2953, %v2952
  %v2964 = vpack.c.b16 %v2955, %v2954
  %v2965 = vpack.c.b16 %v2957, %v2956
  %2974 = vmatpush.bf16.msra.mxu0 %v2965
  %2975 = vmatpush.bf16.msra.mxu0 %v2964
  %2976 = vmatpush.bf16.msra.mxu0 %v2963
  %2977 = vmatpush.bf16.msra.mxu0 %v2962
  %2978 = vmatpush.bf16.msra.mxu0 %v2961
  %2979 = vmatpush.bf16.msra.mxu0 %v2960
  %2980 = vmatpush.bf16.msra.mxu0 %v2959
  %2981 = vmatpush.bf16.msra.mxu0 %v2958
  %2982 = vmatmul.bf16.gmra.mxu0 %v2909
  %v2983 = vpop.f32.mrf.mxu0
  %v2984 = vadd.f32 0.0, %v2983
  %v2985 = vpop.f32.mrf.mxu0
  %2986 = vdwg.mxu0
  %v2987 = vadd.f32 %v2908, %v2984
  %v2988 = vpack.c.bf16 %v2889, %v2889
  %s2989 = scalar_lea.vmem %s5, 64
  %v2990 = vld [vmem:[%s2989] sm:$0xf]
  %v2991 = vld [vmem:[%s2989 + $0x4] sm:$0xf]
  %v2992 = vld [vmem:[%s2989 + $0x8] sm:$0xf]
  %v2993 = vld [vmem:[%s2989 + $0xc] sm:$0xf]
  %v2994 = vld [vmem:[%s2989 + $0x10] sm:$0xf]
  %v2995 = vld [vmem:[%s2989 + $0x14] sm:$0xf]
  %v2996 = vld [vmem:[%s2989 + $0x18] sm:$0xf]
  %v2997 = vld [vmem:[%s2989 + $0x1c] sm:$0xf]
  %v2998 = vld [vmem:[%s2989 + $0x20] sm:$0xf]
  %v2999 = vld [vmem:[%s2989 + $0x24] sm:$0xf]
  %v3000 = vld [vmem:[%s2989 + $0x28] sm:$0xf]
  %v3001 = vld [vmem:[%s2989 + $0x2c] sm:$0xf]
  %v3002 = vld [vmem:[%s2989 + $0x30] sm:$0xf]
  %v3003 = vld [vmem:[%s2989 + $0x34] sm:$0xf]
  %v3004 = vld [vmem:[%s2989 + $0x38] sm:$0xf]
  %v3005 = vld [vmem:[%s2989 + $0x3c] sm:$0xf]
  %v3022 = vunpack.c.l.b16 %v2990
  %v3023 = vunpack.c.l.b16 %v2991
  %v3024 = vunpack.c.l.b16 %v2992
  %v3025 = vunpack.c.l.b16 %v2993
  %v3026 = vunpack.c.l.b16 %v2994
  %v3027 = vunpack.c.l.b16 %v2995
  %v3028 = vunpack.c.l.b16 %v2996
  %v3029 = vunpack.c.l.b16 %v2997
  %v3030 = vunpack.c.l.b16 %v2998
  %v3031 = vunpack.c.l.b16 %v2999
  %v3032 = vunpack.c.l.b16 %v3000
  %v3033 = vunpack.c.l.b16 %v3001
  %v3034 = vunpack.c.l.b16 %v3002
  %v3035 = vunpack.c.l.b16 %v3003
  %v3036 = vunpack.c.l.b16 %v3004
  %v3037 = vunpack.c.l.b16 %v3005
  %v3038 = vpack.c.b16 %v3023, %v3022
  %v3039 = vpack.c.b16 %v3025, %v3024
  %v3040 = vpack.c.b16 %v3027, %v3026
  %v3041 = vpack.c.b16 %v3029, %v3028
  %v3042 = vpack.c.b16 %v3031, %v3030
  %v3043 = vpack.c.b16 %v3033, %v3032
  %v3044 = vpack.c.b16 %v3035, %v3034
  %v3045 = vpack.c.b16 %v3037, %v3036
  %3054 = vmatpush.bf16.msra.mxu0 %v3045
  %3055 = vmatpush.bf16.msra.mxu0 %v3044
  %3056 = vmatpush.bf16.msra.mxu0 %v3043
  %3057 = vmatpush.bf16.msra.mxu0 %v3042
  %3058 = vmatpush.bf16.msra.mxu0 %v3041
  %3059 = vmatpush.bf16.msra.mxu0 %v3040
  %3060 = vmatpush.bf16.msra.mxu0 %v3039
  %3061 = vmatpush.bf16.msra.mxu0 %v3038
  %3062 = vmatmul.bf16.gmra.mxu0 %v2988
  %v3063 = vpop.f32.mrf.mxu0
  %v3064 = vadd.f32 0.0, %v3063
  %v3065 = vpop.f32.mrf.mxu0
  %3066 = vdwg.mxu0
  %v3067 = vadd.f32 %v2987, %v3064
  %v3068 = vpack.c.bf16 %v2890, %v2890
  %s3069 = scalar_lea.vmem %s5, 128
  %v3070 = vld [vmem:[%s3069] sm:$0xf]
  %v3071 = vld [vmem:[%s3069 + $0x4] sm:$0xf]
  %v3072 = vld [vmem:[%s3069 + $0x8] sm:$0xf]
  %v3073 = vld [vmem:[%s3069 + $0xc] sm:$0xf]
  %v3074 = vld [vmem:[%s3069 + $0x10] sm:$0xf]
  %v3075 = vld [vmem:[%s3069 + $0x14] sm:$0xf]
  %v3076 = vld [vmem:[%s3069 + $0x18] sm:$0xf]
  %v3077 = vld [vmem:[%s3069 + $0x1c] sm:$0xf]
  %v3078 = vld [vmem:[%s3069 + $0x20] sm:$0xf]
  %v3079 = vld [vmem:[%s3069 + $0x24] sm:$0xf]
  %v3080 = vld [vmem:[%s3069 + $0x28] sm:$0xf]
  %v3081 = vld [vmem:[%s3069 + $0x2c] sm:$0xf]
  %v3082 = vld [vmem:[%s3069 + $0x30] sm:$0xf]
  %v3083 = vld [vmem:[%s3069 + $0x34] sm:$0xf]
  %v3084 = vld [vmem:[%s3069 + $0x38] sm:$0xf]
  %v3085 = vld [vmem:[%s3069 + $0x3c] sm:$0xf]
  %v3102 = vunpack.c.l.b16 %v3070
  %v3103 = vunpack.c.l.b16 %v3071
  %v3104 = vunpack.c.l.b16 %v3072
  %v3105 = vunpack.c.l.b16 %v3073
  %v3106 = vunpack.c.l.b16 %v3074
  %v3107 = vunpack.c.l.b16 %v3075
  %v3108 = vunpack.c.l.b16 %v3076
  %v3109 = vunpack.c.l.b16 %v3077
  %v3110 = vunpack.c.l.b16 %v3078
  %v3111 = vunpack.c.l.b16 %v3079
  %v3112 = vunpack.c.l.b16 %v3080
  %v3113 = vunpack.c.l.b16 %v3081
  %v3114 = vunpack.c.l.b16 %v3082
  %v3115 = vunpack.c.l.b16 %v3083
  %v3116 = vunpack.c.l.b16 %v3084
  %v3117 = vunpack.c.l.b16 %v3085
  %v3118 = vpack.c.b16 %v3103, %v3102
  %v3119 = vpack.c.b16 %v3105, %v3104
  %v3120 = vpack.c.b16 %v3107, %v3106
  %v3121 = vpack.c.b16 %v3109, %v3108
  %v3122 = vpack.c.b16 %v3111, %v3110
  %v3123 = vpack.c.b16 %v3113, %v3112
  %v3124 = vpack.c.b16 %v3115, %v3114
  %v3125 = vpack.c.b16 %v3117, %v3116
  %3134 = vmatpush.bf16.msra.mxu0 %v3125
  %3135 = vmatpush.bf16.msra.mxu0 %v3124
  %3136 = vmatpush.bf16.msra.mxu0 %v3123
  %3137 = vmatpush.bf16.msra.mxu0 %v3122
  %3138 = vmatpush.bf16.msra.mxu0 %v3121
  %3139 = vmatpush.bf16.msra.mxu0 %v3120
  %3140 = vmatpush.bf16.msra.mxu0 %v3119
  %3141 = vmatpush.bf16.msra.mxu0 %v3118
  %3142 = vmatmul.bf16.gmra.mxu0 %v3068
  %v3143 = vpop.f32.mrf.mxu0
  %v3144 = vadd.f32 0.0, %v3143
  %v3145 = vpop.f32.mrf.mxu0
  %3146 = vdwg.mxu0
  %v3147 = vadd.f32 %v3067, %v3144
  %v3148 = vpack.c.bf16 %v2891, %v2891
  %s3149 = scalar_lea.vmem %s5, 192
  %v3150 = vld [vmem:[%s3149] sm:$0xf]
  %v3151 = vld [vmem:[%s3149 + $0x4] sm:$0xf]
  %v3152 = vld [vmem:[%s3149 + $0x8] sm:$0xf]
  %v3153 = vld [vmem:[%s3149 + $0xc] sm:$0xf]
  %v3154 = vld [vmem:[%s3149 + $0x10] sm:$0xf]
  %v3155 = vld [vmem:[%s3149 + $0x14] sm:$0xf]
  %v3156 = vld [vmem:[%s3149 + $0x18] sm:$0xf]
  %v3157 = vld [vmem:[%s3149 + $0x1c] sm:$0xf]
  %v3158 = vld [vmem:[%s3149 + $0x20] sm:$0xf]
  %v3159 = vld [vmem:[%s3149 + $0x24] sm:$0xf]
  %v3160 = vld [vmem:[%s3149 + $0x28] sm:$0xf]
  %v3161 = vld [vmem:[%s3149 + $0x2c] sm:$0xf]
  %v3162 = vld [vmem:[%s3149 + $0x30] sm:$0xf]
  %v3163 = vld [vmem:[%s3149 + $0x34] sm:$0xf]
  %v3164 = vld [vmem:[%s3149 + $0x38] sm:$0xf]
  %v3165 = vld [vmem:[%s3149 + $0x3c] sm:$0xf]
  %v3182 = vunpack.c.l.b16 %v3150
  %v3183 = vunpack.c.l.b16 %v3151
  %v3184 = vunpack.c.l.b16 %v3152
  %v3185 = vunpack.c.l.b16 %v3153
  %v3186 = vunpack.c.l.b16 %v3154
  %v3187 = vunpack.c.l.b16 %v3155
  %v3188 = vunpack.c.l.b16 %v3156
  %v3189 = vunpack.c.l.b16 %v3157
  %v3190 = vunpack.c.l.b16 %v3158
  %v3191 = vunpack.c.l.b16 %v3159
  %v3192 = vunpack.c.l.b16 %v3160
  %v3193 = vunpack.c.l.b16 %v3161
  %v3194 = vunpack.c.l.b16 %v3162
  %v3195 = vunpack.c.l.b16 %v3163
  %v3196 = vunpack.c.l.b16 %v3164
  %v3197 = vunpack.c.l.b16 %v3165
  %v3198 = vpack.c.b16 %v3183, %v3182
  %v3199 = vpack.c.b16 %v3185, %v3184
  %v3200 = vpack.c.b16 %v3187, %v3186
  %v3201 = vpack.c.b16 %v3189, %v3188
  %v3202 = vpack.c.b16 %v3191, %v3190
  %v3203 = vpack.c.b16 %v3193, %v3192
  %v3204 = vpack.c.b16 %v3195, %v3194
  %v3205 = vpack.c.b16 %v3197, %v3196
  %3214 = vmatpush.bf16.msra.mxu0 %v3205
  %3215 = vmatpush.bf16.msra.mxu0 %v3204
  %3216 = vmatpush.bf16.msra.mxu0 %v3203
  %3217 = vmatpush.bf16.msra.mxu0 %v3202
  %3218 = vmatpush.bf16.msra.mxu0 %v3201
  %3219 = vmatpush.bf16.msra.mxu0 %v3200
  %3220 = vmatpush.bf16.msra.mxu0 %v3199
  %3221 = vmatpush.bf16.msra.mxu0 %v3198
  %3222 = vmatmul.bf16.gmra.mxu0 %v3148
  %v3223 = vpop.f32.mrf.mxu0
  %v3224 = vadd.f32 0.0, %v3223
  %v3225 = vpop.f32.mrf.mxu0
  %3226 = vdwg.mxu0
  %v3227 = vadd.f32 %v3147, %v3224
  %v3228 = vpack.c.bf16 %v2892, %v2892
  %s3229 = scalar_lea.vmem %s5, 256
  %v3230 = vld [vmem:[%s3229] sm:$0xf]
  %v3231 = vld [vmem:[%s3229 + $0x4] sm:$0xf]
  %v3232 = vld [vmem:[%s3229 + $0x8] sm:$0xf]
  %v3233 = vld [vmem:[%s3229 + $0xc] sm:$0xf]
  %v3234 = vld [vmem:[%s3229 + $0x10] sm:$0xf]
  %v3235 = vld [vmem:[%s3229 + $0x14] sm:$0xf]
  %v3236 = vld [vmem:[%s3229 + $0x18] sm:$0xf]
  %v3237 = vld [vmem:[%s3229 + $0x1c] sm:$0xf]
  %v3238 = vld [vmem:[%s3229 + $0x20] sm:$0xf]
  %v3239 = vld [vmem:[%s3229 + $0x24] sm:$0xf]
  %v3240 = vld [vmem:[%s3229 + $0x28] sm:$0xf]
  %v3241 = vld [vmem:[%s3229 + $0x2c] sm:$0xf]
  %v3242 = vld [vmem:[%s3229 + $0x30] sm:$0xf]
  %v3243 = vld [vmem:[%s3229 + $0x34] sm:$0xf]
  %v3244 = vld [vmem:[%s3229 + $0x38] sm:$0xf]
  %v3245 = vld [vmem:[%s3229 + $0x3c] sm:$0xf]
  %v3262 = vunpack.c.l.b16 %v3230
  %v3263 = vunpack.c.l.b16 %v3231
  %v3264 = vunpack.c.l.b16 %v3232
  %v3265 = vunpack.c.l.b16 %v3233
  %v3266 = vunpack.c.l.b16 %v3234
  %v3267 = vunpack.c.l.b16 %v3235
  %v3268 = vunpack.c.l.b16 %v3236
  %v3269 = vunpack.c.l.b16 %v3237
  %v3270 = vunpack.c.l.b16 %v3238
  %v3271 = vunpack.c.l.b16 %v3239
  %v3272 = vunpack.c.l.b16 %v3240
  %v3273 = vunpack.c.l.b16 %v3241
  %v3274 = vunpack.c.l.b16 %v3242
  %v3275 = vunpack.c.l.b16 %v3243
  %v3276 = vunpack.c.l.b16 %v3244
  %v3277 = vunpack.c.l.b16 %v3245
  %v3278 = vpack.c.b16 %v3263, %v3262
  %v3279 = vpack.c.b16 %v3265, %v3264
  %v3280 = vpack.c.b16 %v3267, %v3266
  %v3281 = vpack.c.b16 %v3269, %v3268
  %v3282 = vpack.c.b16 %v3271, %v3270
  %v3283 = vpack.c.b16 %v3273, %v3272
  %v3284 = vpack.c.b16 %v3275, %v3274
  %v3285 = vpack.c.b16 %v3277, %v3276
  %3294 = vmatpush.bf16.msra.mxu0 %v3285
  %3295 = vmatpush.bf16.msra.mxu0 %v3284
  %3296 = vmatpush.bf16.msra.mxu0 %v3283
  %3297 = vmatpush.bf16.msra.mxu0 %v3282
  %3298 = vmatpush.bf16.msra.mxu0 %v3281
  %3299 = vmatpush.bf16.msra.mxu0 %v3280
  %3300 = vmatpush.bf16.msra.mxu0 %v3279
  %3301 = vmatpush.bf16.msra.mxu0 %v3278
  %3302 = vmatmul.bf16.gmra.mxu0 %v3228
  %v3303 = vpop.f32.mrf.mxu0
  %v3304 = vadd.f32 0.0, %v3303
  %v3305 = vpop.f32.mrf.mxu0
  %3306 = vdwg.mxu0
  %v3307 = vadd.f32 %v3227, %v3304
  %v3308 = vpack.c.bf16 %v2893, %v2893
  %s3309 = scalar_lea.vmem %s5, 320
  %v3310 = vld [vmem:[%s3309] sm:$0xf]
  %v3311 = vld [vmem:[%s3309 + $0x4] sm:$0xf]
  %v3312 = vld [vmem:[%s3309 + $0x8] sm:$0xf]
  %v3313 = vld [vmem:[%s3309 + $0xc] sm:$0xf]
  %v3314 = vld [vmem:[%s3309 + $0x10] sm:$0xf]
  %v3315 = vld [vmem:[%s3309 + $0x14] sm:$0xf]
  %v3316 = vld [vmem:[%s3309 + $0x18] sm:$0xf]
  %v3317 = vld [vmem:[%s3309 + $0x1c] sm:$0xf]
  %v3318 = vld [vmem:[%s3309 + $0x20] sm:$0xf]
  %v3319 = vld [vmem:[%s3309 + $0x24] sm:$0xf]
  %v3320 = vld [vmem:[%s3309 + $0x28] sm:$0xf]
  %v3321 = vld [vmem:[%s3309 + $0x2c] sm:$0xf]
  %v3322 = vld [vmem:[%s3309 + $0x30] sm:$0xf]
  %v3323 = vld [vmem:[%s3309 + $0x34] sm:$0xf]
  %v3324 = vld [vmem:[%s3309 + $0x38] sm:$0xf]
  %v3325 = vld [vmem:[%s3309 + $0x3c] sm:$0xf]
  %v3342 = vunpack.c.l.b16 %v3310
  %v3343 = vunpack.c.l.b16 %v3311
  %v3344 = vunpack.c.l.b16 %v3312
  %v3345 = vunpack.c.l.b16 %v3313
  %v3346 = vunpack.c.l.b16 %v3314
  %v3347 = vunpack.c.l.b16 %v3315
  %v3348 = vunpack.c.l.b16 %v3316
  %v3349 = vunpack.c.l.b16 %v3317
  %v3350 = vunpack.c.l.b16 %v3318
  %v3351 = vunpack.c.l.b16 %v3319
  %v3352 = vunpack.c.l.b16 %v3320
  %v3353 = vunpack.c.l.b16 %v3321
  %v3354 = vunpack.c.l.b16 %v3322
  %v3355 = vunpack.c.l.b16 %v3323
  %v3356 = vunpack.c.l.b16 %v3324
  %v3357 = vunpack.c.l.b16 %v3325
  %v3358 = vpack.c.b16 %v3343, %v3342
  %v3359 = vpack.c.b16 %v3345, %v3344
  %v3360 = vpack.c.b16 %v3347, %v3346
  %v3361 = vpack.c.b16 %v3349, %v3348
  %v3362 = vpack.c.b16 %v3351, %v3350
  %v3363 = vpack.c.b16 %v3353, %v3352
  %v3364 = vpack.c.b16 %v3355, %v3354
  %v3365 = vpack.c.b16 %v3357, %v3356
  %3374 = vmatpush.bf16.msra.mxu0 %v3365
  %3375 = vmatpush.bf16.msra.mxu0 %v3364
  %3376 = vmatpush.bf16.msra.mxu0 %v3363
  %3377 = vmatpush.bf16.msra.mxu0 %v3362
  %3378 = vmatpush.bf16.msra.mxu0 %v3361
  %3379 = vmatpush.bf16.msra.mxu0 %v3360
  %3380 = vmatpush.bf16.msra.mxu0 %v3359
  %3381 = vmatpush.bf16.msra.mxu0 %v3358
  %3382 = vmatmul.bf16.gmra.mxu0 %v3308
  %v3383 = vpop.f32.mrf.mxu0
  %v3384 = vadd.f32 0.0, %v3383
  %v3385 = vpop.f32.mrf.mxu0
  %3386 = vdwg.mxu0
  %v3387 = vadd.f32 %v3307, %v3384
  %v3388 = vpack.c.bf16 %v2894, %v2894
  %s3389 = scalar_lea.vmem %s5, 384
  %v3390 = vld [vmem:[%s3389] sm:$0xf]
  %v3391 = vld [vmem:[%s3389 + $0x4] sm:$0xf]
  %v3392 = vld [vmem:[%s3389 + $0x8] sm:$0xf]
  %v3393 = vld [vmem:[%s3389 + $0xc] sm:$0xf]
  %v3394 = vld [vmem:[%s3389 + $0x10] sm:$0xf]
  %v3395 = vld [vmem:[%s3389 + $0x14] sm:$0xf]
  %v3396 = vld [vmem:[%s3389 + $0x18] sm:$0xf]
  %v3397 = vld [vmem:[%s3389 + $0x1c] sm:$0xf]
  %v3398 = vld [vmem:[%s3389 + $0x20] sm:$0xf]
  %v3399 = vld [vmem:[%s3389 + $0x24] sm:$0xf]
  %v3400 = vld [vmem:[%s3389 + $0x28] sm:$0xf]
  %v3401 = vld [vmem:[%s3389 + $0x2c] sm:$0xf]
  %v3402 = vld [vmem:[%s3389 + $0x30] sm:$0xf]
  %v3403 = vld [vmem:[%s3389 + $0x34] sm:$0xf]
  %v3404 = vld [vmem:[%s3389 + $0x38] sm:$0xf]
  %v3405 = vld [vmem:[%s3389 + $0x3c] sm:$0xf]
  %v3422 = vunpack.c.l.b16 %v3390
  %v3423 = vunpack.c.l.b16 %v3391
  %v3424 = vunpack.c.l.b16 %v3392
  %v3425 = vunpack.c.l.b16 %v3393
  %v3426 = vunpack.c.l.b16 %v3394
  %v3427 = vunpack.c.l.b16 %v3395
  %v3428 = vunpack.c.l.b16 %v3396
  %v3429 = vunpack.c.l.b16 %v3397
  %v3430 = vunpack.c.l.b16 %v3398
  %v3431 = vunpack.c.l.b16 %v3399
  %v3432 = vunpack.c.l.b16 %v3400
  %v3433 = vunpack.c.l.b16 %v3401
  %v3434 = vunpack.c.l.b16 %v3402
  %v3435 = vunpack.c.l.b16 %v3403
  %v3436 = vunpack.c.l.b16 %v3404
  %v3437 = vunpack.c.l.b16 %v3405
  %v3438 = vpack.c.b16 %v3423, %v3422
  %v3439 = vpack.c.b16 %v3425, %v3424
  %v3440 = vpack.c.b16 %v3427, %v3426
  %v3441 = vpack.c.b16 %v3429, %v3428
  %v3442 = vpack.c.b16 %v3431, %v3430
  %v3443 = vpack.c.b16 %v3433, %v3432
  %v3444 = vpack.c.b16 %v3435, %v3434
  %v3445 = vpack.c.b16 %v3437, %v3436
  %3454 = vmatpush.bf16.msra.mxu0 %v3445
  %3455 = vmatpush.bf16.msra.mxu0 %v3444
  %3456 = vmatpush.bf16.msra.mxu0 %v3443
  %3457 = vmatpush.bf16.msra.mxu0 %v3442
  %3458 = vmatpush.bf16.msra.mxu0 %v3441
  %3459 = vmatpush.bf16.msra.mxu0 %v3440
  %3460 = vmatpush.bf16.msra.mxu0 %v3439
  %3461 = vmatpush.bf16.msra.mxu0 %v3438
  %3462 = vmatmul.bf16.gmra.mxu0 %v3388
  %v3463 = vpop.f32.mrf.mxu0
  %v3464 = vadd.f32 0.0, %v3463
  %v3465 = vpop.f32.mrf.mxu0
  %3466 = vdwg.mxu0
  %v3467 = vadd.f32 %v3387, %v3464
  %v3468 = vpack.c.bf16 %v2895, %v2895
  %s3469 = scalar_lea.vmem %s5, 448
  %v3470 = vld [vmem:[%s3469] sm:$0xf]
  %v3471 = vld [vmem:[%s3469 + $0x4] sm:$0xf]
  %v3472 = vld [vmem:[%s3469 + $0x8] sm:$0xf]
  %v3473 = vld [vmem:[%s3469 + $0xc] sm:$0xf]
  %v3474 = vld [vmem:[%s3469 + $0x10] sm:$0xf]
  %v3475 = vld [vmem:[%s3469 + $0x14] sm:$0xf]
  %v3476 = vld [vmem:[%s3469 + $0x18] sm:$0xf]
  %v3477 = vld [vmem:[%s3469 + $0x1c] sm:$0xf]
  %v3478 = vld [vmem:[%s3469 + $0x20] sm:$0xf]
  %v3479 = vld [vmem:[%s3469 + $0x24] sm:$0xf]
  %v3480 = vld [vmem:[%s3469 + $0x28] sm:$0xf]
  %v3481 = vld [vmem:[%s3469 + $0x2c] sm:$0xf]
  %v3482 = vld [vmem:[%s3469 + $0x30] sm:$0xf]
  %v3483 = vld [vmem:[%s3469 + $0x34] sm:$0xf]
  %v3484 = vld [vmem:[%s3469 + $0x38] sm:$0xf]
  %v3485 = vld [vmem:[%s3469 + $0x3c] sm:$0xf]
  %v3502 = vunpack.c.l.b16 %v3470
  %v3503 = vunpack.c.l.b16 %v3471
  %v3504 = vunpack.c.l.b16 %v3472
  %v3505 = vunpack.c.l.b16 %v3473
  %v3506 = vunpack.c.l.b16 %v3474
  %v3507 = vunpack.c.l.b16 %v3475
  %v3508 = vunpack.c.l.b16 %v3476
  %v3509 = vunpack.c.l.b16 %v3477
  %v3510 = vunpack.c.l.b16 %v3478
  %v3511 = vunpack.c.l.b16 %v3479
  %v3512 = vunpack.c.l.b16 %v3480
  %v3513 = vunpack.c.l.b16 %v3481
  %v3514 = vunpack.c.l.b16 %v3482
  %v3515 = vunpack.c.l.b16 %v3483
  %v3516 = vunpack.c.l.b16 %v3484
  %v3517 = vunpack.c.l.b16 %v3485
  %v3518 = vpack.c.b16 %v3503, %v3502
  %v3519 = vpack.c.b16 %v3505, %v3504
  %v3520 = vpack.c.b16 %v3507, %v3506
  %v3521 = vpack.c.b16 %v3509, %v3508
  %v3522 = vpack.c.b16 %v3511, %v3510
  %v3523 = vpack.c.b16 %v3513, %v3512
  %v3524 = vpack.c.b16 %v3515, %v3514
  %v3525 = vpack.c.b16 %v3517, %v3516
  %3534 = vmatpush.bf16.msra.mxu0 %v3525
  %3535 = vmatpush.bf16.msra.mxu0 %v3524
  %3536 = vmatpush.bf16.msra.mxu0 %v3523
  %3537 = vmatpush.bf16.msra.mxu0 %v3522
  %3538 = vmatpush.bf16.msra.mxu0 %v3521
  %3539 = vmatpush.bf16.msra.mxu0 %v3520
  %3540 = vmatpush.bf16.msra.mxu0 %v3519
  %3541 = vmatpush.bf16.msra.mxu0 %v3518
  %3542 = vmatmul.bf16.gmra.mxu0 %v3468
  %v3543 = vpop.f32.mrf.mxu0
  %v3544 = vadd.f32 0.0, %v3543
  %v3545 = vpop.f32.mrf.mxu0
  %3546 = vdwg.mxu0
  %v3547 = vadd.f32 %v3467, %v3544
  %v3548 = vpack.c.bf16 %v2896, %v2896
  %s3549 = scalar_lea.vmem %s5, 512
  %v3550 = vld [vmem:[%s3549] sm:$0xf]
  %v3551 = vld [vmem:[%s3549 + $0x4] sm:$0xf]
  %v3552 = vld [vmem:[%s3549 + $0x8] sm:$0xf]
  %v3553 = vld [vmem:[%s3549 + $0xc] sm:$0xf]
  %v3554 = vld [vmem:[%s3549 + $0x10] sm:$0xf]
  %v3555 = vld [vmem:[%s3549 + $0x14] sm:$0xf]
  %v3556 = vld [vmem:[%s3549 + $0x18] sm:$0xf]
  %v3557 = vld [vmem:[%s3549 + $0x1c] sm:$0xf]
  %v3558 = vld [vmem:[%s3549 + $0x20] sm:$0xf]
  %v3559 = vld [vmem:[%s3549 + $0x24] sm:$0xf]
  %v3560 = vld [vmem:[%s3549 + $0x28] sm:$0xf]
  %v3561 = vld [vmem:[%s3549 + $0x2c] sm:$0xf]
  %v3562 = vld [vmem:[%s3549 + $0x30] sm:$0xf]
  %v3563 = vld [vmem:[%s3549 + $0x34] sm:$0xf]
  %v3564 = vld [vmem:[%s3549 + $0x38] sm:$0xf]
  %v3565 = vld [vmem:[%s3549 + $0x3c] sm:$0xf]
  %v3582 = vunpack.c.l.b16 %v3550
  %v3583 = vunpack.c.l.b16 %v3551
  %v3584 = vunpack.c.l.b16 %v3552
  %v3585 = vunpack.c.l.b16 %v3553
  %v3586 = vunpack.c.l.b16 %v3554
  %v3587 = vunpack.c.l.b16 %v3555
  %v3588 = vunpack.c.l.b16 %v3556
  %v3589 = vunpack.c.l.b16 %v3557
  %v3590 = vunpack.c.l.b16 %v3558
  %v3591 = vunpack.c.l.b16 %v3559
  %v3592 = vunpack.c.l.b16 %v3560
  %v3593 = vunpack.c.l.b16 %v3561
  %v3594 = vunpack.c.l.b16 %v3562
  %v3595 = vunpack.c.l.b16 %v3563
  %v3596 = vunpack.c.l.b16 %v3564
  %v3597 = vunpack.c.l.b16 %v3565
  %v3598 = vpack.c.b16 %v3583, %v3582
  %v3599 = vpack.c.b16 %v3585, %v3584
  %v3600 = vpack.c.b16 %v3587, %v3586
  %v3601 = vpack.c.b16 %v3589, %v3588
  %v3602 = vpack.c.b16 %v3591, %v3590
  %v3603 = vpack.c.b16 %v3593, %v3592
  %v3604 = vpack.c.b16 %v3595, %v3594
  %v3605 = vpack.c.b16 %v3597, %v3596
  %3614 = vmatpush.bf16.msra.mxu0 %v3605
  %3615 = vmatpush.bf16.msra.mxu0 %v3604
  %3616 = vmatpush.bf16.msra.mxu0 %v3603
  %3617 = vmatpush.bf16.msra.mxu0 %v3602
  %3618 = vmatpush.bf16.msra.mxu0 %v3601
  %3619 = vmatpush.bf16.msra.mxu0 %v3600
  %3620 = vmatpush.bf16.msra.mxu0 %v3599
  %3621 = vmatpush.bf16.msra.mxu0 %v3598
  %3622 = vmatmul.bf16.gmra.mxu0 %v3548
  %v3623 = vpop.f32.mrf.mxu0
  %v3624 = vadd.f32 0.0, %v3623
  %v3625 = vpop.f32.mrf.mxu0
  %3626 = vdwg.mxu0
  %v3627 = vadd.f32 %v3547, %v3624
  %v3628 = vpack.c.bf16 %v2897, %v2897
  %s3629 = scalar_lea.vmem %s5, 576
  %v3630 = vld [vmem:[%s3629] sm:$0xf]
  %v3631 = vld [vmem:[%s3629 + $0x4] sm:$0xf]
  %v3632 = vld [vmem:[%s3629 + $0x8] sm:$0xf]
  %v3633 = vld [vmem:[%s3629 + $0xc] sm:$0xf]
  %v3634 = vld [vmem:[%s3629 + $0x10] sm:$0xf]
  %v3635 = vld [vmem:[%s3629 + $0x14] sm:$0xf]
  %v3636 = vld [vmem:[%s3629 + $0x18] sm:$0xf]
  %v3637 = vld [vmem:[%s3629 + $0x1c] sm:$0xf]
  %v3638 = vld [vmem:[%s3629 + $0x20] sm:$0xf]
  %v3639 = vld [vmem:[%s3629 + $0x24] sm:$0xf]
  %v3640 = vld [vmem:[%s3629 + $0x28] sm:$0xf]
  %v3641 = vld [vmem:[%s3629 + $0x2c] sm:$0xf]
  %v3642 = vld [vmem:[%s3629 + $0x30] sm:$0xf]
  %v3643 = vld [vmem:[%s3629 + $0x34] sm:$0xf]
  %v3644 = vld [vmem:[%s3629 + $0x38] sm:$0xf]
  %v3645 = vld [vmem:[%s3629 + $0x3c] sm:$0xf]
  %v3662 = vunpack.c.l.b16 %v3630
  %v3663 = vunpack.c.l.b16 %v3631
  %v3664 = vunpack.c.l.b16 %v3632
  %v3665 = vunpack.c.l.b16 %v3633
  %v3666 = vunpack.c.l.b16 %v3634
  %v3667 = vunpack.c.l.b16 %v3635
  %v3668 = vunpack.c.l.b16 %v3636
  %v3669 = vunpack.c.l.b16 %v3637
  %v3670 = vunpack.c.l.b16 %v3638
  %v3671 = vunpack.c.l.b16 %v3639
  %v3672 = vunpack.c.l.b16 %v3640
  %v3673 = vunpack.c.l.b16 %v3641
  %v3674 = vunpack.c.l.b16 %v3642
  %v3675 = vunpack.c.l.b16 %v3643
  %v3676 = vunpack.c.l.b16 %v3644
  %v3677 = vunpack.c.l.b16 %v3645
  %v3678 = vpack.c.b16 %v3663, %v3662
  %v3679 = vpack.c.b16 %v3665, %v3664
  %v3680 = vpack.c.b16 %v3667, %v3666
  %v3681 = vpack.c.b16 %v3669, %v3668
  %v3682 = vpack.c.b16 %v3671, %v3670
  %v3683 = vpack.c.b16 %v3673, %v3672
  %v3684 = vpack.c.b16 %v3675, %v3674
  %v3685 = vpack.c.b16 %v3677, %v3676
  %3694 = vmatpush.bf16.msra.mxu0 %v3685
  %3695 = vmatpush.bf16.msra.mxu0 %v3684
  %3696 = vmatpush.bf16.msra.mxu0 %v3683
  %3697 = vmatpush.bf16.msra.mxu0 %v3682
  %3698 = vmatpush.bf16.msra.mxu0 %v3681
  %3699 = vmatpush.bf16.msra.mxu0 %v3680
  %3700 = vmatpush.bf16.msra.mxu0 %v3679
  %3701 = vmatpush.bf16.msra.mxu0 %v3678
  %3702 = vmatmul.bf16.gmra.mxu0 %v3628
  %v3703 = vpop.f32.mrf.mxu0
  %v3704 = vadd.f32 0.0, %v3703
  %v3705 = vpop.f32.mrf.mxu0
  %3706 = vdwg.mxu0
  %v3707 = vadd.f32 %v3627, %v3704
  %v3708 = vpack.c.bf16 %v2898, %v2898
  %s3709 = scalar_lea.vmem %s5, 640
  %v3710 = vld [vmem:[%s3709] sm:$0xf]
  %v3711 = vld [vmem:[%s3709 + $0x4] sm:$0xf]
  %v3712 = vld [vmem:[%s3709 + $0x8] sm:$0xf]
  %v3713 = vld [vmem:[%s3709 + $0xc] sm:$0xf]
  %v3714 = vld [vmem:[%s3709 + $0x10] sm:$0xf]
  %v3715 = vld [vmem:[%s3709 + $0x14] sm:$0xf]
  %v3716 = vld [vmem:[%s3709 + $0x18] sm:$0xf]
  %v3717 = vld [vmem:[%s3709 + $0x1c] sm:$0xf]
  %v3718 = vld [vmem:[%s3709 + $0x20] sm:$0xf]
  %v3719 = vld [vmem:[%s3709 + $0x24] sm:$0xf]
  %v3720 = vld [vmem:[%s3709 + $0x28] sm:$0xf]
  %v3721 = vld [vmem:[%s3709 + $0x2c] sm:$0xf]
  %v3722 = vld [vmem:[%s3709 + $0x30] sm:$0xf]
  %v3723 = vld [vmem:[%s3709 + $0x34] sm:$0xf]
  %v3724 = vld [vmem:[%s3709 + $0x38] sm:$0xf]
  %v3725 = vld [vmem:[%s3709 + $0x3c] sm:$0xf]
  %v3742 = vunpack.c.l.b16 %v3710
  %v3743 = vunpack.c.l.b16 %v3711
  %v3744 = vunpack.c.l.b16 %v3712
  %v3745 = vunpack.c.l.b16 %v3713
  %v3746 = vunpack.c.l.b16 %v3714
  %v3747 = vunpack.c.l.b16 %v3715
  %v3748 = vunpack.c.l.b16 %v3716
  %v3749 = vunpack.c.l.b16 %v3717
  %v3750 = vunpack.c.l.b16 %v3718
  %v3751 = vunpack.c.l.b16 %v3719
  %v3752 = vunpack.c.l.b16 %v3720
  %v3753 = vunpack.c.l.b16 %v3721
  %v3754 = vunpack.c.l.b16 %v3722
  %v3755 = vunpack.c.l.b16 %v3723
  %v3756 = vunpack.c.l.b16 %v3724
  %v3757 = vunpack.c.l.b16 %v3725
  %v3758 = vpack.c.b16 %v3743, %v3742
  %v3759 = vpack.c.b16 %v3745, %v3744
  %v3760 = vpack.c.b16 %v3747, %v3746
  %v3761 = vpack.c.b16 %v3749, %v3748
  %v3762 = vpack.c.b16 %v3751, %v3750
  %v3763 = vpack.c.b16 %v3753, %v3752
  %v3764 = vpack.c.b16 %v3755, %v3754
  %v3765 = vpack.c.b16 %v3757, %v3756
  %3774 = vmatpush.bf16.msra.mxu0 %v3765
  %3775 = vmatpush.bf16.msra.mxu0 %v3764
  %3776 = vmatpush.bf16.msra.mxu0 %v3763
  %3777 = vmatpush.bf16.msra.mxu0 %v3762
  %3778 = vmatpush.bf16.msra.mxu0 %v3761
  %3779 = vmatpush.bf16.msra.mxu0 %v3760
  %3780 = vmatpush.bf16.msra.mxu0 %v3759
  %3781 = vmatpush.bf16.msra.mxu0 %v3758
  %3782 = vmatmul.bf16.gmra.mxu0 %v3708
  %v3783 = vpop.f32.mrf.mxu0
  %v3784 = vadd.f32 0.0, %v3783
  %v3785 = vpop.f32.mrf.mxu0
  %3786 = vdwg.mxu0
  %v3787 = vadd.f32 %v3707, %v3784
  %v3788 = vpack.c.bf16 %v2899, %v2899
  %s3789 = scalar_lea.vmem %s5, 704
  %v3790 = vld [vmem:[%s3789] sm:$0xf]
  %v3791 = vld [vmem:[%s3789 + $0x4] sm:$0xf]
  %v3792 = vld [vmem:[%s3789 + $0x8] sm:$0xf]
  %v3793 = vld [vmem:[%s3789 + $0xc] sm:$0xf]
  %v3794 = vld [vmem:[%s3789 + $0x10] sm:$0xf]
  %v3795 = vld [vmem:[%s3789 + $0x14] sm:$0xf]
  %v3796 = vld [vmem:[%s3789 + $0x18] sm:$0xf]
  %v3797 = vld [vmem:[%s3789 + $0x1c] sm:$0xf]
  %v3798 = vld [vmem:[%s3789 + $0x20] sm:$0xf]
  %v3799 = vld [vmem:[%s3789 + $0x24] sm:$0xf]
  %v3800 = vld [vmem:[%s3789 + $0x28] sm:$0xf]
  %v3801 = vld [vmem:[%s3789 + $0x2c] sm:$0xf]
  %v3802 = vld [vmem:[%s3789 + $0x30] sm:$0xf]
  %v3803 = vld [vmem:[%s3789 + $0x34] sm:$0xf]
  %v3804 = vld [vmem:[%s3789 + $0x38] sm:$0xf]
  %v3805 = vld [vmem:[%s3789 + $0x3c] sm:$0xf]
  %v3822 = vunpack.c.l.b16 %v3790
  %v3823 = vunpack.c.l.b16 %v3791
  %v3824 = vunpack.c.l.b16 %v3792
  %v3825 = vunpack.c.l.b16 %v3793
  %v3826 = vunpack.c.l.b16 %v3794
  %v3827 = vunpack.c.l.b16 %v3795
  %v3828 = vunpack.c.l.b16 %v3796
  %v3829 = vunpack.c.l.b16 %v3797
  %v3830 = vunpack.c.l.b16 %v3798
  %v3831 = vunpack.c.l.b16 %v3799
  %v3832 = vunpack.c.l.b16 %v3800
  %v3833 = vunpack.c.l.b16 %v3801
  %v3834 = vunpack.c.l.b16 %v3802
  %v3835 = vunpack.c.l.b16 %v3803
  %v3836 = vunpack.c.l.b16 %v3804
  %v3837 = vunpack.c.l.b16 %v3805
  %v3838 = vpack.c.b16 %v3823, %v3822
  %v3839 = vpack.c.b16 %v3825, %v3824
  %v3840 = vpack.c.b16 %v3827, %v3826
  %v3841 = vpack.c.b16 %v3829, %v3828
  %v3842 = vpack.c.b16 %v3831, %v3830
  %v3843 = vpack.c.b16 %v3833, %v3832
  %v3844 = vpack.c.b16 %v3835, %v3834
  %v3845 = vpack.c.b16 %v3837, %v3836
  %3854 = vmatpush.bf16.msra.mxu0 %v3845
  %3855 = vmatpush.bf16.msra.mxu0 %v3844
  %3856 = vmatpush.bf16.msra.mxu0 %v3843
  %3857 = vmatpush.bf16.msra.mxu0 %v3842
  %3858 = vmatpush.bf16.msra.mxu0 %v3841
  %3859 = vmatpush.bf16.msra.mxu0 %v3840
  %3860 = vmatpush.bf16.msra.mxu0 %v3839
  %3861 = vmatpush.bf16.msra.mxu0 %v3838
  %3862 = vmatmul.bf16.gmra.mxu0 %v3788
  %v3863 = vpop.f32.mrf.mxu0
  %v3864 = vadd.f32 0.0, %v3863
  %v3865 = vpop.f32.mrf.mxu0
  %3866 = vdwg.mxu0
  %v3867 = vadd.f32 %v3787, %v3864
  %v3868 = vpack.c.bf16 %v2900, %v2900
  %s3869 = scalar_lea.vmem %s5, 768
  %v3870 = vld [vmem:[%s3869] sm:$0xf]
  %v3871 = vld [vmem:[%s3869 + $0x4] sm:$0xf]
  %v3872 = vld [vmem:[%s3869 + $0x8] sm:$0xf]
  %v3873 = vld [vmem:[%s3869 + $0xc] sm:$0xf]
  %v3874 = vld [vmem:[%s3869 + $0x10] sm:$0xf]
  %v3875 = vld [vmem:[%s3869 + $0x14] sm:$0xf]
  %v3876 = vld [vmem:[%s3869 + $0x18] sm:$0xf]
  %v3877 = vld [vmem:[%s3869 + $0x1c] sm:$0xf]
  %v3878 = vld [vmem:[%s3869 + $0x20] sm:$0xf]
  %v3879 = vld [vmem:[%s3869 + $0x24] sm:$0xf]
  %v3880 = vld [vmem:[%s3869 + $0x28] sm:$0xf]
  %v3881 = vld [vmem:[%s3869 + $0x2c] sm:$0xf]
  %v3882 = vld [vmem:[%s3869 + $0x30] sm:$0xf]
  %v3883 = vld [vmem:[%s3869 + $0x34] sm:$0xf]
  %v3884 = vld [vmem:[%s3869 + $0x38] sm:$0xf]
  %v3885 = vld [vmem:[%s3869 + $0x3c] sm:$0xf]
  %v3902 = vunpack.c.l.b16 %v3870
  %v3903 = vunpack.c.l.b16 %v3871
  %v3904 = vunpack.c.l.b16 %v3872
  %v3905 = vunpack.c.l.b16 %v3873
  %v3906 = vunpack.c.l.b16 %v3874
  %v3907 = vunpack.c.l.b16 %v3875
  %v3908 = vunpack.c.l.b16 %v3876
  %v3909 = vunpack.c.l.b16 %v3877
  %v3910 = vunpack.c.l.b16 %v3878
  %v3911 = vunpack.c.l.b16 %v3879
  %v3912 = vunpack.c.l.b16 %v3880
  %v3913 = vunpack.c.l.b16 %v3881
  %v3914 = vunpack.c.l.b16 %v3882
  %v3915 = vunpack.c.l.b16 %v3883
  %v3916 = vunpack.c.l.b16 %v3884
  %v3917 = vunpack.c.l.b16 %v3885
  %v3918 = vpack.c.b16 %v3903, %v3902
  %v3919 = vpack.c.b16 %v3905, %v3904
  %v3920 = vpack.c.b16 %v3907, %v3906
  %v3921 = vpack.c.b16 %v3909, %v3908
  %v3922 = vpack.c.b16 %v3911, %v3910
  %v3923 = vpack.c.b16 %v3913, %v3912
  %v3924 = vpack.c.b16 %v3915, %v3914
  %v3925 = vpack.c.b16 %v3917, %v3916
  %3934 = vmatpush.bf16.msra.mxu0 %v3925
  %3935 = vmatpush.bf16.msra.mxu0 %v3924
  %3936 = vmatpush.bf16.msra.mxu0 %v3923
  %3937 = vmatpush.bf16.msra.mxu0 %v3922
  %3938 = vmatpush.bf16.msra.mxu0 %v3921
  %3939 = vmatpush.bf16.msra.mxu0 %v3920
  %3940 = vmatpush.bf16.msra.mxu0 %v3919
  %3941 = vmatpush.bf16.msra.mxu0 %v3918
  %3942 = vmatmul.bf16.gmra.mxu0 %v3868
  %v3943 = vpop.f32.mrf.mxu0
  %v3944 = vadd.f32 0.0, %v3943
  %v3945 = vpop.f32.mrf.mxu0
  %3946 = vdwg.mxu0
  %v3947 = vadd.f32 %v3867, %v3944
  %v3948 = vpack.c.bf16 %v2901, %v2901
  %s3949 = scalar_lea.vmem %s5, 832
  %v3950 = vld [vmem:[%s3949] sm:$0xf]
  %v3951 = vld [vmem:[%s3949 + $0x4] sm:$0xf]
  %v3952 = vld [vmem:[%s3949 + $0x8] sm:$0xf]
  %v3953 = vld [vmem:[%s3949 + $0xc] sm:$0xf]
  %v3954 = vld [vmem:[%s3949 + $0x10] sm:$0xf]
  %v3955 = vld [vmem:[%s3949 + $0x14] sm:$0xf]
  %v3956 = vld [vmem:[%s3949 + $0x18] sm:$0xf]
  %v3957 = vld [vmem:[%s3949 + $0x1c] sm:$0xf]
  %v3958 = vld [vmem:[%s3949 + $0x20] sm:$0xf]
  %v3959 = vld [vmem:[%s3949 + $0x24] sm:$0xf]
  %v3960 = vld [vmem:[%s3949 + $0x28] sm:$0xf]
  %v3961 = vld [vmem:[%s3949 + $0x2c] sm:$0xf]
  %v3962 = vld [vmem:[%s3949 + $0x30] sm:$0xf]
  %v3963 = vld [vmem:[%s3949 + $0x34] sm:$0xf]
  %v3964 = vld [vmem:[%s3949 + $0x38] sm:$0xf]
  %v3965 = vld [vmem:[%s3949 + $0x3c] sm:$0xf]
  %v3982 = vunpack.c.l.b16 %v3950
  %v3983 = vunpack.c.l.b16 %v3951
  %v3984 = vunpack.c.l.b16 %v3952
  %v3985 = vunpack.c.l.b16 %v3953
  %v3986 = vunpack.c.l.b16 %v3954
  %v3987 = vunpack.c.l.b16 %v3955
  %v3988 = vunpack.c.l.b16 %v3956
  %v3989 = vunpack.c.l.b16 %v3957
  %v3990 = vunpack.c.l.b16 %v3958
  %v3991 = vunpack.c.l.b16 %v3959
  %v3992 = vunpack.c.l.b16 %v3960
  %v3993 = vunpack.c.l.b16 %v3961
  %v3994 = vunpack.c.l.b16 %v3962
  %v3995 = vunpack.c.l.b16 %v3963
  %v3996 = vunpack.c.l.b16 %v3964
  %v3997 = vunpack.c.l.b16 %v3965
  %v3998 = vpack.c.b16 %v3983, %v3982
  %v3999 = vpack.c.b16 %v3985, %v3984
  %v4000 = vpack.c.b16 %v3987, %v3986
  %v4001 = vpack.c.b16 %v3989, %v3988
  %v4002 = vpack.c.b16 %v3991, %v3990
  %v4003 = vpack.c.b16 %v3993, %v3992
  %v4004 = vpack.c.b16 %v3995, %v3994
  %v4005 = vpack.c.b16 %v3997, %v3996
  %4014 = vmatpush.bf16.msra.mxu0 %v4005
  %4015 = vmatpush.bf16.msra.mxu0 %v4004
  %4016 = vmatpush.bf16.msra.mxu0 %v4003
  %4017 = vmatpush.bf16.msra.mxu0 %v4002
  %4018 = vmatpush.bf16.msra.mxu0 %v4001
  %4019 = vmatpush.bf16.msra.mxu0 %v4000
  %4020 = vmatpush.bf16.msra.mxu0 %v3999
  %4021 = vmatpush.bf16.msra.mxu0 %v3998
  %4022 = vmatmul.bf16.gmra.mxu0 %v3948
  %v4023 = vpop.f32.mrf.mxu0
  %v4024 = vadd.f32 0.0, %v4023
  %v4025 = vpop.f32.mrf.mxu0
  %4026 = vdwg.mxu0
  %v4027 = vadd.f32 %v3947, %v4024
  %v4028 = vpack.c.bf16 %v2902, %v2902
  %s4029 = scalar_lea.vmem %s5, 896
  %v4030 = vld [vmem:[%s4029] sm:$0xf]
  %v4031 = vld [vmem:[%s4029 + $0x4] sm:$0xf]
  %v4032 = vld [vmem:[%s4029 + $0x8] sm:$0xf]
  %v4033 = vld [vmem:[%s4029 + $0xc] sm:$0xf]
  %v4034 = vld [vmem:[%s4029 + $0x10] sm:$0xf]
  %v4035 = vld [vmem:[%s4029 + $0x14] sm:$0xf]
  %v4036 = vld [vmem:[%s4029 + $0x18] sm:$0xf]
  %v4037 = vld [vmem:[%s4029 + $0x1c] sm:$0xf]
  %v4038 = vld [vmem:[%s4029 + $0x20] sm:$0xf]
  %v4039 = vld [vmem:[%s4029 + $0x24] sm:$0xf]
  %v4040 = vld [vmem:[%s4029 + $0x28] sm:$0xf]
  %v4041 = vld [vmem:[%s4029 + $0x2c] sm:$0xf]
  %v4042 = vld [vmem:[%s4029 + $0x30] sm:$0xf]
  %v4043 = vld [vmem:[%s4029 + $0x34] sm:$0xf]
  %v4044 = vld [vmem:[%s4029 + $0x38] sm:$0xf]
  %v4045 = vld [vmem:[%s4029 + $0x3c] sm:$0xf]
  %v4062 = vunpack.c.l.b16 %v4030
  %v4063 = vunpack.c.l.b16 %v4031
  %v4064 = vunpack.c.l.b16 %v4032
  %v4065 = vunpack.c.l.b16 %v4033
  %v4066 = vunpack.c.l.b16 %v4034
  %v4067 = vunpack.c.l.b16 %v4035
  %v4068 = vunpack.c.l.b16 %v4036
  %v4069 = vunpack.c.l.b16 %v4037
  %v4070 = vunpack.c.l.b16 %v4038
  %v4071 = vunpack.c.l.b16 %v4039
  %v4072 = vunpack.c.l.b16 %v4040
  %v4073 = vunpack.c.l.b16 %v4041
  %v4074 = vunpack.c.l.b16 %v4042
  %v4075 = vunpack.c.l.b16 %v4043
  %v4076 = vunpack.c.l.b16 %v4044
  %v4077 = vunpack.c.l.b16 %v4045
  %v4078 = vpack.c.b16 %v4063, %v4062
  %v4079 = vpack.c.b16 %v4065, %v4064
  %v4080 = vpack.c.b16 %v4067, %v4066
  %v4081 = vpack.c.b16 %v4069, %v4068
  %v4082 = vpack.c.b16 %v4071, %v4070
  %v4083 = vpack.c.b16 %v4073, %v4072
  %v4084 = vpack.c.b16 %v4075, %v4074
  %v4085 = vpack.c.b16 %v4077, %v4076
  %4094 = vmatpush.bf16.msra.mxu0 %v4085
  %4095 = vmatpush.bf16.msra.mxu0 %v4084
  %4096 = vmatpush.bf16.msra.mxu0 %v4083
  %4097 = vmatpush.bf16.msra.mxu0 %v4082
  %4098 = vmatpush.bf16.msra.mxu0 %v4081
  %4099 = vmatpush.bf16.msra.mxu0 %v4080
  %4100 = vmatpush.bf16.msra.mxu0 %v4079
  %4101 = vmatpush.bf16.msra.mxu0 %v4078
  %4102 = vmatmul.bf16.gmra.mxu0 %v4028
  %v4103 = vpop.f32.mrf.mxu0
  %v4104 = vadd.f32 0.0, %v4103
  %v4105 = vpop.f32.mrf.mxu0
  %4106 = vdwg.mxu0
  %v4107 = vadd.f32 %v4027, %v4104
  %v4108 = vpack.c.bf16 %v2903, %v2903
  %s4109 = scalar_lea.vmem %s5, 960
  %v4110 = vld [vmem:[%s4109] sm:$0xf]
  %v4111 = vld [vmem:[%s4109 + $0x4] sm:$0xf]
  %v4112 = vld [vmem:[%s4109 + $0x8] sm:$0xf]
  %v4113 = vld [vmem:[%s4109 + $0xc] sm:$0xf]
  %v4114 = vld [vmem:[%s4109 + $0x10] sm:$0xf]
  %v4115 = vld [vmem:[%s4109 + $0x14] sm:$0xf]
  %v4116 = vld [vmem:[%s4109 + $0x18] sm:$0xf]
  %v4117 = vld [vmem:[%s4109 + $0x1c] sm:$0xf]
  %v4118 = vld [vmem:[%s4109 + $0x20] sm:$0xf]
  %v4119 = vld [vmem:[%s4109 + $0x24] sm:$0xf]
  %v4120 = vld [vmem:[%s4109 + $0x28] sm:$0xf]
  %v4121 = vld [vmem:[%s4109 + $0x2c] sm:$0xf]
  %v4122 = vld [vmem:[%s4109 + $0x30] sm:$0xf]
  %v4123 = vld [vmem:[%s4109 + $0x34] sm:$0xf]
  %v4124 = vld [vmem:[%s4109 + $0x38] sm:$0xf]
  %v4125 = vld [vmem:[%s4109 + $0x3c] sm:$0xf]
  %v4142 = vunpack.c.l.b16 %v4110
  %v4143 = vunpack.c.l.b16 %v4111
  %v4144 = vunpack.c.l.b16 %v4112
  %v4145 = vunpack.c.l.b16 %v4113
  %v4146 = vunpack.c.l.b16 %v4114
  %v4147 = vunpack.c.l.b16 %v4115
  %v4148 = vunpack.c.l.b16 %v4116
  %v4149 = vunpack.c.l.b16 %v4117
  %v4150 = vunpack.c.l.b16 %v4118
  %v4151 = vunpack.c.l.b16 %v4119
  %v4152 = vunpack.c.l.b16 %v4120
  %v4153 = vunpack.c.l.b16 %v4121
  %v4154 = vunpack.c.l.b16 %v4122
  %v4155 = vunpack.c.l.b16 %v4123
  %v4156 = vunpack.c.l.b16 %v4124
  %v4157 = vunpack.c.l.b16 %v4125
  %v4158 = vpack.c.b16 %v4143, %v4142
  %v4159 = vpack.c.b16 %v4145, %v4144
  %v4160 = vpack.c.b16 %v4147, %v4146
  %v4161 = vpack.c.b16 %v4149, %v4148
  %v4162 = vpack.c.b16 %v4151, %v4150
  %v4163 = vpack.c.b16 %v4153, %v4152
  %v4164 = vpack.c.b16 %v4155, %v4154
  %v4165 = vpack.c.b16 %v4157, %v4156
  %4174 = vmatpush.bf16.msra.mxu0 %v4165
  %4175 = vmatpush.bf16.msra.mxu0 %v4164
  %4176 = vmatpush.bf16.msra.mxu0 %v4163
  %4177 = vmatpush.bf16.msra.mxu0 %v4162
  %4178 = vmatpush.bf16.msra.mxu0 %v4161
  %4179 = vmatpush.bf16.msra.mxu0 %v4160
  %4180 = vmatpush.bf16.msra.mxu0 %v4159
  %4181 = vmatpush.bf16.msra.mxu0 %v4158
  %4182 = vmatmul.bf16.gmra.mxu0 %v4108
  %v4183 = vpop.f32.mrf.mxu0
  %v4184 = vadd.f32 0.0, %v4183
  %v4185 = vpop.f32.mrf.mxu0
  %4186 = vdwg.mxu0
  %v4187 = vadd.f32 %v4107, %v4184
  %v4188 = vpack.c.bf16 %v4187, %v4187
  %v4189 = vld [vmem:[%s7] sm:$0xf]
  %v4190 = vld [vmem:[%s7 + $0x4] sm:$0xf]
  %v4191 = vld [vmem:[%s7 + $0x8] sm:$0xf]
  %v4192 = vld [vmem:[%s7 + $0xc] sm:$0xf]
  %v4193 = vld [vmem:[%s7 + $0x10] sm:$0xf]
  %v4194 = vld [vmem:[%s7 + $0x14] sm:$0xf]
  %v4195 = vld [vmem:[%s7 + $0x18] sm:$0xf]
  %v4196 = vld [vmem:[%s7 + $0x1c] sm:$0xf]
  %v4197 = vld [vmem:[%s8] sm:$0x1]
  %v4199 = vperm.slane %v4197, 0
  %v4209 = vunpack.c.l.b16 %v4189
  %v4210 = vunpack.c.l.b16 %v4190
  %v4211 = vunpack.c.l.b16 %v4191
  %v4212 = vunpack.c.l.b16 %v4192
  %v4213 = vunpack.c.l.b16 %v4193
  %v4214 = vunpack.c.l.b16 %v4194
  %v4215 = vunpack.c.l.b16 %v4195
  %v4216 = vunpack.c.l.b16 %v4196
  %v4217 = vpack.c.b16 %v4210, %v4209
  %v4218 = vpack.c.b16 %v4212, %v4211
  %v4219 = vpack.c.b16 %v4214, %v4213
  %v4220 = vpack.c.b16 %v4216, %v4215
  %v4226 = vsel %vm1523, %v4188, 0
  %4228 = vmatpush.bf16.msra.mxu0 0
  %4229 = vmatpush.bf16.msra.mxu0 0
  %4230 = vmatpush.bf16.msra.mxu0 0
  %4231 = vmatpush.bf16.msra.mxu0 0
  %4232 = vmatpush.bf16.msra.mxu0 %v4220
  %4233 = vmatpush.bf16.msra.mxu0 %v4219
  %4234 = vmatpush.bf16.msra.mxu0 %v4218
  %4235 = vmatpush.bf16.msra.mxu0 %v4217
  %4236 = vmatmul.bf16.gmra.mxu0 %v4226
  %v4237 = vpop.f32.mrf.mxu0
  %v4238 = vadd.f32 %v4199, %v4237
  %v4239 = vpop.f32.mrf.mxu0
  %4240 = vdwg.mxu0
  %4241 = vst [vmem:[%s9] sm:$0xff] %v4238
  // Predicated region
  $region38: #{shallow_cnn_forward.1} parent=0 // pred_check
    _
  $region39: #{shallow_cnn_forward.1} parent=0 // pred_check_branch
    %4243 = sbr.rel (0) target = $region41
  $region40: #{shallow_cnn_forward.1} parent=0 // pred_region
    _
  $region41: #{shallow_cnn_forward.1} parent=0 // pred_fallthru
    _
  // Predicated region
  $region42: #{shallow_cnn_forward.1} parent=0 // pred_check
    _
  $region43: #{shallow_cnn_forward.1} parent=0 // pred_check_branch
    %4245 = sbr.rel (0) target = $region45
  $region44: #{shallow_cnn_forward.1} parent=0 // pred_region
    _
  $region45: #{shallow_cnn_forward.1} parent=0 // pred_fallthru
    _

</llo_original>
